<compile_context>
chip_gen: v7x
topology: tpu7x:2x2x1
jax: 0.10.0
libtpu: 0.0.40
codegen_flags: <defaults>
</compile_context>

<pallas_src>
import math

import jax
import jax.numpy as jnp
from jax import lax
from jax.experimental import pallas as pl
from jax.experimental.pallas import tpu as pltpu

# ----------------------- small, module-consistent config -----------------------
BATCH = 2
NODE_NUM = 10                      # embedding table has NODE_NUM + 1 rows
DEFENDER_NUM = 2                   # base_v = (defender_num + 1) node idx + 1 time idx
STATE_EMB_DIM = 8
GNN_OUTPUT_DIM = 16
MAX_T = 8                          # max_time_horizon_for_state_emb
HYPER_HIDDEN = 32
Z_DIM = 32
DYN_HIDDEN = 32
USE_AUGMENTATION = True

META_DIM = GNN_OUTPUT_DIM + MAX_T
VALUE_INPUT_DIM = STATE_EMB_DIM * (DEFENDER_NUM + 2) + (
    GNN_OUTPUT_DIM if USE_AUGMENTATION else 0
)


# ------------------------------- fused kernel ----------------------------------
def _critic_fused_kernel(
    base_v_ref,                      # SMEM (B, DEFENDER_NUM+2) int32
    pooled_ref, T_ref,               # VMEM (B, GNN), (B, MAX_T)
    node_emb_ref, time_emb_ref,      # VMEM embedding tables
    wh1_ref, bh1_ref, wh2_ref, bh2_ref,      # hyper MLP params
    m1_ref, c1b_ref, m2_ref, c2b_ref, m3_ref, c3b_ref,   # permuted head params
    out_ref,                         # VMEM (B, 1)
):
    f32 = jnp.float32

    def dot(a, b):
        return jnp.dot(a, b, preferred_element_type=f32)

    batch = pooled_ref.shape[0]
    n_nodes = node_emb_ref.shape[0]
    n_times = time_emb_ref.shape[0]

    pooled = pooled_ref[...]

    # --- Meta_Embadding.hyper: Linear -> ReLU -> Linear -> z ---
    meta = jnp.concatenate([pooled, T_ref[...]], axis=-1)              # (B, META_DIM)
    h = jnp.maximum(dot(meta, wh1_ref[...]) + bh1_ref[...], 0.0)
    z = dot(h, wh2_ref[...]) + bh2_ref[...]                            # (B, Z_DIM)

    # --- state embedding: table rows gathered via one-hot matmuls (idx in SMEM) ---
    node_tbl = node_emb_ref[...]
    time_tbl = time_emb_ref[...]
    rows = []
    for bi in range(batch):
        pieces = []
        for j in range(DEFENDER_NUM + 1):
            idx = base_v_ref[bi, j]
            oh = (lax.broadcasted_iota(jnp.int32, (1, n_nodes), 1) == idx).astype(f32)
            pieces.append(dot(oh, node_tbl))                           # (1, E)
        t_idx = base_v_ref[bi, DEFENDER_NUM + 1]
        oh_t = (lax.broadcasted_iota(jnp.int32, (1, n_times), 1) == t_idx).astype(f32)
        pieces.append(dot(oh_t, time_tbl))                             # (1, E)
        if USE_AUGMENTATION:
            pieces.append(pooled[bi:bi + 1, :])                        # (1, GNN)
        rows.append(jnp.concatenate(pieces, axis=-1))                  # (1, I1)
    s = jnp.concatenate(rows, axis=0)                                  # (B, I1)

    # --- dynamic 3-layer MLP, fully batched ---
    # u_l[b, k*I + i] = z[b, k] * x_l[b, i]   (row-wise Kronecker),
    # o_l = act([u_l | x_l | z] @ M_l + c_lb), M_l built offline from the Head
    # parameters in (in, out) layout -> no in-kernel transposes or reshapes of
    # the hyper-generated weights.
    K = Z_DIM

    def expand_mat(inner):
        cols = K * inner
        c = lax.broadcasted_iota(jnp.int32, (K, cols), 1)
        r = lax.broadcasted_iota(jnp.int32, (K, cols), 0) * inner
        return ((c >= r) & (c < r + inner)).astype(f32)                # E[k, k*inner+i]=1

    zs1 = dot(z, expand_mat(VALUE_INPUT_DIM))                          # (B, K*I1)
    zsh = dot(z, expand_mat(DYN_HIDDEN))                               # (B, K*H), reused

    u1 = zs1 * jnp.concatenate([s] * K, axis=-1)
    x1 = jnp.concatenate([u1, s, z], axis=-1)                          # (B, K*I1+I1+K)
    o1 = jnp.maximum(dot(x1, m1_ref[...]) + c1b_ref[...], 0.0)         # (B, H)

    u2 = zsh * jnp.concatenate([o1] * K, axis=-1)
    x2 = jnp.concatenate([u2, o1, z], axis=-1)                         # (B, K*H+H+K)
    o2 = jnp.maximum(dot(x2, m2_ref[...]) + c2b_ref[...], 0.0)         # (B, H)

    u3 = zsh * jnp.concatenate([o2] * K, axis=-1)
    x3 = jnp.concatenate([u3, o2, z], axis=-1)                         # (B, K*H+H+K)
    out_ref[...] = jnp.sum(x3 * m3_ref[...], axis=-1, keepdims=True) + c3b_ref[...]


# --------------------------- wrapper around pallas_call -------------------------
def critic_forward(fp, pooled_node_emb, T, base_v):
    b = pooled_node_emb.shape[0]
    operands = (
        base_v, pooled_node_emb, T, fp["node_emb"], fp["time_emb"],
        fp["wh1"], fp["bh1"], fp["wh2"], fp["bh2"],
        fp["m1"], fp["c1b"], fp["m2"], fp["c2b"], fp["m3"], fp["c3b"],
    )
    flops = 2 * b * (
        META_DIM * HYPER_HIDDEN + HYPER_HIDDEN * Z_DIM
        + Z_DIM * Z_DIM * VALUE_INPUT_DIM + Z_DIM * Z_DIM * DYN_HIDDEN
        + (Z_DIM * VALUE_INPUT_DIM + VALUE_INPUT_DIM + Z_DIM) * DYN_HIDDEN
        + (Z_DIM * DYN_HIDDEN + DYN_HIDDEN + Z_DIM) * (DYN_HIDDEN + 1)
    )
    bytes_accessed = int(sum(int(x.size) * x.dtype.itemsize for x in operands)) + b * 4

    in_specs = [pl.BlockSpec(memory_space=pltpu.MemorySpace.SMEM)] + \
               [pl.BlockSpec(memory_space=pltpu.MemorySpace.VMEM)] * (len(operands) - 1)

    return pl.pallas_call(
        _critic_fused_kernel,
        out_shape=jax.ShapeDtypeStruct((b, 1), jnp.float32),
        in_specs=in_specs,
        out_specs=pl.BlockSpec(memory_space=pltpu.MemorySpace.VMEM),
        cost_estimate=pl.CostEstimate(
            flops=flops, transcendentals=0, bytes_accessed=bytes_accessed),
    )(*operands)


# ---------------- offline prep: permute/concatenate Head parameters -------------
def prepare_fused_params(p):
    K, H, I1 = Z_DIM, DYN_HIDDEN, VALUE_INPUT_DIM
    # layer 1: rows = [A1_r (K*I1, H) ; C1_r (I1, H) ; a1b (K, H)]
    a1 = p["a1w"].reshape(K, H, I1).transpose(0, 2, 1).reshape(K * I1, H)
    c1 = p["c1w"].reshape(H, I1).T
    m1 = jnp.concatenate([a1, c1, p["a1b"]], axis=0)
    # layer 2
    a2 = p["a2w"].reshape(K, H, H).transpose(0, 2, 1).reshape(K * H, H)
    c2 = p["c2w"].reshape(H, H).T
    m2 = jnp.concatenate([a2, c2, p["a2b"]], axis=0)
    # layer 3 (scalar output) kept as a lane-dense row vector
    m3 = jnp.concatenate(
        [p["a3w"].reshape(1, K * H), p["c3w"], p["a3b"].reshape(1, K)], axis=1)
    fp = dict(p)
    fp.update(m1=m1, c1b=p["c1b"], m2=m2, c2b=p["c2b"], m3=m3, c3b=p["c3b"])
    return fp


# ------------------------------ pure-JAX reference -----------------------------
def reference_forward(params, pooled_node_emb, T, base_v):
    b = pooled_node_emb.shape[0]
    meta_v = jnp.concatenate([pooled_node_emb, T], axis=1)
    h = jax.nn.relu(meta_v @ params["wh1"] + params["bh1"])
    z = h @ params["wh2"] + params["bh2"]
    w1 = (z @ params["a1w"] + params["c1w"]).reshape(b, DYN_HIDDEN, VALUE_INPUT_DIM)
    b1 = (z @ params["a1b"] + params["c1b"]).reshape(b, DYN_HIDDEN, 1)
    w2 = (z @ params["a2w"] + params["c2w"]).reshape(b, DYN_HIDDEN, DYN_HIDDEN)
    b2 = (z @ params["a2b"] + params["c2b"]).reshape(b, DYN_HIDDEN, 1)
    w3 = (z @ params["a3w"] + params["c3w"]).reshape(b, 1, DYN_HIDDEN)
    b3 = (z @ params["a3b"] + params["c3b"]).reshape(b, 1, 1)
    node_idx = base_v[:, :-1]
    time_idx = base_v[:, -1]
    node_idx_emb = params["node_emb"][node_idx].reshape(b, -1)
    time_idx_emb = params["time_emb"][time_idx]
    state_emb = jnp.concatenate([node_idx_emb, time_idx_emb], axis=1)
    if USE_AUGMENTATION:
        state_emb = jnp.concatenate([state_emb, pooled_node_emb], axis=1)
    s = state_emb[:, :, None]
    o = jax.nn.relu(jnp.matmul(w1, s) + b1)
    o = jax.nn.relu(jnp.matmul(w2, o) + b2)
    o = jnp.matmul(w3, o) + b3
    return o[:, :, 0]


# ------------------------------ deterministic params ---------------------------
def make_params(key):
    ks = iter(jax.random.split(key, 32))

    def unif(k, shape, bound):
        return jax.random.uniform(k, shape, jnp.float32, -bound, bound)

    p = {}
    # Meta_Embadding: weights U(-1/sqrt(2*fan_in), ...), biases torch-default
    p["wh1"] = unif(next(ks), (META_DIM, HYPER_HIDDEN), 1.0 / math.sqrt(2 * META_DIM))
    p["bh1"] = unif(next(ks), (1, HYPER_HIDDEN), 1.0 / math.sqrt(META_DIM))
    p["wh2"] = unif(next(ks), (HYPER_HIDDEN, Z_DIM), 1.0 / math.sqrt(2 * HYPER_HIDDEN))
    p["bh2"] = unif(next(ks), (1, Z_DIM), 1.0 / math.sqrt(HYPER_HIDDEN))

    # Heads: kaiming-uniform weights (fan_in = Z_DIM), zero biases (init_method='kaim')
    kb = math.sqrt(6.0 / Z_DIM)
    head_dims = [
        ("1", VALUE_INPUT_DIM, DYN_HIDDEN),   # linear1: in=value_input_dim, out=dyn_hidden
        ("2", DYN_HIDDEN, DYN_HIDDEN),        # linear2
        ("3", DYN_HIDDEN, 1),                 # linear3
    ]
    for name, d_in, d_out in head_dims:
        p[f"a{name}w"] = unif(next(ks), (Z_DIM, d_out * d_in), kb)
        p[f"c{name}w"] = jnp.zeros((1, d_out * d_in), jnp.float32)
        p[f"a{name}b"] = unif(next(ks), (Z_DIM, d_out), kb)
        p[f"c{name}b"] = jnp.zeros((1, d_out), jnp.float32)

    # Embedding tables (torch default: N(0, 1))
    p["node_emb"] = jax.random.normal(next(ks), (NODE_NUM + 1, STATE_EMB_DIM), jnp.float32)
    p["time_emb"] = jax.random.normal(next(ks), (MAX_T, STATE_EMB_DIM), jnp.float32)
    return p


# ------------------------------------ main --------------------------------------
if __name__ == "__main__":
    root = jax.random.PRNGKey(0)
    k_params, k_pool, k_T, k_node, k_time = jax.random.split(root, 5)

    params = make_params(k_params)
    fused_params = prepare_fused_params(params)   # one-time offline permutation/concat

    # pooled_node_emb stands in for GCN(hgs) -> AvgPooling (see TODO(synk) above).
    pooled_node_emb = jax.random.normal(k_pool, (BATCH, GNN_OUTPUT_DIM), jnp.float32)
    # T: per-sample time encoding over the horizon (one-hot, as typically fed).
    t_steps = jax.random.randint(k_T, (BATCH,), 0, MAX_T)
    T = jax.nn.one_hot(t_steps, MAX_T, dtype=jnp.float32)
    # base_v: (defender_num + 1) node indices followed by a time index.
    node_part = jax.random.randint(k_node, (BATCH, DEFENDER_NUM + 1), 0, NODE_NUM + 1)
    time_part = jax.random.randint(k_time, (BATCH, 1), 0, MAX_T)
    base_v = jnp.concatenate([node_part, time_part], axis=1).astype(jnp.int32)

    out = critic_forward(fused_params, pooled_node_emb, T, base_v)
    out = jax.block_until_ready(out)

    ref = reference_forward(params, pooled_node_emb, T, base_v)
    if not jnp.allclose(out, ref, atol=1e-3, rtol=1e-4):
        raise AssertionError(f"Pallas output mismatch:\n{out}\nvs reference\n{ref}")

    print("KERNEL_OK")
</pallas_src>

<mosaic_0001>
module attributes {stable_mosaic.version = 11 : i64} {
  func.func @_critic_fused_kernel(%arg0: memref<2x4xi32, #tpu.memory_space<smem>>, %arg1: memref<2x16xf32, #tpu.memory_space<vmem>>, %arg2: memref<2x8xf32, #tpu.memory_space<vmem>>, %arg3: memref<11x8xf32, #tpu.memory_space<vmem>>, %arg4: memref<8x8xf32, #tpu.memory_space<vmem>>, %arg5: memref<24x32xf32, #tpu.memory_space<vmem>>, %arg6: memref<1x32xf32, #tpu.memory_space<vmem>>, %arg7: memref<32x32xf32, #tpu.memory_space<vmem>>, %arg8: memref<1x32xf32, #tpu.memory_space<vmem>>, %arg9: memref<1616x32xf32, #tpu.memory_space<vmem>>, %arg10: memref<1x32xf32, #tpu.memory_space<vmem>>, %arg11: memref<1088x32xf32, #tpu.memory_space<vmem>>, %arg12: memref<1x32xf32, #tpu.memory_space<vmem>>, %arg13: memref<1x1088xf32, #tpu.memory_space<vmem>>, %arg14: memref<1x1xf32, #tpu.memory_space<vmem>>, %arg15: memref<2x1xf32, #tpu.memory_space<vmem>>) attributes {dimension_semantics = [], scalar_prefetch = 0 : i64, scratch_operands = 0 : i64, tpu.core_type = #tpu.core_type<tc>} {
    %c0 = arith.constant 0 : index
    %c0_0 = arith.constant 0 : index
    %0 = vector.load %arg1[%c0, %c0_0] : memref<2x16xf32, #tpu.memory_space<vmem>>, vector<2x16xf32>
    %c0_1 = arith.constant 0 : index
    %c0_2 = arith.constant 0 : index
    %1 = vector.load %arg2[%c0_1, %c0_2] : memref<2x8xf32, #tpu.memory_space<vmem>>, vector<2x8xf32>
    %2 = tpu.concatenate %0, %1 in 1 : vector<2x16xf32>, vector<2x8xf32> -> vector<2x24xf32>
    %c0_3 = arith.constant 0 : index
    %c0_4 = arith.constant 0 : index
    %3 = vector.load %arg5[%c0_3, %c0_4] : memref<24x32xf32, #tpu.memory_space<vmem>>, vector<24x32xf32>
    %cst = arith.constant dense<0.000000e+00> : vector<2x32xf32>
    %4 = tpu.matmul %2, %3, %cst {dimension_numbers = #tpu.dot_dimension_numbers<[1], [0], [0], [1], [0, 0, 1, 1], [], []>} : vector<2x24xf32>, vector<24x32xf32>, vector<2x32xf32> -> vector<2x32xf32>
    %c0_5 = arith.constant 0 : index
    %c0_6 = arith.constant 0 : index
    %5 = vector.load %arg6[%c0_5, %c0_6] : memref<1x32xf32, #tpu.memory_space<vmem>>, vector<1x32xf32>
    %6 = vector.broadcast %5 : vector<1x32xf32> to vector<2x32xf32>
    %7 = arith.addf %4, %6 : vector<2x32xf32>
    %cst_7 = arith.constant 0.000000e+00 : f32
    %8 = vector.broadcast %cst_7 : f32 to vector<2x32xf32>
    %9 = arith.maximumf %7, %8 : vector<2x32xf32>
    %c0_8 = arith.constant 0 : index
    %c0_9 = arith.constant 0 : index
    %10 = vector.load %arg7[%c0_8, %c0_9] : memref<32x32xf32, #tpu.memory_space<vmem>>, vector<32x32xf32>
    %cst_10 = arith.constant dense<0.000000e+00> : vector<2x32xf32>
    %11 = tpu.matmul %9, %10, %cst_10 {dimension_numbers = #tpu.dot_dimension_numbers<[1], [0], [0], [1], [0, 0, 1, 1], [], []>} : vector<2x32xf32>, vector<32x32xf32>, vector<2x32xf32> -> vector<2x32xf32>
    %c0_11 = arith.constant 0 : index
    %c0_12 = arith.constant 0 : index
    %12 = vector.load %arg8[%c0_11, %c0_12] : memref<1x32xf32, #tpu.memory_space<vmem>>, vector<1x32xf32>
    %13 = vector.broadcast %12 : vector<1x32xf32> to vector<2x32xf32>
    %14 = arith.addf %11, %13 : vector<2x32xf32>
    %c0_13 = arith.constant 0 : index
    %c0_14 = arith.constant 0 : index
    %15 = vector.load %arg3[%c0_13, %c0_14] : memref<11x8xf32, #tpu.memory_space<vmem>>, vector<11x8xf32>
    %c0_15 = arith.constant 0 : index
    %c0_16 = arith.constant 0 : index
    %16 = vector.load %arg4[%c0_15, %c0_16] : memref<8x8xf32, #tpu.memory_space<vmem>>, vector<8x8xf32>
    %c0_17 = arith.constant 0 : index
    %c0_18 = arith.constant 0 : index
    %17 = memref.load %arg0[%c0_17, %c0_18] : memref<2x4xi32, #tpu.memory_space<smem>>
    %18 = tpu.iota {dimensions = array<i32: 1>} : vector<1x11xi32>
    %19 = vector.broadcast %17 : i32 to vector<1x11xi32>
    %20 = arith.cmpi eq, %18, %19 : vector<1x11xi32>
    %21 = arith.extui %20 : vector<1x11xi1> to vector<1x11xi32>
    %22 = arith.sitofp %21 : vector<1x11xi32> to vector<1x11xf32>
    %cst_19 = arith.constant dense<0.000000e+00> : vector<1x8xf32>
    %23 = tpu.matmul %22, %15, %cst_19 {dimension_numbers = #tpu.dot_dimension_numbers<[1], [0], [0], [1], [0, 0, 1, 1], [], []>} : vector<1x11xf32>, vector<11x8xf32>, vector<1x8xf32> -> vector<1x8xf32>
    %c0_20 = arith.constant 0 : index
    %c1 = arith.constant 1 : index
    %24 = memref.load %arg0[%c0_20, %c1] : memref<2x4xi32, #tpu.memory_space<smem>>
    %25 = tpu.iota {dimensions = array<i32: 1>} : vector<1x11xi32>
    %26 = vector.broadcast %24 : i32 to vector<1x11xi32>
    %27 = arith.cmpi eq, %25, %26 : vector<1x11xi32>
    %28 = arith.extui %27 : vector<1x11xi1> to vector<1x11xi32>
    %29 = arith.sitofp %28 : vector<1x11xi32> to vector<1x11xf32>
    %cst_21 = arith.constant dense<0.000000e+00> : vector<1x8xf32>
    %30 = tpu.matmul %29, %15, %cst_21 {dimension_numbers = #tpu.dot_dimension_numbers<[1], [0], [0], [1], [0, 0, 1, 1], [], []>} : vector<1x11xf32>, vector<11x8xf32>, vector<1x8xf32> -> vector<1x8xf32>
    %c0_22 = arith.constant 0 : index
    %c2 = arith.constant 2 : index
    %31 = memref.load %arg0[%c0_22, %c2] : memref<2x4xi32, #tpu.memory_space<smem>>
    %32 = tpu.iota {dimensions = array<i32: 1>} : vector<1x11xi32>
    %33 = vector.broadcast %31 : i32 to vector<1x11xi32>
    %34 = arith.cmpi eq, %32, %33 : vector<1x11xi32>
    %35 = arith.extui %34 : vector<1x11xi1> to vector<1x11xi32>
    %36 = arith.sitofp %35 : vector<1x11xi32> to vector<1x11xf32>
    %cst_23 = arith.constant dense<0.000000e+00> : vector<1x8xf32>
    %37 = tpu.matmul %36, %15, %cst_23 {dimension_numbers = #tpu.dot_dimension_numbers<[1], [0], [0], [1], [0, 0, 1, 1], [], []>} : vector<1x11xf32>, vector<11x8xf32>, vector<1x8xf32> -> vector<1x8xf32>
    %c0_24 = arith.constant 0 : index
    %c3 = arith.constant 3 : index
    %38 = memref.load %arg0[%c0_24, %c3] : memref<2x4xi32, #tpu.memory_space<smem>>
    %39 = tpu.iota {dimensions = array<i32: 1>} : vector<1x8xi32>
    %40 = vector.broadcast %38 : i32 to vector<1x8xi32>
    %41 = arith.cmpi eq, %39, %40 : vector<1x8xi32>
    %42 = arith.extui %41 : vector<1x8xi1> to vector<1x8xi32>
    %43 = arith.sitofp %42 : vector<1x8xi32> to vector<1x8xf32>
    %cst_25 = arith.constant dense<0.000000e+00> : vector<1x8xf32>
    %44 = tpu.matmul %43, %16, %cst_25 {dimension_numbers = #tpu.dot_dimension_numbers<[1], [0], [0], [1], [0, 0, 1, 1], [], []>} : vector<1x8xf32>, vector<8x8xf32>, vector<1x8xf32> -> vector<1x8xf32>
    %45 = vector.extract_strided_slice %0 {offsets = [0, 0], sizes = [1, 16], strides = [1, 1]} : vector<2x16xf32> to vector<1x16xf32>
    %46 = tpu.concatenate %23, %30, %37, %44, %45 in 1 : vector<1x8xf32>, vector<1x8xf32>, vector<1x8xf32>, vector<1x8xf32>, vector<1x16xf32> -> vector<1x48xf32>
    %c1_26 = arith.constant 1 : index
    %c0_27 = arith.constant 0 : index
    %47 = memref.load %arg0[%c1_26, %c0_27] : memref<2x4xi32, #tpu.memory_space<smem>>
    %48 = tpu.iota {dimensions = array<i32: 1>} : vector<1x11xi32>
    %49 = vector.broadcast %47 : i32 to vector<1x11xi32>
    %50 = arith.cmpi eq, %48, %49 : vector<1x11xi32>
    %51 = arith.extui %50 : vector<1x11xi1> to vector<1x11xi32>
    %52 = arith.sitofp %51 : vector<1x11xi32> to vector<1x11xf32>
    %cst_28 = arith.constant dense<0.000000e+00> : vector<1x8xf32>
    %53 = tpu.matmul %52, %15, %cst_28 {dimension_numbers = #tpu.dot_dimension_numbers<[1], [0], [0], [1], [0, 0, 1, 1], [], []>} : vector<1x11xf32>, vector<11x8xf32>, vector<1x8xf32> -> vector<1x8xf32>
    %c1_29 = arith.constant 1 : index
    %c1_30 = arith.constant 1 : index
    %54 = memref.load %arg0[%c1_29, %c1_30] : memref<2x4xi32, #tpu.memory_space<smem>>
    %55 = tpu.iota {dimensions = array<i32: 1>} : vector<1x11xi32>
    %56 = vector.broadcast %54 : i32 to vector<1x11xi32>
    %57 = arith.cmpi eq, %55, %56 : vector<1x11xi32>
    %58 = arith.extui %57 : vector<1x11xi1> to vector<1x11xi32>
    %59 = arith.sitofp %58 : vector<1x11xi32> to vector<1x11xf32>
    %cst_31 = arith.constant dense<0.000000e+00> : vector<1x8xf32>
    %60 = tpu.matmul %59, %15, %cst_31 {dimension_numbers = #tpu.dot_dimension_numbers<[1], [0], [0], [1], [0, 0, 1, 1], [], []>} : vector<1x11xf32>, vector<11x8xf32>, vector<1x8xf32> -> vector<1x8xf32>
    %c1_32 = arith.constant 1 : index
    %c2_33 = arith.constant 2 : index
    %61 = memref.load %arg0[%c1_32, %c2_33] : memref<2x4xi32, #tpu.memory_space<smem>>
    %62 = tpu.iota {dimensions = array<i32: 1>} : vector<1x11xi32>
    %63 = vector.broadcast %61 : i32 to vector<1x11xi32>
    %64 = arith.cmpi eq, %62, %63 : vector<1x11xi32>
    %65 = arith.extui %64 : vector<1x11xi1> to vector<1x11xi32>
    %66 = arith.sitofp %65 : vector<1x11xi32> to vector<1x11xf32>
    %cst_34 = arith.constant dense<0.000000e+00> : vector<1x8xf32>
    %67 = tpu.matmul %66, %15, %cst_34 {dimension_numbers = #tpu.dot_dimension_numbers<[1], [0], [0], [1], [0, 0, 1, 1], [], []>} : vector<1x11xf32>, vector<11x8xf32>, vector<1x8xf32> -> vector<1x8xf32>
    %c1_35 = arith.constant 1 : index
    %c3_36 = arith.constant 3 : index
    %68 = memref.load %arg0[%c1_35, %c3_36] : memref<2x4xi32, #tpu.memory_space<smem>>
    %69 = tpu.iota {dimensions = array<i32: 1>} : vector<1x8xi32>
    %70 = vector.broadcast %68 : i32 to vector<1x8xi32>
    %71 = arith.cmpi eq, %69, %70 : vector<1x8xi32>
    %72 = arith.extui %71 : vector<1x8xi1> to vector<1x8xi32>
    %73 = arith.sitofp %72 : vector<1x8xi32> to vector<1x8xf32>
    %cst_37 = arith.constant dense<0.000000e+00> : vector<1x8xf32>
    %74 = tpu.matmul %73, %16, %cst_37 {dimension_numbers = #tpu.dot_dimension_numbers<[1], [0], [0], [1], [0, 0, 1, 1], [], []>} : vector<1x8xf32>, vector<8x8xf32>, vector<1x8xf32> -> vector<1x8xf32>
    %75 = vector.extract_strided_slice %0 {offsets = [1, 0], sizes = [1, 16], strides = [1, 1]} : vector<2x16xf32> to vector<1x16xf32>
    %76 = tpu.concatenate %53, %60, %67, %74, %75 in 1 : vector<1x8xf32>, vector<1x8xf32>, vector<1x8xf32>, vector<1x8xf32>, vector<1x16xf32> -> vector<1x48xf32>
    %77 = tpu.concatenate %46, %76 in 0 : vector<1x48xf32>, vector<1x48xf32> -> vector<2x48xf32>
    %78 = tpu.iota {dimensions = array<i32: 1>} : vector<32x1536xi32>
    %79 = tpu.iota {dimensions = array<i32: 0>} : vector<32x1536xi32>
    %c48_i32 = arith.constant 48 : i32
    %80 = vector.broadcast %c48_i32 : i32 to vector<32x1536xi32>
    %81 = arith.muli %79, %80 : vector<32x1536xi32>
    %82 = arith.cmpi sge, %78, %81 : vector<32x1536xi32>
    %c48_i32_38 = arith.constant 48 : i32
    %83 = vector.broadcast %c48_i32_38 : i32 to vector<32x1536xi32>
    %84 = arith.addi %81, %83 : vector<32x1536xi32>
    %85 = arith.cmpi slt, %78, %84 : vector<32x1536xi32>
    %86 = arith.andi %82, %85 : vector<32x1536xi1>
    %87 = arith.extui %86 : vector<32x1536xi1> to vector<32x1536xi32>
    %88 = arith.sitofp %87 : vector<32x1536xi32> to vector<32x1536xf32>
    %cst_39 = arith.constant dense<0.000000e+00> : vector<2x1536xf32>
    %89 = tpu.matmul %14, %88, %cst_39 {dimension_numbers = #tpu.dot_dimension_numbers<[1], [0], [0], [1], [0, 0, 1, 1], [], []>} : vector<2x32xf32>, vector<32x1536xf32>, vector<2x1536xf32> -> vector<2x1536xf32>
    %90 = tpu.iota {dimensions = array<i32: 1>} : vector<32x1024xi32>
    %91 = tpu.iota {dimensions = array<i32: 0>} : vector<32x1024xi32>
    %c32_i32 = arith.constant 32 : i32
    %92 = vector.broadcast %c32_i32 : i32 to vector<32x1024xi32>
    %93 = arith.muli %91, %92 : vector<32x1024xi32>
    %94 = arith.cmpi sge, %90, %93 : vector<32x1024xi32>
    %c32_i32_40 = arith.constant 32 : i32
    %95 = vector.broadcast %c32_i32_40 : i32 to vector<32x1024xi32>
    %96 = arith.addi %93, %95 : vector<32x1024xi32>
    %97 = arith.cmpi slt, %90, %96 : vector<32x1024xi32>
    %98 = arith.andi %94, %97 : vector<32x1024xi1>
    %99 = arith.extui %98 : vector<32x1024xi1> to vector<32x1024xi32>
    %100 = arith.sitofp %99 : vector<32x1024xi32> to vector<32x1024xf32>
    %cst_41 = arith.constant dense<0.000000e+00> : vector<2x1024xf32>
    %101 = tpu.matmul %14, %100, %cst_41 {dimension_numbers = #tpu.dot_dimension_numbers<[1], [0], [0], [1], [0, 0, 1, 1], [], []>} : vector<2x32xf32>, vector<32x1024xf32>, vector<2x1024xf32> -> vector<2x1024xf32>
    %102 = tpu.concatenate %77, %77, %77, %77, %77, %77, %77, %77, %77, %77, %77, %77, %77, %77, %77, %77 in 1 : vector<2x48xf32>, vector<2x48xf32>, vector<2x48xf32>, vector<2x48xf32>, vector<2x48xf32>, vector<2x48xf32>, vector<2x48xf32>, vector<2x48xf32>, vector<2x48xf32>, vector<2x48xf32>, vector<2x48xf32>, vector<2x48xf32>, vector<2x48xf32>, vector<2x48xf32>, vector<2x48xf32>, vector<2x48xf32> -> vector<2x768xf32>
    %103 = tpu.concatenate %77, %77, %77, %77, %77, %77, %77, %77, %77, %77, %77, %77, %77, %77, %77, %77 in 1 : vector<2x48xf32>, vector<2x48xf32>, vector<2x48xf32>, vector<2x48xf32>, vector<2x48xf32>, vector<2x48xf32>, vector<2x48xf32>, vector<2x48xf32>, vector<2x48xf32>, vector<2x48xf32>, vector<2x48xf32>, vector<2x48xf32>, vector<2x48xf32>, vector<2x48xf32>, vector<2x48xf32>, vector<2x48xf32> -> vector<2x768xf32>
    %104 = tpu.concatenate %102, %103 in 1 : vector<2x768xf32>, vector<2x768xf32> -> vector<2x1536xf32>
    %105 = arith.mulf %89, %104 : vector<2x1536xf32>
    %106 = tpu.concatenate %105, %77, %14 in 1 : vector<2x1536xf32>, vector<2x48xf32>, vector<2x32xf32> -> vector<2x1616xf32>
    %c0_42 = arith.constant 0 : index
    %c0_43 = arith.constant 0 : index
    %107 = vector.load %arg9[%c0_42, %c0_43] : memref<1616x32xf32, #tpu.memory_space<vmem>>, vector<1616x32xf32>
    %cst_44 = arith.constant dense<0.000000e+00> : vector<2x32xf32>
    %108 = tpu.matmul %106, %107, %cst_44 {dimension_numbers = #tpu.dot_dimension_numbers<[1], [0], [0], [1], [0, 0, 1, 1], [], []>} : vector<2x1616xf32>, vector<1616x32xf32>, vector<2x32xf32> -> vector<2x32xf32>
    %c0_45 = arith.constant 0 : index
    %c0_46 = arith.constant 0 : index
    %109 = vector.load %arg10[%c0_45, %c0_46] : memref<1x32xf32, #tpu.memory_space<vmem>>, vector<1x32xf32>
    %110 = vector.broadcast %109 : vector<1x32xf32> to vector<2x32xf32>
    %111 = arith.addf %108, %110 : vector<2x32xf32>
    %cst_47 = arith.constant 0.000000e+00 : f32
    %112 = vector.broadcast %cst_47 : f32 to vector<2x32xf32>
    %113 = arith.maximumf %111, %112 : vector<2x32xf32>
    %114 = tpu.concatenate %113, %113, %113, %113, %113, %113, %113, %113, %113, %113, %113, %113, %113, %113, %113, %113 in 1 : vector<2x32xf32>, vector<2x32xf32>, vector<2x32xf32>, vector<2x32xf32>, vector<2x32xf32>, vector<2x32xf32>, vector<2x32xf32>, vector<2x32xf32>, vector<2x32xf32>, vector<2x32xf32>, vector<2x32xf32>, vector<2x32xf32>, vector<2x32xf32>, vector<2x32xf32>, vector<2x32xf32>, vector<2x32xf32> -> vector<2x512xf32>
    %115 = tpu.concatenate %113, %113, %113, %113, %113, %113, %113, %113, %113, %113, %113, %113, %113, %113, %113, %113 in 1 : vector<2x32xf32>, vector<2x32xf32>, vector<2x32xf32>, vector<2x32xf32>, vector<2x32xf32>, vector<2x32xf32>, vector<2x32xf32>, vector<2x32xf32>, vector<2x32xf32>, vector<2x32xf32>, vector<2x32xf32>, vector<2x32xf32>, vector<2x32xf32>, vector<2x32xf32>, vector<2x32xf32>, vector<2x32xf32> -> vector<2x512xf32>
    %116 = tpu.concatenate %114, %115 in 1 : vector<2x512xf32>, vector<2x512xf32> -> vector<2x1024xf32>
    %117 = arith.mulf %101, %116 : vector<2x1024xf32>
    %118 = tpu.concatenate %117, %113, %14 in 1 : vector<2x1024xf32>, vector<2x32xf32>, vector<2x32xf32> -> vector<2x1088xf32>
    %c0_48 = arith.constant 0 : index
    %c0_49 = arith.constant 0 : index
    %119 = vector.load %arg11[%c0_48, %c0_49] : memref<1088x32xf32, #tpu.memory_space<vmem>>, vector<1088x32xf32>
    %cst_50 = arith.constant dense<0.000000e+00> : vector<2x32xf32>
    %120 = tpu.matmul %118, %119, %cst_50 {dimension_numbers = #tpu.dot_dimension_numbers<[1], [0], [0], [1], [0, 0, 1, 1], [], []>} : vector<2x1088xf32>, vector<1088x32xf32>, vector<2x32xf32> -> vector<2x32xf32>
    %c0_51 = arith.constant 0 : index
    %c0_52 = arith.constant 0 : index
    %121 = vector.load %arg12[%c0_51, %c0_52] : memref<1x32xf32, #tpu.memory_space<vmem>>, vector<1x32xf32>
    %122 = vector.broadcast %121 : vector<1x32xf32> to vector<2x32xf32>
    %123 = arith.addf %120, %122 : vector<2x32xf32>
    %cst_53 = arith.constant 0.000000e+00 : f32
    %124 = vector.broadcast %cst_53 : f32 to vector<2x32xf32>
    %125 = arith.maximumf %123, %124 : vector<2x32xf32>
    %126 = tpu.concatenate %125, %125, %125, %125, %125, %125, %125, %125, %125, %125, %125, %125, %125, %125, %125, %125 in 1 : vector<2x32xf32>, vector<2x32xf32>, vector<2x32xf32>, vector<2x32xf32>, vector<2x32xf32>, vector<2x32xf32>, vector<2x32xf32>, vector<2x32xf32>, vector<2x32xf32>, vector<2x32xf32>, vector<2x32xf32>, vector<2x32xf32>, vector<2x32xf32>, vector<2x32xf32>, vector<2x32xf32>, vector<2x32xf32> -> vector<2x512xf32>
    %127 = tpu.concatenate %125, %125, %125, %125, %125, %125, %125, %125, %125, %125, %125, %125, %125, %125, %125, %125 in 1 : vector<2x32xf32>, vector<2x32xf32>, vector<2x32xf32>, vector<2x32xf32>, vector<2x32xf32>, vector<2x32xf32>, vector<2x32xf32>, vector<2x32xf32>, vector<2x32xf32>, vector<2x32xf32>, vector<2x32xf32>, vector<2x32xf32>, vector<2x32xf32>, vector<2x32xf32>, vector<2x32xf32>, vector<2x32xf32> -> vector<2x512xf32>
    %128 = tpu.concatenate %126, %127 in 1 : vector<2x512xf32>, vector<2x512xf32> -> vector<2x1024xf32>
    %129 = arith.mulf %101, %128 : vector<2x1024xf32>
    %130 = tpu.concatenate %129, %125, %14 in 1 : vector<2x1024xf32>, vector<2x32xf32>, vector<2x32xf32> -> vector<2x1088xf32>
    %c0_54 = arith.constant 0 : index
    %c0_55 = arith.constant 0 : index
    %131 = vector.load %arg13[%c0_54, %c0_55] : memref<1x1088xf32, #tpu.memory_space<vmem>>, vector<1x1088xf32>
    %132 = vector.broadcast %131 : vector<1x1088xf32> to vector<2x1088xf32>
    %133 = arith.mulf %130, %132 : vector<2x1088xf32>
    %cst_56 = arith.constant dense<0.000000e+00> : vector<2xf32>
    %134 = vector.multi_reduction <add>, %133, %cst_56 [1] : vector<2x1088xf32> to vector<2xf32>
    %135 = vector.shape_cast %134 : vector<2xf32> to vector<2x1xf32>
    %c0_57 = arith.constant 0 : index
    %c0_58 = arith.constant 0 : index
    %136 = vector.load %arg14[%c0_57, %c0_58] : memref<1x1xf32, #tpu.memory_space<vmem>>, vector<1x1xf32>
    %137 = vector.broadcast %136 : vector<1x1xf32> to vector<2x1xf32>
    %138 = arith.addf %135, %137 : vector<2x1xf32>
    %c0_59 = arith.constant 0 : index
    %c0_60 = arith.constant 0 : index
    %139 = vector.load %arg15[%c0_59, %c0_60] : memref<2x1xf32, #tpu.memory_space<vmem>>, vector<2x1xf32>
    tpu.vector_store %arg15[%c0_59, %c0_60], %138 {strides = array<i32>} : memref<2x1xf32, #tpu.memory_space<vmem>>, vector<2x1xf32>,
    return
  }
}

</mosaic_0001>

<llo_original>
// kernel: tpu_custom_call.1
$region0: #{tpu_custom_call.1}
  #allocation0 [shape = 'u32[]', space=smem, size = 0x4, offset = 0x4, fixed_abs, tag = 'smem constant byte address 0x4 - core index']
  #allocation1 [shape = 'u32[144,128]{1,0:T(1,128)}', space=vmem, size = 0x12000, scoped, tag = 'internal scratch']
  #allocation2 [shape = 'f32[1,1]{1,0:T(1,128)S(1)}', space=vmem, size = 0x200, scoped, tag = 'scoped memory for tpu_custom_call.1']
  %s0 = inlined_call_operand.vmem [shape: s32[2,4], index: 0, kind: input, shape index: {}]
  %s1 = inlined_call_operand.vmem [shape: f32[2,16], index: 1, kind: input, shape index: {}]
  %s2 = inlined_call_operand.vmem [shape: f32[2,8], index: 2, kind: input, shape index: {}]
  %s3 = inlined_call_operand.vmem [shape: f32[11,8], index: 3, kind: input, shape index: {}]
  %s4 = inlined_call_operand.vmem [shape: f32[8,8], index: 4, kind: input, shape index: {}]
  %s5 = inlined_call_operand.vmem [shape: f32[24,32], index: 5, kind: input, shape index: {}]
  %s6 = inlined_call_operand.vmem [shape: f32[1,32], index: 6, kind: input, shape index: {}]
  %s7 = inlined_call_operand.vmem [shape: f32[32,32], index: 7, kind: input, shape index: {}]
  %s8 = inlined_call_operand.vmem [shape: f32[1,32], index: 8, kind: input, shape index: {}]
  %s9 = inlined_call_operand.vmem [shape: f32[1616,32], index: 9, kind: input, shape index: {}]
  %s10 = inlined_call_operand.vmem [shape: f32[1,32], index: 10, kind: input, shape index: {}]
  %s11 = inlined_call_operand.vmem [shape: f32[1088,32], index: 11, kind: input, shape index: {}]
  %s12 = inlined_call_operand.vmem [shape: f32[1,32], index: 12, kind: input, shape index: {}]
  %s13 = inlined_call_operand.vmem [shape: f32[1,1088], index: 13, kind: input, shape index: {}]
  %s14 = inlined_call_operand.<no memory space> [shape: f32[1,1], index: 14, kind: input, shape index: {}]
  %s15 = inlined_call_operand.vmem [shape: f32[2,1], index: 15, kind: output, shape index: {}]
  %s16 = sld [smem:[#allocation0]]
  $region74: #{tpu_custom_call.1} parent=0
    _
  %s18 = ssub.s32 1, %s16
  %s19 = scalar_select 0, %s18, %s16
  %v20 = vstv %s14
  %21 = vst [vmem:[#allocation2] sm:$0x1] %v20
  $region1: #{tpu_custom_call.1} parent=0
    #allocation3 [shape = 'u8[1024]{0}', space=smem, size = 0x400, scoped, tag = 'input window, operand 0, single buffered']
    #allocation4 [shape = 's32[1]{0}', space=sflag, size = 0x4, scoped, tag = 'scoped memory for tpu_custom_call.1']
    %22 = vsyncpa [#allocation4], 0
    // Predicated region
    $region2: #{tpu_custom_call.1} parent=1 // pred_check
      _
    $region3: #{tpu_custom_call.1} parent=1 // pred_check_branch
      %24 = sbr.rel (0) target = $region5
    $region4: #{tpu_custom_call.1} parent=1 // pred_region
      %s26 = ssub.s32 32, 32
      %27 = vsyncadd [#allocation4], %s26
      %s29 = sshll.u32 %s0, 4
      %s30 = int_to_ptr.vmem [resolvable:$true] %s29
      %32 = dma.vmem_to_smem %s30, 32, [#allocation3], [#allocation4]
    $region5: #{tpu_custom_call.1} parent=1 // pred_fallthru
      _
    // Predicated region
    $region6: #{tpu_custom_call.1} parent=1 // pred_check
      _
    $region7: #{tpu_custom_call.1} parent=1 // pred_check_branch
      %34 = sbr.rel (0) target = $region9
    $region8: #{tpu_custom_call.1} parent=1 // pred_region
      _
    $region9: #{tpu_custom_call.1} parent=1 // pred_fallthru
      _
    // Predicated region
    $region10: #{tpu_custom_call.1} parent=1 // pred_check
      _
    $region11: #{tpu_custom_call.1} parent=1 // pred_check_branch
      %36 = sbr.rel (0) target = $region13
    $region12: #{tpu_custom_call.1} parent=1 // pred_region
      _
    $region13: #{tpu_custom_call.1} parent=1 // pred_fallthru
      _
    // Predicated region
    $region14: #{tpu_custom_call.1} parent=1 // pred_check
      _
    $region15: #{tpu_custom_call.1} parent=1 // pred_check_branch
      %38 = sbr.rel (0) target = $region17
    $region16: #{tpu_custom_call.1} parent=1 // pred_region
      _
    $region17: #{tpu_custom_call.1} parent=1 // pred_fallthru
      _
    // Predicated region
    $region18: #{tpu_custom_call.1} parent=1 // pred_check
      _
    $region19: #{tpu_custom_call.1} parent=1 // pred_check_branch
      %40 = sbr.rel (0) target = $region21
    $region20: #{tpu_custom_call.1} parent=1 // pred_region
      _
    $region21: #{tpu_custom_call.1} parent=1 // pred_fallthru
      _
    // Predicated region
    $region22: #{tpu_custom_call.1} parent=1 // pred_check
      _
    $region23: #{tpu_custom_call.1} parent=1 // pred_check_branch
      %42 = sbr.rel (0) target = $region25
    $region24: #{tpu_custom_call.1} parent=1 // pred_region
      _
    $region25: #{tpu_custom_call.1} parent=1 // pred_fallthru
      _
    // Predicated region
    $region26: #{tpu_custom_call.1} parent=1 // pred_check
      _
    $region27: #{tpu_custom_call.1} parent=1 // pred_check_branch
      %44 = sbr.rel (0) target = $region29
    $region28: #{tpu_custom_call.1} parent=1 // pred_region
      _
    $region29: #{tpu_custom_call.1} parent=1 // pred_fallthru
      _
    // Predicated region
    $region30: #{tpu_custom_call.1} parent=1 // pred_check
      _
    $region31: #{tpu_custom_call.1} parent=1 // pred_check_branch
      %46 = sbr.rel (0) target = $region33
    $region32: #{tpu_custom_call.1} parent=1 // pred_region
      _
    $region33: #{tpu_custom_call.1} parent=1 // pred_fallthru
      _
    // Predicated region
    $region34: #{tpu_custom_call.1} parent=1 // pred_check
      _
    $region35: #{tpu_custom_call.1} parent=1 // pred_check_branch
      %48 = sbr.rel (0) target = $region37
    $region36: #{tpu_custom_call.1} parent=1 // pred_region
      _
    $region37: #{tpu_custom_call.1} parent=1 // pred_fallthru
      _
    // Predicated region
    $region38: #{tpu_custom_call.1} parent=1 // pred_check
      _
    $region39: #{tpu_custom_call.1} parent=1 // pred_check_branch
      %50 = sbr.rel (0) target = $region41
    $region40: #{tpu_custom_call.1} parent=1 // pred_region
      _
    $region41: #{tpu_custom_call.1} parent=1 // pred_fallthru
      _
    // Predicated region
    $region42: #{tpu_custom_call.1} parent=1 // pred_check
      _
    $region43: #{tpu_custom_call.1} parent=1 // pred_check_branch
      %52 = sbr.rel (0) target = $region45
    $region44: #{tpu_custom_call.1} parent=1 // pred_region
      _
    $region45: #{tpu_custom_call.1} parent=1 // pred_fallthru
      _
    // Predicated region
    $region46: #{tpu_custom_call.1} parent=1 // pred_check
      _
    $region47: #{tpu_custom_call.1} parent=1 // pred_check_branch
      %54 = sbr.rel (0) target = $region49
    $region48: #{tpu_custom_call.1} parent=1 // pred_region
      _
    $region49: #{tpu_custom_call.1} parent=1 // pred_fallthru
      _
    // Predicated region
    $region50: #{tpu_custom_call.1} parent=1 // pred_check
      _
    $region51: #{tpu_custom_call.1} parent=1 // pred_check_branch
      %56 = sbr.rel (0) target = $region53
    $region52: #{tpu_custom_call.1} parent=1 // pred_region
      _
    $region53: #{tpu_custom_call.1} parent=1 // pred_fallthru
      _
    // Predicated region
    $region54: #{tpu_custom_call.1} parent=1 // pred_check
      _
    $region55: #{tpu_custom_call.1} parent=1 // pred_check_branch
      %58 = sbr.rel (0) target = $region57
    $region56: #{tpu_custom_call.1} parent=1 // pred_region
      _
    $region57: #{tpu_custom_call.1} parent=1 // pred_fallthru
      _
    // Predicated region
    $region58: #{tpu_custom_call.1} parent=1 // pred_check
      _
    $region59: #{tpu_custom_call.1} parent=1 // pred_check_branch
      %60 = sbr.rel (0) target = $region61
    $region60: #{tpu_custom_call.1} parent=1 // pred_region
      _
    $region61: #{tpu_custom_call.1} parent=1 // pred_fallthru
      _
    // Predicated region
    $region62: #{tpu_custom_call.1} parent=1 // pred_check
      _
    $region63: #{tpu_custom_call.1} parent=1 // pred_check_branch
      %62 = sbr.rel (0) target = $region65
    $region64: #{tpu_custom_call.1} parent=1 // pred_region
      %63 = dma.done [#allocation4], 32
    $region65: #{tpu_custom_call.1} parent=1 // pred_fallthru
      _
    %64 = sfence
    %v65 = vld [vmem:[%s1] sm:$0x3]
    %v66 = vld [vmem:[%s2] sm:$0x3]
    %68 = vrot.lane.b32.xlu0 %v66, 16
    %v69 = vpop.permute.xlu0 %68
    %vm71 = vcmask 130048
    %v72 = vsel %vm71, %v65, %v69
    %v73 = vld [vmem:[%s5] sm:$0xff]
    %v74 = vld [vmem:[%s5 + $0x8] sm:$0xff]
    %v75 = vld [vmem:[%s5 + $0x10] sm:$0xff]
    %v76 = vld [vmem:[%s6] sm:$0x1]
    %v78 = vlaneseq
    %v79 = vshrl.u32 %v78, 7
    %v80 = vsub.s32 0, %v79
    %v81 = vrot.slane %v76, %v80
    %vm83 = vcmask 195584
    %v85 = vsel %vm83, %v72, 0
    %87 = vmatprep.subr.mxu0 0.0
    %88 = vmatpush1.msra.mxu0 %v73
    %89 = vmatprep.subr.mxu0 0.0
    %90 = vmatpush1.msra.mxu0 %v74
    %91 = vmatprep.subr.mxu0 0.0
    %92 = vmatpush1.msra.mxu0 %v75
    %93 = vmatprep.subr.mxu0 0.0
    %94 = vmatpush1.msra.mxu0 0.0
    %95 = vmatprep.subr.mxu0 0.0
    %96 = vmatpush1.msra.mxu0 0.0
    %97 = vmatprep.subr.mxu0 0.0
    %98 = vmatpush1.msra.mxu0 0.0
    %99 = vmatprep.subr.mxu0 0.0
    %100 = vmatpush1.msra.mxu0 0.0
    %101 = vmatprep.subr.mxu0 0.0
    %102 = vmatpush1.msra.mxu0 0.0
    %103 = vmatprep.subr.mxu0 0.0
    %104 = vmatpush1.msra.mxu0 0.0
    %105 = vmatprep.subr.mxu0 0.0
    %106 = vmatpush1.msra.mxu0 0.0
    %107 = vmatprep.subr.mxu0 0.0
    %108 = vmatpush1.msra.mxu0 0.0
    %109 = vmatprep.subr.mxu0 0.0
    %110 = vmatpush1.msra.mxu0 0.0
    %111 = vmatprep.subr.mxu0 0.0
    %112 = vmatpush1.msra.mxu0 0.0
    %113 = vmatprep.subr.mxu0 0.0
    %114 = vmatpush1.msra.mxu0 0.0
    %115 = vmatprep.subr.mxu0 0.0
    %116 = vmatpush1.msra.mxu0 0.0
    %117 = vmatprep.subr.mxu0 0.0
    %118 = vmatpush1.msra.mxu0 0.0
    %119 = vmatprep.subr.mxu0 0.0
    %120 = vmatpush1.msra.mxu0 0.0
    %121 = vmatprep.subr.mxu0 0.0
    %122 = vmatpush1.msra.mxu0 0.0
    %123 = vmatprep.subr.mxu0 0.0
    %124 = vmatpush1.msra.mxu0 0.0
    %125 = vmatprep.subr.mxu0 0.0
    %126 = vmatpush1.msra.mxu0 0.0
    %127 = vmatprep.subr.mxu0 0.0
    %128 = vmatpush1.msra.mxu0 0.0
    %129 = vmatprep.subr.mxu0 0.0
    %130 = vmatpush1.msra.mxu0 0.0
    %131 = vmatprep.subr.mxu0 0.0
    %132 = vmatpush1.msra.mxu0 0.0
    %133 = vmatprep.subr.mxu0 0.0
    %134 = vmatpush1.msra.mxu0 0.0
    %135 = vmatprep.subr.mxu0 0.0
    %136 = vmatpush1.msra.mxu0 0.0
    %137 = vmatprep.subr.mxu0 0.0
    %138 = vmatpush1.msra.mxu0 0.0
    %139 = vmatprep.subr.mxu0 0.0
    %140 = vmatpush1.msra.mxu0 0.0
    %141 = vmatprep.subr.mxu0 0.0
    %142 = vmatpush1.msra.mxu0 0.0
    %143 = vmatprep.subr.mxu0 0.0
    %144 = vmatpush1.msra.mxu0 0.0
    %145 = vmatprep.subr.mxu0 0.0
    %146 = vmatpush1.msra.mxu0 0.0
    %147 = vmatprep.subr.mxu0 0.0
    %148 = vmatpush1.msra.mxu0 0.0
    %149 = vmatprep.subr.mxu0 0.0
    %150 = vmatpush1.msra.mxu0 0.0
    %151 = vmatprep.mubr.f32.mxu0 0.0
    %152 = vmatmul.mubr.f32.gmra.mrb[0].mxu0 %v85
    %v153 = vpop.f32.mrb[0].mxu0
    %v154 = vadd.f32 %v81, %v153
    %v155 = vpop.f32.mrb[0].mxu0
    %156 = vdwg.mxu0
    %v157 = vmax.f32 %v154, 0.0
    %v158 = vld [vmem:[%s7] sm:$0xff]
    %v159 = vld [vmem:[%s7 + $0x8] sm:$0xff]
    %v160 = vld [vmem:[%s7 + $0x10] sm:$0xff]
    %v161 = vld [vmem:[%s7 + $0x18] sm:$0xff]
    %v162 = vld [vmem:[%s8] sm:$0x1]
    %v164 = vlaneseq
    %v165 = vshrl.u32 %v164, 7
    %v166 = vsub.s32 0, %v165
    %v167 = vrot.slane %v162, %v166
    %vm169 = vcmask 261120
    %v171 = vsel %vm169, %v157, 0
    %173 = vmatprep.subr.mxu0 0.0
    %174 = vmatpush1.msra.mxu0 %v158
    %175 = vmatprep.subr.mxu0 0.0
    %176 = vmatpush1.msra.mxu0 %v159
    %177 = vmatprep.subr.mxu0 0.0
    %178 = vmatpush1.msra.mxu0 %v160
    %179 = vmatprep.subr.mxu0 0.0
    %180 = vmatpush1.msra.mxu0 %v161
    %181 = vmatprep.subr.mxu0 0.0
    %182 = vmatpush1.msra.mxu0 0.0
    %183 = vmatprep.subr.mxu0 0.0
    %184 = vmatpush1.msra.mxu0 0.0
    %185 = vmatprep.subr.mxu0 0.0
    %186 = vmatpush1.msra.mxu0 0.0
    %187 = vmatprep.subr.mxu0 0.0
    %188 = vmatpush1.msra.mxu0 0.0
    %189 = vmatprep.subr.mxu0 0.0
    %190 = vmatpush1.msra.mxu0 0.0
    %191 = vmatprep.subr.mxu0 0.0
    %192 = vmatpush1.msra.mxu0 0.0
    %193 = vmatprep.subr.mxu0 0.0
    %194 = vmatpush1.msra.mxu0 0.0
    %195 = vmatprep.subr.mxu0 0.0
    %196 = vmatpush1.msra.mxu0 0.0
    %197 = vmatprep.subr.mxu0 0.0
    %198 = vmatpush1.msra.mxu0 0.0
    %199 = vmatprep.subr.mxu0 0.0
    %200 = vmatpush1.msra.mxu0 0.0
    %201 = vmatprep.subr.mxu0 0.0
    %202 = vmatpush1.msra.mxu0 0.0
    %203 = vmatprep.subr.mxu0 0.0
    %204 = vmatpush1.msra.mxu0 0.0
    %205 = vmatprep.subr.mxu0 0.0
    %206 = vmatpush1.msra.mxu0 0.0
    %207 = vmatprep.subr.mxu0 0.0
    %208 = vmatpush1.msra.mxu0 0.0
    %209 = vmatprep.subr.mxu0 0.0
    %210 = vmatpush1.msra.mxu0 0.0
    %211 = vmatprep.subr.mxu0 0.0
    %212 = vmatpush1.msra.mxu0 0.0
    %213 = vmatprep.subr.mxu0 0.0
    %214 = vmatpush1.msra.mxu0 0.0
    %215 = vmatprep.subr.mxu0 0.0
    %216 = vmatpush1.msra.mxu0 0.0
    %217 = vmatprep.subr.mxu0 0.0
    %218 = vmatpush1.msra.mxu0 0.0
    %219 = vmatprep.subr.mxu0 0.0
    %220 = vmatpush1.msra.mxu0 0.0
    %221 = vmatprep.subr.mxu0 0.0
    %222 = vmatpush1.msra.mxu0 0.0
    %223 = vmatprep.subr.mxu0 0.0
    %224 = vmatpush1.msra.mxu0 0.0
    %225 = vmatprep.subr.mxu0 0.0
    %226 = vmatpush1.msra.mxu0 0.0
    %227 = vmatprep.subr.mxu0 0.0
    %228 = vmatpush1.msra.mxu0 0.0
    %229 = vmatprep.subr.mxu0 0.0
    %230 = vmatpush1.msra.mxu0 0.0
    %231 = vmatprep.subr.mxu0 0.0
    %232 = vmatpush1.msra.mxu0 0.0
    %233 = vmatprep.subr.mxu0 0.0
    %234 = vmatpush1.msra.mxu0 0.0
    %235 = vmatprep.subr.mxu0 0.0
    %236 = vmatpush1.msra.mxu0 0.0
    %237 = vmatprep.mubr.f32.mxu0 0.0
    %238 = vmatmul.mubr.f32.gmra.mrb[0].mxu0 %v171
    %v239 = vpop.f32.mrb[0].mxu0
    %v240 = vadd.f32 %v167, %v239
    %v241 = vpop.f32.mrb[0].mxu0
    %242 = vdwg.mxu0
    %v243 = vld [vmem:[%s3] sm:$0xff]
    %v244 = vld [vmem:[%s3 + $0x8] sm:$0x7]
    %v245 = vld [vmem:[%s4] sm:$0xff]
    %s246 = sld [smem:[#allocation3]]
    %v247 = vlaneseq
    %v248 = vand.u32 %v247, 127
    %v249 = vstv %s246
    %vm250 = vcmp.eq.s32.totalorder %v248, %v249
    %v251 = vsel %vm250, 1, 0
    %v252 = vcvt.s32.f32 %v251
    %vm253 = vcmask 89088
    %v255 = vsel %vm253, %v252, 0
    %vm257 = vcmask 1042432
    %v259 = vsel %vm257, %v244, 0
    %261 = vmatprep.subr.mxu0 0.0
    %262 = vmatpush1.msra.mxu0 %v243
    %263 = vmatprep.subr.mxu0 0.0
    %264 = vmatpush1.msra.mxu0 %v259
    %265 = vmatprep.subr.mxu0 0.0
    %266 = vmatpush1.msra.mxu0 0.0
    %267 = vmatprep.subr.mxu0 0.0
    %268 = vmatpush1.msra.mxu0 0.0
    %269 = vmatprep.subr.mxu0 0.0
    %270 = vmatpush1.msra.mxu0 0.0
    %271 = vmatprep.subr.mxu0 0.0
    %272 = vmatpush1.msra.mxu0 0.0
    %273 = vmatprep.subr.mxu0 0.0
    %274 = vmatpush1.msra.mxu0 0.0
    %275 = vmatprep.subr.mxu0 0.0
    %276 = vmatpush1.msra.mxu0 0.0
    %277 = vmatprep.subr.mxu0 0.0
    %278 = vmatpush1.msra.mxu0 0.0
    %279 = vmatprep.subr.mxu0 0.0
    %280 = vmatpush1.msra.mxu0 0.0
    %281 = vmatprep.subr.mxu0 0.0
    %282 = vmatpush1.msra.mxu0 0.0
    %283 = vmatprep.subr.mxu0 0.0
    %284 = vmatpush1.msra.mxu0 0.0
    %285 = vmatprep.subr.mxu0 0.0
    %286 = vmatpush1.msra.mxu0 0.0
    %287 = vmatprep.subr.mxu0 0.0
    %288 = vmatpush1.msra.mxu0 0.0
    %289 = vmatprep.subr.mxu0 0.0
    %290 = vmatpush1.msra.mxu0 0.0
    %291 = vmatprep.subr.mxu0 0.0
    %292 = vmatpush1.msra.mxu0 0.0
    %293 = vmatprep.subr.mxu0 0.0
    %294 = vmatpush1.msra.mxu0 0.0
    %295 = vmatprep.subr.mxu0 0.0
    %296 = vmatpush1.msra.mxu0 0.0
    %297 = vmatprep.subr.mxu0 0.0
    %298 = vmatpush1.msra.mxu0 0.0
    %299 = vmatprep.subr.mxu0 0.0
    %300 = vmatpush1.msra.mxu0 0.0
    %301 = vmatprep.subr.mxu0 0.0
    %302 = vmatpush1.msra.mxu0 0.0
    %303 = vmatprep.subr.mxu0 0.0
    %304 = vmatpush1.msra.mxu0 0.0
    %305 = vmatprep.subr.mxu0 0.0
    %306 = vmatpush1.msra.mxu0 0.0
    %307 = vmatprep.subr.mxu0 0.0
    %308 = vmatpush1.msra.mxu0 0.0
    %309 = vmatprep.subr.mxu0 0.0
    %310 = vmatpush1.msra.mxu0 0.0
    %311 = vmatprep.subr.mxu0 0.0
    %312 = vmatpush1.msra.mxu0 0.0
    %313 = vmatprep.subr.mxu0 0.0
    %314 = vmatpush1.msra.mxu0 0.0
    %315 = vmatprep.subr.mxu0 0.0
    %316 = vmatpush1.msra.mxu0 0.0
    %317 = vmatprep.subr.mxu0 0.0
    %318 = vmatpush1.msra.mxu0 0.0
    %319 = vmatprep.subr.mxu0 0.0
    %320 = vmatpush1.msra.mxu0 0.0
    %321 = vmatprep.subr.mxu0 0.0
    %322 = vmatpush1.msra.mxu0 0.0
    %323 = vmatprep.subr.mxu0 0.0
    %324 = vmatpush1.msra.mxu0 0.0
    %325 = vmatprep.mubr.f32.mxu0 0.0
    %326 = vmatmul.mubr.f32.gmra.mrb[0].mxu0 %v255
    %v327 = vpop.f32.mrb[0].mxu0
    %v328 = vadd.f32 0.0, %v327
    %v329 = vpop.f32.mrb[0].mxu0
    %330 = vdwg.mxu0
    %s331 = sld [smem:[#allocation3 + $0x1]]
    %v332 = vstv %s331
    %vm333 = vcmp.eq.s32.totalorder %v248, %v332
    %v334 = vsel %vm333, 1, 0
    %v335 = vcvt.s32.f32 %v334
    %v337 = vsel %vm253, %v335, 0
    %339 = vmatprep.subr.mxu0 0.0
    %340 = vmatpush1.msra.mxu0 %v243
    %341 = vmatprep.subr.mxu0 0.0
    %342 = vmatpush1.msra.mxu0 %v259
    %343 = vmatprep.subr.mxu0 0.0
    %344 = vmatpush1.msra.mxu0 0.0
    %345 = vmatprep.subr.mxu0 0.0
    %346 = vmatpush1.msra.mxu0 0.0
    %347 = vmatprep.subr.mxu0 0.0
    %348 = vmatpush1.msra.mxu0 0.0
    %349 = vmatprep.subr.mxu0 0.0
    %350 = vmatpush1.msra.mxu0 0.0
    %351 = vmatprep.subr.mxu0 0.0
    %352 = vmatpush1.msra.mxu0 0.0
    %353 = vmatprep.subr.mxu0 0.0
    %354 = vmatpush1.msra.mxu0 0.0
    %355 = vmatprep.subr.mxu0 0.0
    %356 = vmatpush1.msra.mxu0 0.0
    %357 = vmatprep.subr.mxu0 0.0
    %358 = vmatpush1.msra.mxu0 0.0
    %359 = vmatprep.subr.mxu0 0.0
    %360 = vmatpush1.msra.mxu0 0.0
    %361 = vmatprep.subr.mxu0 0.0
    %362 = vmatpush1.msra.mxu0 0.0
    %363 = vmatprep.subr.mxu0 0.0
    %364 = vmatpush1.msra.mxu0 0.0
    %365 = vmatprep.subr.mxu0 0.0
    %366 = vmatpush1.msra.mxu0 0.0
    %367 = vmatprep.subr.mxu0 0.0
    %368 = vmatpush1.msra.mxu0 0.0
    %369 = vmatprep.subr.mxu0 0.0
    %370 = vmatpush1.msra.mxu0 0.0
    %371 = vmatprep.subr.mxu0 0.0
    %372 = vmatpush1.msra.mxu0 0.0
    %373 = vmatprep.subr.mxu0 0.0
    %374 = vmatpush1.msra.mxu0 0.0
    %375 = vmatprep.subr.mxu0 0.0
    %376 = vmatpush1.msra.mxu0 0.0
    %377 = vmatprep.subr.mxu0 0.0
    %378 = vmatpush1.msra.mxu0 0.0
    %379 = vmatprep.subr.mxu0 0.0
    %380 = vmatpush1.msra.mxu0 0.0
    %381 = vmatprep.subr.mxu0 0.0
    %382 = vmatpush1.msra.mxu0 0.0
    %383 = vmatprep.subr.mxu0 0.0
    %384 = vmatpush1.msra.mxu0 0.0
    %385 = vmatprep.subr.mxu0 0.0
    %386 = vmatpush1.msra.mxu0 0.0
    %387 = vmatprep.subr.mxu0 0.0
    %388 = vmatpush1.msra.mxu0 0.0
    %389 = vmatprep.subr.mxu0 0.0
    %390 = vmatpush1.msra.mxu0 0.0
    %391 = vmatprep.subr.mxu0 0.0
    %392 = vmatpush1.msra.mxu0 0.0
    %393 = vmatprep.subr.mxu0 0.0
    %394 = vmatpush1.msra.mxu0 0.0
    %395 = vmatprep.subr.mxu0 0.0
    %396 = vmatpush1.msra.mxu0 0.0
    %397 = vmatprep.subr.mxu0 0.0
    %398 = vmatpush1.msra.mxu0 0.0
    %399 = vmatprep.subr.mxu0 0.0
    %400 = vmatpush1.msra.mxu0 0.0
    %401 = vmatprep.subr.mxu0 0.0
    %402 = vmatpush1.msra.mxu0 0.0
    %403 = vmatprep.mubr.f32.mxu0 0.0
    %404 = vmatmul.mubr.f32.gmra.mrb[0].mxu0 %v337
    %v405 = vpop.f32.mrb[0].mxu0
    %v406 = vadd.f32 0.0, %v405
    %v407 = vpop.f32.mrb[0].mxu0
    %408 = vdwg.mxu0
    %s409 = sld [smem:[#allocation3 + $0x2]]
    %v410 = vstv %s409
    %vm411 = vcmp.eq.s32.totalorder %v248, %v410
    %v412 = vsel %vm411, 1, 0
    %v413 = vcvt.s32.f32 %v412
    %v415 = vsel %vm253, %v413, 0
    %417 = vmatprep.subr.mxu0 0.0
    %418 = vmatpush1.msra.mxu0 %v243
    %419 = vmatprep.subr.mxu0 0.0
    %420 = vmatpush1.msra.mxu0 %v259
    %421 = vmatprep.subr.mxu0 0.0
    %422 = vmatpush1.msra.mxu0 0.0
    %423 = vmatprep.subr.mxu0 0.0
    %424 = vmatpush1.msra.mxu0 0.0
    %425 = vmatprep.subr.mxu0 0.0
    %426 = vmatpush1.msra.mxu0 0.0
    %427 = vmatprep.subr.mxu0 0.0
    %428 = vmatpush1.msra.mxu0 0.0
    %429 = vmatprep.subr.mxu0 0.0
    %430 = vmatpush1.msra.mxu0 0.0
    %431 = vmatprep.subr.mxu0 0.0
    %432 = vmatpush1.msra.mxu0 0.0
    %433 = vmatprep.subr.mxu0 0.0
    %434 = vmatpush1.msra.mxu0 0.0
    %435 = vmatprep.subr.mxu0 0.0
    %436 = vmatpush1.msra.mxu0 0.0
    %437 = vmatprep.subr.mxu0 0.0
    %438 = vmatpush1.msra.mxu0 0.0
    %439 = vmatprep.subr.mxu0 0.0
    %440 = vmatpush1.msra.mxu0 0.0
    %441 = vmatprep.subr.mxu0 0.0
    %442 = vmatpush1.msra.mxu0 0.0
    %443 = vmatprep.subr.mxu0 0.0
    %444 = vmatpush1.msra.mxu0 0.0
    %445 = vmatprep.subr.mxu0 0.0
    %446 = vmatpush1.msra.mxu0 0.0
    %447 = vmatprep.subr.mxu0 0.0
    %448 = vmatpush1.msra.mxu0 0.0
    %449 = vmatprep.subr.mxu0 0.0
    %450 = vmatpush1.msra.mxu0 0.0
    %451 = vmatprep.subr.mxu0 0.0
    %452 = vmatpush1.msra.mxu0 0.0
    %453 = vmatprep.subr.mxu0 0.0
    %454 = vmatpush1.msra.mxu0 0.0
    %455 = vmatprep.subr.mxu0 0.0
    %456 = vmatpush1.msra.mxu0 0.0
    %457 = vmatprep.subr.mxu0 0.0
    %458 = vmatpush1.msra.mxu0 0.0
    %459 = vmatprep.subr.mxu0 0.0
    %460 = vmatpush1.msra.mxu0 0.0
    %461 = vmatprep.subr.mxu0 0.0
    %462 = vmatpush1.msra.mxu0 0.0
    %463 = vmatprep.subr.mxu0 0.0
    %464 = vmatpush1.msra.mxu0 0.0
    %465 = vmatprep.subr.mxu0 0.0
    %466 = vmatpush1.msra.mxu0 0.0
    %467 = vmatprep.subr.mxu0 0.0
    %468 = vmatpush1.msra.mxu0 0.0
    %469 = vmatprep.subr.mxu0 0.0
    %470 = vmatpush1.msra.mxu0 0.0
    %471 = vmatprep.subr.mxu0 0.0
    %472 = vmatpush1.msra.mxu0 0.0
    %473 = vmatprep.subr.mxu0 0.0
    %474 = vmatpush1.msra.mxu0 0.0
    %475 = vmatprep.subr.mxu0 0.0
    %476 = vmatpush1.msra.mxu0 0.0
    %477 = vmatprep.subr.mxu0 0.0
    %478 = vmatpush1.msra.mxu0 0.0
    %479 = vmatprep.subr.mxu0 0.0
    %480 = vmatpush1.msra.mxu0 0.0
    %481 = vmatprep.mubr.f32.mxu0 0.0
    %482 = vmatmul.mubr.f32.gmra.mrb[0].mxu0 %v415
    %v483 = vpop.f32.mrb[0].mxu0
    %v484 = vadd.f32 0.0, %v483
    %v485 = vpop.f32.mrb[0].mxu0
    %486 = vdwg.mxu0
    %s487 = sld [smem:[#allocation3 + $0x3]]
    %v488 = vstv %s487
    %vm489 = vcmp.eq.s32.totalorder %v248, %v488
    %v490 = vsel %vm489, 1, 0
    %v491 = vcvt.s32.f32 %v490
    %vm492 = vcmask 64512
    %v494 = vsel %vm492, %v491, 0
    %496 = vmatprep.subr.mxu0 0.0
    %497 = vmatpush1.msra.mxu0 %v245
    %498 = vmatprep.subr.mxu0 0.0
    %499 = vmatpush1.msra.mxu0 0.0
    %500 = vmatprep.subr.mxu0 0.0
    %501 = vmatpush1.msra.mxu0 0.0
    %502 = vmatprep.subr.mxu0 0.0
    %503 = vmatpush1.msra.mxu0 0.0
    %504 = vmatprep.subr.mxu0 0.0
    %505 = vmatpush1.msra.mxu0 0.0
    %506 = vmatprep.subr.mxu0 0.0
    %507 = vmatpush1.msra.mxu0 0.0
    %508 = vmatprep.subr.mxu0 0.0
    %509 = vmatpush1.msra.mxu0 0.0
    %510 = vmatprep.subr.mxu0 0.0
    %511 = vmatpush1.msra.mxu0 0.0
    %512 = vmatprep.subr.mxu0 0.0
    %513 = vmatpush1.msra.mxu0 0.0
    %514 = vmatprep.subr.mxu0 0.0
    %515 = vmatpush1.msra.mxu0 0.0
    %516 = vmatprep.subr.mxu0 0.0
    %517 = vmatpush1.msra.mxu0 0.0
    %518 = vmatprep.subr.mxu0 0.0
    %519 = vmatpush1.msra.mxu0 0.0
    %520 = vmatprep.subr.mxu0 0.0
    %521 = vmatpush1.msra.mxu0 0.0
    %522 = vmatprep.subr.mxu0 0.0
    %523 = vmatpush1.msra.mxu0 0.0
    %524 = vmatprep.subr.mxu0 0.0
    %525 = vmatpush1.msra.mxu0 0.0
    %526 = vmatprep.subr.mxu0 0.0
    %527 = vmatpush1.msra.mxu0 0.0
    %528 = vmatprep.subr.mxu0 0.0
    %529 = vmatpush1.msra.mxu0 0.0
    %530 = vmatprep.subr.mxu0 0.0
    %531 = vmatpush1.msra.mxu0 0.0
    %532 = vmatprep.subr.mxu0 0.0
    %533 = vmatpush1.msra.mxu0 0.0
    %534 = vmatprep.subr.mxu0 0.0
    %535 = vmatpush1.msra.mxu0 0.0
    %536 = vmatprep.subr.mxu0 0.0
    %537 = vmatpush1.msra.mxu0 0.0
    %538 = vmatprep.subr.mxu0 0.0
    %539 = vmatpush1.msra.mxu0 0.0
    %540 = vmatprep.subr.mxu0 0.0
    %541 = vmatpush1.msra.mxu0 0.0
    %542 = vmatprep.subr.mxu0 0.0
    %543 = vmatpush1.msra.mxu0 0.0
    %544 = vmatprep.subr.mxu0 0.0
    %545 = vmatpush1.msra.mxu0 0.0
    %546 = vmatprep.subr.mxu0 0.0
    %547 = vmatpush1.msra.mxu0 0.0
    %548 = vmatprep.subr.mxu0 0.0
    %549 = vmatpush1.msra.mxu0 0.0
    %550 = vmatprep.subr.mxu0 0.0
    %551 = vmatpush1.msra.mxu0 0.0
    %552 = vmatprep.subr.mxu0 0.0
    %553 = vmatpush1.msra.mxu0 0.0
    %554 = vmatprep.subr.mxu0 0.0
    %555 = vmatpush1.msra.mxu0 0.0
    %556 = vmatprep.subr.mxu0 0.0
    %557 = vmatpush1.msra.mxu0 0.0
    %558 = vmatprep.subr.mxu0 0.0
    %559 = vmatpush1.msra.mxu0 0.0
    %560 = vmatprep.mubr.f32.mxu0 0.0
    %561 = vmatmul.mubr.f32.gmra.mrb[0].mxu0 %v494
    %v562 = vpop.f32.mrb[0].mxu0
    %v563 = vadd.f32 0.0, %v562
    %v564 = vpop.f32.mrb[0].mxu0
    %565 = vdwg.mxu0
    %567 = vrot.lane.b32.xlu0 %v406, 8
    %v568 = vpop.permute.xlu0 %567
    %571 = vrot.lane.b32.xlu0 %v484, 16
    %v572 = vpop.permute.xlu0 %571
    %575 = vrot.lane.b32.xlu0 %v563, 24
    %v576 = vpop.permute.xlu0 %575
    %579 = vrot.lane.b32.xlu0 %v65, 32
    %v580 = vpop.permute.xlu0 %579
    %v582 = vsel %vm492, %v328, %v568
    %v583 = vsel %vm71, %v582, %v572
    %v584 = vsel %vm83, %v583, %v576
    %v585 = vsel %vm169, %v584, %v580
    %s586 = sld [smem:[#allocation3 + $0x80]]
    %v587 = vstv %s586
    %vm588 = vcmp.eq.s32.totalorder %v248, %v587
    %v589 = vsel %vm588, 1, 0
    %v590 = vcvt.s32.f32 %v589
    %v592 = vsel %vm253, %v590, 0
    %594 = vmatprep.subr.mxu0 0.0
    %595 = vmatpush1.msra.mxu0 %v243
    %596 = vmatprep.subr.mxu0 0.0
    %597 = vmatpush1.msra.mxu0 %v259
    %598 = vmatprep.subr.mxu0 0.0
    %599 = vmatpush1.msra.mxu0 0.0
    %600 = vmatprep.subr.mxu0 0.0
    %601 = vmatpush1.msra.mxu0 0.0
    %602 = vmatprep.subr.mxu0 0.0
    %603 = vmatpush1.msra.mxu0 0.0
    %604 = vmatprep.subr.mxu0 0.0
    %605 = vmatpush1.msra.mxu0 0.0
    %606 = vmatprep.subr.mxu0 0.0
    %607 = vmatpush1.msra.mxu0 0.0
    %608 = vmatprep.subr.mxu0 0.0
    %609 = vmatpush1.msra.mxu0 0.0
    %610 = vmatprep.subr.mxu0 0.0
    %611 = vmatpush1.msra.mxu0 0.0
    %612 = vmatprep.subr.mxu0 0.0
    %613 = vmatpush1.msra.mxu0 0.0
    %614 = vmatprep.subr.mxu0 0.0
    %615 = vmatpush1.msra.mxu0 0.0
    %616 = vmatprep.subr.mxu0 0.0
    %617 = vmatpush1.msra.mxu0 0.0
    %618 = vmatprep.subr.mxu0 0.0
    %619 = vmatpush1.msra.mxu0 0.0
    %620 = vmatprep.subr.mxu0 0.0
    %621 = vmatpush1.msra.mxu0 0.0
    %622 = vmatprep.subr.mxu0 0.0
    %623 = vmatpush1.msra.mxu0 0.0
    %624 = vmatprep.subr.mxu0 0.0
    %625 = vmatpush1.msra.mxu0 0.0
    %626 = vmatprep.subr.mxu0 0.0
    %627 = vmatpush1.msra.mxu0 0.0
    %628 = vmatprep.subr.mxu0 0.0
    %629 = vmatpush1.msra.mxu0 0.0
    %630 = vmatprep.subr.mxu0 0.0
    %631 = vmatpush1.msra.mxu0 0.0
    %632 = vmatprep.subr.mxu0 0.0
    %633 = vmatpush1.msra.mxu0 0.0
    %634 = vmatprep.subr.mxu0 0.0
    %635 = vmatpush1.msra.mxu0 0.0
    %636 = vmatprep.subr.mxu0 0.0
    %637 = vmatpush1.msra.mxu0 0.0
    %638 = vmatprep.subr.mxu0 0.0
    %639 = vmatpush1.msra.mxu0 0.0
    %640 = vmatprep.subr.mxu0 0.0
    %641 = vmatpush1.msra.mxu0 0.0
    %642 = vmatprep.subr.mxu0 0.0
    %643 = vmatpush1.msra.mxu0 0.0
    %644 = vmatprep.subr.mxu0 0.0
    %645 = vmatpush1.msra.mxu0 0.0
    %646 = vmatprep.subr.mxu0 0.0
    %647 = vmatpush1.msra.mxu0 0.0
    %648 = vmatprep.subr.mxu0 0.0
    %649 = vmatpush1.msra.mxu0 0.0
    %650 = vmatprep.subr.mxu0 0.0
    %651 = vmatpush1.msra.mxu0 0.0
    %652 = vmatprep.subr.mxu0 0.0
    %653 = vmatpush1.msra.mxu0 0.0
    %654 = vmatprep.subr.mxu0 0.0
    %655 = vmatpush1.msra.mxu0 0.0
    %656 = vmatprep.subr.mxu0 0.0
    %657 = vmatpush1.msra.mxu0 0.0
    %658 = vmatprep.mubr.f32.mxu0 0.0
    %659 = vmatmul.mubr.f32.gmra.mrb[0].mxu0 %v592
    %v660 = vpop.f32.mrb[0].mxu0
    %v661 = vadd.f32 0.0, %v660
    %v662 = vpop.f32.mrb[0].mxu0
    %663 = vdwg.mxu0
    %s664 = sld [smem:[#allocation3 + $0x81]]
    %v665 = vstv %s664
    %vm666 = vcmp.eq.s32.totalorder %v248, %v665
    %v667 = vsel %vm666, 1, 0
    %v668 = vcvt.s32.f32 %v667
    %v670 = vsel %vm253, %v668, 0
    %672 = vmatprep.subr.mxu0 0.0
    %673 = vmatpush1.msra.mxu0 %v243
    %674 = vmatprep.subr.mxu0 0.0
    %675 = vmatpush1.msra.mxu0 %v259
    %676 = vmatprep.subr.mxu0 0.0
    %677 = vmatpush1.msra.mxu0 0.0
    %678 = vmatprep.subr.mxu0 0.0
    %679 = vmatpush1.msra.mxu0 0.0
    %680 = vmatprep.subr.mxu0 0.0
    %681 = vmatpush1.msra.mxu0 0.0
    %682 = vmatprep.subr.mxu0 0.0
    %683 = vmatpush1.msra.mxu0 0.0
    %684 = vmatprep.subr.mxu0 0.0
    %685 = vmatpush1.msra.mxu0 0.0
    %686 = vmatprep.subr.mxu0 0.0
    %687 = vmatpush1.msra.mxu0 0.0
    %688 = vmatprep.subr.mxu0 0.0
    %689 = vmatpush1.msra.mxu0 0.0
    %690 = vmatprep.subr.mxu0 0.0
    %691 = vmatpush1.msra.mxu0 0.0
    %692 = vmatprep.subr.mxu0 0.0
    %693 = vmatpush1.msra.mxu0 0.0
    %694 = vmatprep.subr.mxu0 0.0
    %695 = vmatpush1.msra.mxu0 0.0
    %696 = vmatprep.subr.mxu0 0.0
    %697 = vmatpush1.msra.mxu0 0.0
    %698 = vmatprep.subr.mxu0 0.0
    %699 = vmatpush1.msra.mxu0 0.0
    %700 = vmatprep.subr.mxu0 0.0
    %701 = vmatpush1.msra.mxu0 0.0
    %702 = vmatprep.subr.mxu0 0.0
    %703 = vmatpush1.msra.mxu0 0.0
    %704 = vmatprep.subr.mxu0 0.0
    %705 = vmatpush1.msra.mxu0 0.0
    %706 = vmatprep.subr.mxu0 0.0
    %707 = vmatpush1.msra.mxu0 0.0
    %708 = vmatprep.subr.mxu0 0.0
    %709 = vmatpush1.msra.mxu0 0.0
    %710 = vmatprep.subr.mxu0 0.0
    %711 = vmatpush1.msra.mxu0 0.0
    %712 = vmatprep.subr.mxu0 0.0
    %713 = vmatpush1.msra.mxu0 0.0
    %714 = vmatprep.subr.mxu0 0.0
    %715 = vmatpush1.msra.mxu0 0.0
    %716 = vmatprep.subr.mxu0 0.0
    %717 = vmatpush1.msra.mxu0 0.0
    %718 = vmatprep.subr.mxu0 0.0
    %719 = vmatpush1.msra.mxu0 0.0
    %720 = vmatprep.subr.mxu0 0.0
    %721 = vmatpush1.msra.mxu0 0.0
    %722 = vmatprep.subr.mxu0 0.0
    %723 = vmatpush1.msra.mxu0 0.0
    %724 = vmatprep.subr.mxu0 0.0
    %725 = vmatpush1.msra.mxu0 0.0
    %726 = vmatprep.subr.mxu0 0.0
    %727 = vmatpush1.msra.mxu0 0.0
    %728 = vmatprep.subr.mxu0 0.0
    %729 = vmatpush1.msra.mxu0 0.0
    %730 = vmatprep.subr.mxu0 0.0
    %731 = vmatpush1.msra.mxu0 0.0
    %732 = vmatprep.subr.mxu0 0.0
    %733 = vmatpush1.msra.mxu0 0.0
    %734 = vmatprep.subr.mxu0 0.0
    %735 = vmatpush1.msra.mxu0 0.0
    %736 = vmatprep.mubr.f32.mxu0 0.0
    %737 = vmatmul.mubr.f32.gmra.mrb[0].mxu0 %v670
    %v738 = vpop.f32.mrb[0].mxu0
    %v739 = vadd.f32 0.0, %v738
    %v740 = vpop.f32.mrb[0].mxu0
    %741 = vdwg.mxu0
    %s742 = sld [smem:[#allocation3 + $0x82]]
    %v743 = vstv %s742
    %vm744 = vcmp.eq.s32.totalorder %v248, %v743
    %v745 = vsel %vm744, 1, 0
    %v746 = vcvt.s32.f32 %v745
    %v748 = vsel %vm253, %v746, 0
    %750 = vmatprep.subr.mxu0 0.0
    %751 = vmatpush1.msra.mxu0 %v243
    %752 = vmatprep.subr.mxu0 0.0
    %753 = vmatpush1.msra.mxu0 %v259
    %754 = vmatprep.subr.mxu0 0.0
    %755 = vmatpush1.msra.mxu0 0.0
    %756 = vmatprep.subr.mxu0 0.0
    %757 = vmatpush1.msra.mxu0 0.0
    %758 = vmatprep.subr.mxu0 0.0
    %759 = vmatpush1.msra.mxu0 0.0
    %760 = vmatprep.subr.mxu0 0.0
    %761 = vmatpush1.msra.mxu0 0.0
    %762 = vmatprep.subr.mxu0 0.0
    %763 = vmatpush1.msra.mxu0 0.0
    %764 = vmatprep.subr.mxu0 0.0
    %765 = vmatpush1.msra.mxu0 0.0
    %766 = vmatprep.subr.mxu0 0.0
    %767 = vmatpush1.msra.mxu0 0.0
    %768 = vmatprep.subr.mxu0 0.0
    %769 = vmatpush1.msra.mxu0 0.0
    %770 = vmatprep.subr.mxu0 0.0
    %771 = vmatpush1.msra.mxu0 0.0
    %772 = vmatprep.subr.mxu0 0.0
    %773 = vmatpush1.msra.mxu0 0.0
    %774 = vmatprep.subr.mxu0 0.0
    %775 = vmatpush1.msra.mxu0 0.0
    %776 = vmatprep.subr.mxu0 0.0
    %777 = vmatpush1.msra.mxu0 0.0
    %778 = vmatprep.subr.mxu0 0.0
    %779 = vmatpush1.msra.mxu0 0.0
    %780 = vmatprep.subr.mxu0 0.0
    %781 = vmatpush1.msra.mxu0 0.0
    %782 = vmatprep.subr.mxu0 0.0
    %783 = vmatpush1.msra.mxu0 0.0
    %784 = vmatprep.subr.mxu0 0.0
    %785 = vmatpush1.msra.mxu0 0.0
    %786 = vmatprep.subr.mxu0 0.0
    %787 = vmatpush1.msra.mxu0 0.0
    %788 = vmatprep.subr.mxu0 0.0
    %789 = vmatpush1.msra.mxu0 0.0
    %790 = vmatprep.subr.mxu0 0.0
    %791 = vmatpush1.msra.mxu0 0.0
    %792 = vmatprep.subr.mxu0 0.0
    %793 = vmatpush1.msra.mxu0 0.0
    %794 = vmatprep.subr.mxu0 0.0
    %795 = vmatpush1.msra.mxu0 0.0
    %796 = vmatprep.subr.mxu0 0.0
    %797 = vmatpush1.msra.mxu0 0.0
    %798 = vmatprep.subr.mxu0 0.0
    %799 = vmatpush1.msra.mxu0 0.0
    %800 = vmatprep.subr.mxu0 0.0
    %801 = vmatpush1.msra.mxu0 0.0
    %802 = vmatprep.subr.mxu0 0.0
    %803 = vmatpush1.msra.mxu0 0.0
    %804 = vmatprep.subr.mxu0 0.0
    %805 = vmatpush1.msra.mxu0 0.0
    %806 = vmatprep.subr.mxu0 0.0
    %807 = vmatpush1.msra.mxu0 0.0
    %808 = vmatprep.subr.mxu0 0.0
    %809 = vmatpush1.msra.mxu0 0.0
    %810 = vmatprep.subr.mxu0 0.0
    %811 = vmatpush1.msra.mxu0 0.0
    %812 = vmatprep.subr.mxu0 0.0
    %813 = vmatpush1.msra.mxu0 0.0
    %814 = vmatprep.mubr.f32.mxu0 0.0
    %815 = vmatmul.mubr.f32.gmra.mrb[0].mxu0 %v748
    %v816 = vpop.f32.mrb[0].mxu0
    %v817 = vadd.f32 0.0, %v816
    %v818 = vpop.f32.mrb[0].mxu0
    %819 = vdwg.mxu0
    %s820 = sld [smem:[#allocation3 + $0x83]]
    %v821 = vstv %s820
    %vm822 = vcmp.eq.s32.totalorder %v248, %v821
    %v823 = vsel %vm822, 1, 0
    %v824 = vcvt.s32.f32 %v823
    %v826 = vsel %vm492, %v824, 0
    %828 = vmatprep.subr.mxu0 0.0
    %829 = vmatpush1.msra.mxu0 %v245
    %830 = vmatprep.subr.mxu0 0.0
    %831 = vmatpush1.msra.mxu0 0.0
    %832 = vmatprep.subr.mxu0 0.0
    %833 = vmatpush1.msra.mxu0 0.0
    %834 = vmatprep.subr.mxu0 0.0
    %835 = vmatpush1.msra.mxu0 0.0
    %836 = vmatprep.subr.mxu0 0.0
    %837 = vmatpush1.msra.mxu0 0.0
    %838 = vmatprep.subr.mxu0 0.0
    %839 = vmatpush1.msra.mxu0 0.0
    %840 = vmatprep.subr.mxu0 0.0
    %841 = vmatpush1.msra.mxu0 0.0
    %842 = vmatprep.subr.mxu0 0.0
    %843 = vmatpush1.msra.mxu0 0.0
    %844 = vmatprep.subr.mxu0 0.0
    %845 = vmatpush1.msra.mxu0 0.0
    %846 = vmatprep.subr.mxu0 0.0
    %847 = vmatpush1.msra.mxu0 0.0
    %848 = vmatprep.subr.mxu0 0.0
    %849 = vmatpush1.msra.mxu0 0.0
    %850 = vmatprep.subr.mxu0 0.0
    %851 = vmatpush1.msra.mxu0 0.0
    %852 = vmatprep.subr.mxu0 0.0
    %853 = vmatpush1.msra.mxu0 0.0
    %854 = vmatprep.subr.mxu0 0.0
    %855 = vmatpush1.msra.mxu0 0.0
    %856 = vmatprep.subr.mxu0 0.0
    %857 = vmatpush1.msra.mxu0 0.0
    %858 = vmatprep.subr.mxu0 0.0
    %859 = vmatpush1.msra.mxu0 0.0
    %860 = vmatprep.subr.mxu0 0.0
    %861 = vmatpush1.msra.mxu0 0.0
    %862 = vmatprep.subr.mxu0 0.0
    %863 = vmatpush1.msra.mxu0 0.0
    %864 = vmatprep.subr.mxu0 0.0
    %865 = vmatpush1.msra.mxu0 0.0
    %866 = vmatprep.subr.mxu0 0.0
    %867 = vmatpush1.msra.mxu0 0.0
    %868 = vmatprep.subr.mxu0 0.0
    %869 = vmatpush1.msra.mxu0 0.0
    %870 = vmatprep.subr.mxu0 0.0
    %871 = vmatpush1.msra.mxu0 0.0
    %872 = vmatprep.subr.mxu0 0.0
    %873 = vmatpush1.msra.mxu0 0.0
    %874 = vmatprep.subr.mxu0 0.0
    %875 = vmatpush1.msra.mxu0 0.0
    %876 = vmatprep.subr.mxu0 0.0
    %877 = vmatpush1.msra.mxu0 0.0
    %878 = vmatprep.subr.mxu0 0.0
    %879 = vmatpush1.msra.mxu0 0.0
    %880 = vmatprep.subr.mxu0 0.0
    %881 = vmatpush1.msra.mxu0 0.0
    %882 = vmatprep.subr.mxu0 0.0
    %883 = vmatpush1.msra.mxu0 0.0
    %884 = vmatprep.subr.mxu0 0.0
    %885 = vmatpush1.msra.mxu0 0.0
    %886 = vmatprep.subr.mxu0 0.0
    %887 = vmatpush1.msra.mxu0 0.0
    %888 = vmatprep.subr.mxu0 0.0
    %889 = vmatpush1.msra.mxu0 0.0
    %890 = vmatprep.subr.mxu0 0.0
    %891 = vmatpush1.msra.mxu0 0.0
    %892 = vmatprep.mubr.f32.mxu0 0.0
    %893 = vmatmul.mubr.f32.gmra.mrb[0].mxu0 %v826
    %v894 = vpop.f32.mrb[0].mxu0
    %v895 = vadd.f32 0.0, %v894
    %v896 = vpop.f32.mrb[0].mxu0
    %897 = vdwg.mxu0
    %899 = vrot.lane.b32.xlu0 %v739, 8
    %v900 = vpop.permute.xlu0 %899
    %903 = vrot.lane.b32.xlu0 %v817, 16
    %v904 = vpop.permute.xlu0 %903
    %907 = vrot.lane.b32.xlu0 %v895, 24
    %v908 = vpop.permute.xlu0 %907
    %v910 = vrot.slane %v65, 1
    %911 = vrot.lane.b32.xlu0 %v910, 32
    %v912 = vpop.permute.xlu0 %911
    %v914 = vsel %vm492, %v661, %v900
    %v915 = vsel %vm71, %v914, %v904
    %v916 = vsel %vm83, %v915, %v908
    %v917 = vsel %vm169, %v916, %v912
    %v919 = vrot.slane %v917, 7
    %vm921 = vcmask 1040384
    %v922 = vsel %vm921, %v585, %v919
    %v923 = vadd.s32 %v248, 128
    %v924 = vadd.s32 %v248, 256
    %v925 = vadd.s32 %v248, 384
    %v926 = vadd.s32 %v248, 512
    %v927 = vadd.s32 %v248, 640
    %v928 = vadd.s32 %v248, 768
    %v929 = vadd.s32 %v248, 896
    %v930 = vadd.s32 %v248, 1024
    %v931 = vadd.s32 %v248, 1152
    %v932 = vadd.s32 %v248, 1280
    %v933 = vadd.s32 %v248, 1408
    %v934 = vlaneseq
    %v935 = vshrl.u32 %v934, 7
    %v936 = vadd.s32 %v935, 8
    %v937 = vadd.s32 %v935, 16
    %v938 = vadd.s32 %v935, 24
    %v939 = vmul.u32 %v935, 48
    %v940 = vmul.u32 %v936, 48
    %v941 = vmul.u32 %v937, 48
    %v942 = vmul.u32 %v938, 48
    %vm943 = vcmp.ge.s32.totalorder %v248, %v939
    %vm944 = vcmp.ge.s32.totalorder %v923, %v939
    %vm945 = vcmp.ge.s32.totalorder %v924, %v939
    %vm946 = vcmp.ge.s32.totalorder %v925, %v939
    %vm947 = vcmp.ge.s32.totalorder %v926, %v939
    %vm948 = vcmp.ge.s32.totalorder %v927, %v939
    %vm949 = vcmp.ge.s32.totalorder %v928, %v939
    %vm950 = vcmp.ge.s32.totalorder %v929, %v939
    %vm951 = vcmp.ge.s32.totalorder %v930, %v939
    %vm952 = vcmp.ge.s32.totalorder %v931, %v939
    %vm953 = vcmp.ge.s32.totalorder %v932, %v939
    %vm954 = vcmp.ge.s32.totalorder %v933, %v939
    %vm955 = vcmp.ge.s32.totalorder %v248, %v940
    %vm956 = vcmp.ge.s32.totalorder %v923, %v940
    %vm957 = vcmp.ge.s32.totalorder %v924, %v940
    %vm958 = vcmp.ge.s32.totalorder %v925, %v940
    %vm959 = vcmp.ge.s32.totalorder %v926, %v940
    %vm960 = vcmp.ge.s32.totalorder %v927, %v940
    %vm961 = vcmp.ge.s32.totalorder %v928, %v940
    %vm962 = vcmp.ge.s32.totalorder %v929, %v940
    %vm963 = vcmp.ge.s32.totalorder %v930, %v940
    %vm964 = vcmp.ge.s32.totalorder %v931, %v940
    %vm965 = vcmp.ge.s32.totalorder %v932, %v940
    %vm966 = vcmp.ge.s32.totalorder %v933, %v940
    %vm967 = vcmp.ge.s32.totalorder %v248, %v941
    %vm968 = vcmp.ge.s32.totalorder %v923, %v941
    %vm969 = vcmp.ge.s32.totalorder %v924, %v941
    %vm970 = vcmp.ge.s32.totalorder %v925, %v941
    %vm971 = vcmp.ge.s32.totalorder %v926, %v941
    %vm972 = vcmp.ge.s32.totalorder %v927, %v941
    %vm973 = vcmp.ge.s32.totalorder %v928, %v941
    %vm974 = vcmp.ge.s32.totalorder %v929, %v941
    %vm975 = vcmp.ge.s32.totalorder %v930, %v941
    %vm976 = vcmp.ge.s32.totalorder %v931, %v941
    %vm977 = vcmp.ge.s32.totalorder %v932, %v941
    %vm978 = vcmp.ge.s32.totalorder %v933, %v941
    %vm979 = vcmp.ge.s32.totalorder %v248, %v942
    %vm980 = vcmp.ge.s32.totalorder %v923, %v942
    %vm981 = vcmp.ge.s32.totalorder %v924, %v942
    %vm982 = vcmp.ge.s32.totalorder %v925, %v942
    %vm983 = vcmp.ge.s32.totalorder %v926, %v942
    %vm984 = vcmp.ge.s32.totalorder %v927, %v942
    %vm985 = vcmp.ge.s32.totalorder %v928, %v942
    %vm986 = vcmp.ge.s32.totalorder %v929, %v942
    %vm987 = vcmp.ge.s32.totalorder %v930, %v942
    %vm988 = vcmp.ge.s32.totalorder %v931, %v942
    %vm989 = vcmp.ge.s32.totalorder %v932, %v942
    %vm990 = vcmp.ge.s32.totalorder %v933, %v942
    %v991 = vadd.s32 %v939, 48
    %v992 = vadd.s32 %v940, 48
    %v993 = vadd.s32 %v941, 48
    %v994 = vadd.s32 %v942, 48
    %vm995 = vcmp.lt.s32.totalorder %v248, %v991
    %vm996 = vcmp.lt.s32.totalorder %v923, %v991
    %vm997 = vcmp.lt.s32.totalorder %v924, %v991
    %vm998 = vcmp.lt.s32.totalorder %v925, %v991
    %vm999 = vcmp.lt.s32.totalorder %v926, %v991
    %vm1000 = vcmp.lt.s32.totalorder %v927, %v991
    %vm1001 = vcmp.lt.s32.totalorder %v928, %v991
    %vm1002 = vcmp.lt.s32.totalorder %v929, %v991
    %vm1003 = vcmp.lt.s32.totalorder %v930, %v991
    %vm1004 = vcmp.lt.s32.totalorder %v931, %v991
    %vm1005 = vcmp.lt.s32.totalorder %v932, %v991
    %vm1006 = vcmp.lt.s32.totalorder %v933, %v991
    %vm1007 = vcmp.lt.s32.totalorder %v248, %v992
    %vm1008 = vcmp.lt.s32.totalorder %v923, %v992
    %vm1009 = vcmp.lt.s32.totalorder %v924, %v992
    %vm1010 = vcmp.lt.s32.totalorder %v925, %v992
    %vm1011 = vcmp.lt.s32.totalorder %v926, %v992
    %vm1012 = vcmp.lt.s32.totalorder %v927, %v992
    %vm1013 = vcmp.lt.s32.totalorder %v928, %v992
    %vm1014 = vcmp.lt.s32.totalorder %v929, %v992
    %vm1015 = vcmp.lt.s32.totalorder %v930, %v992
    %vm1016 = vcmp.lt.s32.totalorder %v931, %v992
    %vm1017 = vcmp.lt.s32.totalorder %v932, %v992
    %vm1018 = vcmp.lt.s32.totalorder %v933, %v992
    %vm1019 = vcmp.lt.s32.totalorder %v248, %v993
    %vm1020 = vcmp.lt.s32.totalorder %v923, %v993
    %vm1021 = vcmp.lt.s32.totalorder %v924, %v993
    %vm1022 = vcmp.lt.s32.totalorder %v925, %v993
    %vm1023 = vcmp.lt.s32.totalorder %v926, %v993
    %vm1024 = vcmp.lt.s32.totalorder %v927, %v993
    %vm1025 = vcmp.lt.s32.totalorder %v928, %v993
    %vm1026 = vcmp.lt.s32.totalorder %v929, %v993
    %vm1027 = vcmp.lt.s32.totalorder %v930, %v993
    %vm1028 = vcmp.lt.s32.totalorder %v931, %v993
    %vm1029 = vcmp.lt.s32.totalorder %v932, %v993
    %vm1030 = vcmp.lt.s32.totalorder %v933, %v993
    %vm1031 = vcmp.lt.s32.totalorder %v248, %v994
    %vm1032 = vcmp.lt.s32.totalorder %v923, %v994
    %vm1033 = vcmp.lt.s32.totalorder %v924, %v994
    %vm1034 = vcmp.lt.s32.totalorder %v925, %v994
    %vm1035 = vcmp.lt.s32.totalorder %v926, %v994
    %vm1036 = vcmp.lt.s32.totalorder %v927, %v994
    %vm1037 = vcmp.lt.s32.totalorder %v928, %v994
    %vm1038 = vcmp.lt.s32.totalorder %v929, %v994
    %vm1039 = vcmp.lt.s32.totalorder %v930, %v994
    %vm1040 = vcmp.lt.s32.totalorder %v931, %v994
    %vm1041 = vcmp.lt.s32.totalorder %v932, %v994
    %vm1042 = vcmp.lt.s32.totalorder %v933, %v994
    %vm1043 = vmand %vm943, %vm995
    %vm1044 = vmand %vm944, %vm996
    %vm1045 = vmand %vm945, %vm997
    %vm1046 = vmand %vm946, %vm998
    %vm1047 = vmand %vm947, %vm999
    %vm1048 = vmand %vm948, %vm1000
    %vm1049 = vmand %vm949, %vm1001
    %vm1050 = vmand %vm950, %vm1002
    %vm1051 = vmand %vm951, %vm1003
    %vm1052 = vmand %vm952, %vm1004
    %vm1053 = vmand %vm953, %vm1005
    %vm1054 = vmand %vm954, %vm1006
    %vm1055 = vmand %vm955, %vm1007
    %vm1056 = vmand %vm956, %vm1008
    %vm1057 = vmand %vm957, %vm1009
    %vm1058 = vmand %vm958, %vm1010
    %vm1059 = vmand %vm959, %vm1011
    %vm1060 = vmand %vm960, %vm1012
    %vm1061 = vmand %vm961, %vm1013
    %vm1062 = vmand %vm962, %vm1014
    %vm1063 = vmand %vm963, %vm1015
    %vm1064 = vmand %vm964, %vm1016
    %vm1065 = vmand %vm965, %vm1017
    %vm1066 = vmand %vm966, %vm1018
    %vm1067 = vmand %vm967, %vm1019
    %vm1068 = vmand %vm968, %vm1020
    %vm1069 = vmand %vm969, %vm1021
    %vm1070 = vmand %vm970, %vm1022
    %vm1071 = vmand %vm971, %vm1023
    %vm1072 = vmand %vm972, %vm1024
    %vm1073 = vmand %vm973, %vm1025
    %vm1074 = vmand %vm974, %vm1026
    %vm1075 = vmand %vm975, %vm1027
    %vm1076 = vmand %vm976, %vm1028
    %vm1077 = vmand %vm977, %vm1029
    %vm1078 = vmand %vm978, %vm1030
    %vm1079 = vmand %vm979, %vm1031
    %vm1080 = vmand %vm980, %vm1032
    %vm1081 = vmand %vm981, %vm1033
    %vm1082 = vmand %vm982, %vm1034
    %vm1083 = vmand %vm983, %vm1035
    %vm1084 = vmand %vm984, %vm1036
    %vm1085 = vmand %vm985, %vm1037
    %vm1086 = vmand %vm986, %vm1038
    %vm1087 = vmand %vm987, %vm1039
    %vm1088 = vmand %vm988, %vm1040
    %vm1089 = vmand %vm989, %vm1041
    %vm1090 = vmand %vm990, %vm1042
    %v1091 = vsel %vm1043, 1, 0
    %v1092 = vsel %vm1044, 1, 0
    %v1093 = vsel %vm1045, 1, 0
    %v1094 = vsel %vm1046, 1, 0
    %v1095 = vsel %vm1047, 1, 0
    %v1096 = vsel %vm1048, 1, 0
    %v1097 = vsel %vm1049, 1, 0
    %v1098 = vsel %vm1050, 1, 0
    %v1099 = vsel %vm1051, 1, 0
    %v1100 = vsel %vm1052, 1, 0
    %v1101 = vsel %vm1053, 1, 0
    %v1102 = vsel %vm1054, 1, 0
    %v1103 = vsel %vm1055, 1, 0
    %v1104 = vsel %vm1056, 1, 0
    %v1105 = vsel %vm1057, 1, 0
    %v1106 = vsel %vm1058, 1, 0
    %v1107 = vsel %vm1059, 1, 0
    %v1108 = vsel %vm1060, 1, 0
    %v1109 = vsel %vm1061, 1, 0
    %v1110 = vsel %vm1062, 1, 0
    %v1111 = vsel %vm1063, 1, 0
    %v1112 = vsel %vm1064, 1, 0
    %v1113 = vsel %vm1065, 1, 0
    %v1114 = vsel %vm1066, 1, 0
    %v1115 = vsel %vm1067, 1, 0
    %v1116 = vsel %vm1068, 1, 0
    %v1117 = vsel %vm1069, 1, 0
    %v1118 = vsel %vm1070, 1, 0
    %v1119 = vsel %vm1071, 1, 0
    %v1120 = vsel %vm1072, 1, 0
    %v1121 = vsel %vm1073, 1, 0
    %v1122 = vsel %vm1074, 1, 0
    %v1123 = vsel %vm1075, 1, 0
    %v1124 = vsel %vm1076, 1, 0
    %v1125 = vsel %vm1077, 1, 0
    %v1126 = vsel %vm1078, 1, 0
    %v1127 = vsel %vm1079, 1, 0
    %v1128 = vsel %vm1080, 1, 0
    %v1129 = vsel %vm1081, 1, 0
    %v1130 = vsel %vm1082, 1, 0
    %v1131 = vsel %vm1083, 1, 0
    %v1132 = vsel %vm1084, 1, 0
    %v1133 = vsel %vm1085, 1, 0
    %v1134 = vsel %vm1086, 1, 0
    %v1135 = vsel %vm1087, 1, 0
    %v1136 = vsel %vm1088, 1, 0
    %v1137 = vsel %vm1089, 1, 0
    %v1138 = vsel %vm1090, 1, 0
    %v1139 = vcvt.s32.f32 %v1091
    %v1140 = vcvt.s32.f32 %v1092
    %v1141 = vcvt.s32.f32 %v1093
    %v1142 = vcvt.s32.f32 %v1094
    %v1143 = vcvt.s32.f32 %v1095
    %v1144 = vcvt.s32.f32 %v1096
    %v1145 = vcvt.s32.f32 %v1097
    %v1146 = vcvt.s32.f32 %v1098
    %v1147 = vcvt.s32.f32 %v1099
    %v1148 = vcvt.s32.f32 %v1100
    %v1149 = vcvt.s32.f32 %v1101
    %v1150 = vcvt.s32.f32 %v1102
    %v1151 = vcvt.s32.f32 %v1103
    %v1152 = vcvt.s32.f32 %v1104
    %v1153 = vcvt.s32.f32 %v1105
    %v1154 = vcvt.s32.f32 %v1106
    %v1155 = vcvt.s32.f32 %v1107
    %v1156 = vcvt.s32.f32 %v1108
    %v1157 = vcvt.s32.f32 %v1109
    %v1158 = vcvt.s32.f32 %v1110
    %v1159 = vcvt.s32.f32 %v1111
    %v1160 = vcvt.s32.f32 %v1112
    %v1161 = vcvt.s32.f32 %v1113
    %v1162 = vcvt.s32.f32 %v1114
    %v1163 = vcvt.s32.f32 %v1115
    %v1164 = vcvt.s32.f32 %v1116
    %v1165 = vcvt.s32.f32 %v1117
    %v1166 = vcvt.s32.f32 %v1118
    %v1167 = vcvt.s32.f32 %v1119
    %v1168 = vcvt.s32.f32 %v1120
    %v1169 = vcvt.s32.f32 %v1121
    %v1170 = vcvt.s32.f32 %v1122
    %v1171 = vcvt.s32.f32 %v1123
    %v1172 = vcvt.s32.f32 %v1124
    %v1173 = vcvt.s32.f32 %v1125
    %v1174 = vcvt.s32.f32 %v1126
    %v1175 = vcvt.s32.f32 %v1127
    %v1176 = vcvt.s32.f32 %v1128
    %v1177 = vcvt.s32.f32 %v1129
    %v1178 = vcvt.s32.f32 %v1130
    %v1179 = vcvt.s32.f32 %v1131
    %v1180 = vcvt.s32.f32 %v1132
    %v1181 = vcvt.s32.f32 %v1133
    %v1182 = vcvt.s32.f32 %v1134
    %v1183 = vcvt.s32.f32 %v1135
    %v1184 = vcvt.s32.f32 %v1136
    %v1185 = vcvt.s32.f32 %v1137
    %v1186 = vcvt.s32.f32 %v1138
    %v1188 = vsel %vm169, %v240, 0
    %1190 = vmatprep.subr.mxu0 %v1140
    %1191 = vmatpush1.msra.mxu0 %v1139
    %1192 = vmatprep.subr.mxu0 %v1152
    %1193 = vmatpush1.msra.mxu0 %v1151
    %1194 = vmatprep.subr.mxu0 %v1164
    %1195 = vmatpush1.msra.mxu0 %v1163
    %1196 = vmatprep.subr.mxu0 %v1176
    %1197 = vmatpush1.msra.mxu0 %v1175
    %1198 = vmatprep.subr.mxu0 0.0
    %1199 = vmatpush1.msra.mxu0 0.0
    %1200 = vmatprep.subr.mxu0 0.0
    %1201 = vmatpush1.msra.mxu0 0.0
    %1202 = vmatprep.subr.mxu0 0.0
    %1203 = vmatpush1.msra.mxu0 0.0
    %1204 = vmatprep.subr.mxu0 0.0
    %1205 = vmatpush1.msra.mxu0 0.0
    %1206 = vmatprep.subr.mxu0 0.0
    %1207 = vmatpush1.msra.mxu0 0.0
    %1208 = vmatprep.subr.mxu0 0.0
    %1209 = vmatpush1.msra.mxu0 0.0
    %1210 = vmatprep.subr.mxu0 0.0
    %1211 = vmatpush1.msra.mxu0 0.0
    %1212 = vmatprep.subr.mxu0 0.0
    %1213 = vmatpush1.msra.mxu0 0.0
    %1214 = vmatprep.subr.mxu0 0.0
    %1215 = vmatpush1.msra.mxu0 0.0
    %1216 = vmatprep.subr.mxu0 0.0
    %1217 = vmatpush1.msra.mxu0 0.0
    %1218 = vmatprep.subr.mxu0 0.0
    %1219 = vmatpush1.msra.mxu0 0.0
    %1220 = vmatprep.subr.mxu0 0.0
    %1221 = vmatpush1.msra.mxu0 0.0
    %1222 = vmatprep.subr.mxu0 0.0
    %1223 = vmatpush1.msra.mxu0 0.0
    %1224 = vmatprep.subr.mxu0 0.0
    %1225 = vmatpush1.msra.mxu0 0.0
    %1226 = vmatprep.subr.mxu0 0.0
    %1227 = vmatpush1.msra.mxu0 0.0
    %1228 = vmatprep.subr.mxu0 0.0
    %1229 = vmatpush1.msra.mxu0 0.0
    %1230 = vmatprep.subr.mxu0 0.0
    %1231 = vmatpush1.msra.mxu0 0.0
    %1232 = vmatprep.subr.mxu0 0.0
    %1233 = vmatpush1.msra.mxu0 0.0
    %1234 = vmatprep.subr.mxu0 0.0
    %1235 = vmatpush1.msra.mxu0 0.0
    %1236 = vmatprep.subr.mxu0 0.0
    %1237 = vmatpush1.msra.mxu0 0.0
    %1238 = vmatprep.subr.mxu0 0.0
    %1239 = vmatpush1.msra.mxu0 0.0
    %1240 = vmatprep.subr.mxu0 0.0
    %1241 = vmatpush1.msra.mxu0 0.0
    %1242 = vmatprep.subr.mxu0 0.0
    %1243 = vmatpush1.msra.mxu0 0.0
    %1244 = vmatprep.subr.mxu0 0.0
    %1245 = vmatpush1.msra.mxu0 0.0
    %1246 = vmatprep.subr.mxu0 0.0
    %1247 = vmatpush1.msra.mxu0 0.0
    %1248 = vmatprep.subr.mxu0 0.0
    %1249 = vmatpush1.msra.mxu0 0.0
    %1250 = vmatprep.subr.mxu0 0.0
    %1251 = vmatpush1.msra.mxu0 0.0
    %1252 = vmatprep.subr.mxu0 0.0
    %1253 = vmatpush1.msra.mxu0 0.0
    %1254 = vmatprep.mubr.f32.mxu0 0.0
    %1255 = vmatmul.mubr.f32.gmra.mrb[0].mxu0 %v1188
    %v1256 = vpop.f32.mrb[0].mxu0
    %v1257 = vadd.f32 0.0, %v1256
    %v1258 = vpop.f32.mrb[0].mxu0
    %v1259 = vadd.f32 0.0, %v1258
    %1260 = vdwg.mxu0
    %1261 = vmatprep.subr.mxu0 %v1142
    %1262 = vmatpush1.msra.mxu0 %v1141
    %1263 = vmatprep.subr.mxu0 %v1154
    %1264 = vmatpush1.msra.mxu0 %v1153
    %1265 = vmatprep.subr.mxu0 %v1166
    %1266 = vmatpush1.msra.mxu0 %v1165
    %1267 = vmatprep.subr.mxu0 %v1178
    %1268 = vmatpush1.msra.mxu0 %v1177
    %1269 = vmatprep.subr.mxu0 0.0
    %1270 = vmatpush1.msra.mxu0 0.0
    %1271 = vmatprep.subr.mxu0 0.0
    %1272 = vmatpush1.msra.mxu0 0.0
    %1273 = vmatprep.subr.mxu0 0.0
    %1274 = vmatpush1.msra.mxu0 0.0
    %1275 = vmatprep.subr.mxu0 0.0
    %1276 = vmatpush1.msra.mxu0 0.0
    %1277 = vmatprep.subr.mxu0 0.0
    %1278 = vmatpush1.msra.mxu0 0.0
    %1279 = vmatprep.subr.mxu0 0.0
    %1280 = vmatpush1.msra.mxu0 0.0
    %1281 = vmatprep.subr.mxu0 0.0
    %1282 = vmatpush1.msra.mxu0 0.0
    %1283 = vmatprep.subr.mxu0 0.0
    %1284 = vmatpush1.msra.mxu0 0.0
    %1285 = vmatprep.subr.mxu0 0.0
    %1286 = vmatpush1.msra.mxu0 0.0
    %1287 = vmatprep.subr.mxu0 0.0
    %1288 = vmatpush1.msra.mxu0 0.0
    %1289 = vmatprep.subr.mxu0 0.0
    %1290 = vmatpush1.msra.mxu0 0.0
    %1291 = vmatprep.subr.mxu0 0.0
    %1292 = vmatpush1.msra.mxu0 0.0
    %1293 = vmatprep.subr.mxu0 0.0
    %1294 = vmatpush1.msra.mxu0 0.0
    %1295 = vmatprep.subr.mxu0 0.0
    %1296 = vmatpush1.msra.mxu0 0.0
    %1297 = vmatprep.subr.mxu0 0.0
    %1298 = vmatpush1.msra.mxu0 0.0
    %1299 = vmatprep.subr.mxu0 0.0
    %1300 = vmatpush1.msra.mxu0 0.0
    %1301 = vmatprep.subr.mxu0 0.0
    %1302 = vmatpush1.msra.mxu0 0.0
    %1303 = vmatprep.subr.mxu0 0.0
    %1304 = vmatpush1.msra.mxu0 0.0
    %1305 = vmatprep.subr.mxu0 0.0
    %1306 = vmatpush1.msra.mxu0 0.0
    %1307 = vmatprep.subr.mxu0 0.0
    %1308 = vmatpush1.msra.mxu0 0.0
    %1309 = vmatprep.subr.mxu0 0.0
    %1310 = vmatpush1.msra.mxu0 0.0
    %1311 = vmatprep.subr.mxu0 0.0
    %1312 = vmatpush1.msra.mxu0 0.0
    %1313 = vmatprep.subr.mxu0 0.0
    %1314 = vmatpush1.msra.mxu0 0.0
    %1315 = vmatprep.subr.mxu0 0.0
    %1316 = vmatpush1.msra.mxu0 0.0
    %1317 = vmatprep.subr.mxu0 0.0
    %1318 = vmatpush1.msra.mxu0 0.0
    %1319 = vmatprep.subr.mxu0 0.0
    %1320 = vmatpush1.msra.mxu0 0.0
    %1321 = vmatprep.subr.mxu0 0.0
    %1322 = vmatpush1.msra.mxu0 0.0
    %1323 = vmatprep.subr.mxu0 0.0
    %1324 = vmatpush1.msra.mxu0 0.0
    %1325 = vmatprep.mubr.f32.mxu0 0.0
    %1326 = vmatmul.mubr.f32.gmra.mrb[0].mxu0 %v1188
    %v1327 = vpop.f32.mrb[0].mxu0
    %v1328 = vadd.f32 0.0, %v1327
    %v1329 = vpop.f32.mrb[0].mxu0
    %v1330 = vadd.f32 0.0, %v1329
    %1331 = vdwg.mxu0
    %1332 = vmatprep.subr.mxu0 %v1144
    %1333 = vmatpush1.msra.mxu0 %v1143
    %1334 = vmatprep.subr.mxu0 %v1156
    %1335 = vmatpush1.msra.mxu0 %v1155
    %1336 = vmatprep.subr.mxu0 %v1168
    %1337 = vmatpush1.msra.mxu0 %v1167
    %1338 = vmatprep.subr.mxu0 %v1180
    %1339 = vmatpush1.msra.mxu0 %v1179
    %1340 = vmatprep.subr.mxu0 0.0
    %1341 = vmatpush1.msra.mxu0 0.0
    %1342 = vmatprep.subr.mxu0 0.0
    %1343 = vmatpush1.msra.mxu0 0.0
    %1344 = vmatprep.subr.mxu0 0.0
    %1345 = vmatpush1.msra.mxu0 0.0
    %1346 = vmatprep.subr.mxu0 0.0
    %1347 = vmatpush1.msra.mxu0 0.0
    %1348 = vmatprep.subr.mxu0 0.0
    %1349 = vmatpush1.msra.mxu0 0.0
    %1350 = vmatprep.subr.mxu0 0.0
    %1351 = vmatpush1.msra.mxu0 0.0
    %1352 = vmatprep.subr.mxu0 0.0
    %1353 = vmatpush1.msra.mxu0 0.0
    %1354 = vmatprep.subr.mxu0 0.0
    %1355 = vmatpush1.msra.mxu0 0.0
    %1356 = vmatprep.subr.mxu0 0.0
    %1357 = vmatpush1.msra.mxu0 0.0
    %1358 = vmatprep.subr.mxu0 0.0
    %1359 = vmatpush1.msra.mxu0 0.0
    %1360 = vmatprep.subr.mxu0 0.0
    %1361 = vmatpush1.msra.mxu0 0.0
    %1362 = vmatprep.subr.mxu0 0.0
    %1363 = vmatpush1.msra.mxu0 0.0
    %1364 = vmatprep.subr.mxu0 0.0
    %1365 = vmatpush1.msra.mxu0 0.0
    %1366 = vmatprep.subr.mxu0 0.0
    %1367 = vmatpush1.msra.mxu0 0.0
    %1368 = vmatprep.subr.mxu0 0.0
    %1369 = vmatpush1.msra.mxu0 0.0
    %1370 = vmatprep.subr.mxu0 0.0
    %1371 = vmatpush1.msra.mxu0 0.0
    %1372 = vmatprep.subr.mxu0 0.0
    %1373 = vmatpush1.msra.mxu0 0.0
    %1374 = vmatprep.subr.mxu0 0.0
    %1375 = vmatpush1.msra.mxu0 0.0
    %1376 = vmatprep.subr.mxu0 0.0
    %1377 = vmatpush1.msra.mxu0 0.0
    %1378 = vmatprep.subr.mxu0 0.0
    %1379 = vmatpush1.msra.mxu0 0.0
    %1380 = vmatprep.subr.mxu0 0.0
    %1381 = vmatpush1.msra.mxu0 0.0
    %1382 = vmatprep.subr.mxu0 0.0
    %1383 = vmatpush1.msra.mxu0 0.0
    %1384 = vmatprep.subr.mxu0 0.0
    %1385 = vmatpush1.msra.mxu0 0.0
    %1386 = vmatprep.subr.mxu0 0.0
    %1387 = vmatpush1.msra.mxu0 0.0
    %1388 = vmatprep.subr.mxu0 0.0
    %1389 = vmatpush1.msra.mxu0 0.0
    %1390 = vmatprep.subr.mxu0 0.0
    %1391 = vmatpush1.msra.mxu0 0.0
    %1392 = vmatprep.subr.mxu0 0.0
    %1393 = vmatpush1.msra.mxu0 0.0
    %1394 = vmatprep.subr.mxu0 0.0
    %1395 = vmatpush1.msra.mxu0 0.0
    %1396 = vmatprep.mubr.f32.mxu0 0.0
    %1397 = vmatmul.mubr.f32.gmra.mrb[0].mxu0 %v1188
    %v1398 = vpop.f32.mrb[0].mxu0
    %v1399 = vadd.f32 0.0, %v1398
    %v1400 = vpop.f32.mrb[0].mxu0
    %v1401 = vadd.f32 0.0, %v1400
    %1402 = vdwg.mxu0
    %1403 = vmatprep.subr.mxu0 %v1146
    %1404 = vmatpush1.msra.mxu0 %v1145
    %1405 = vmatprep.subr.mxu0 %v1158
    %1406 = vmatpush1.msra.mxu0 %v1157
    %1407 = vmatprep.subr.mxu0 %v1170
    %1408 = vmatpush1.msra.mxu0 %v1169
    %1409 = vmatprep.subr.mxu0 %v1182
    %1410 = vmatpush1.msra.mxu0 %v1181
    %1411 = vmatprep.subr.mxu0 0.0
    %1412 = vmatpush1.msra.mxu0 0.0
    %1413 = vmatprep.subr.mxu0 0.0
    %1414 = vmatpush1.msra.mxu0 0.0
    %1415 = vmatprep.subr.mxu0 0.0
    %1416 = vmatpush1.msra.mxu0 0.0
    %1417 = vmatprep.subr.mxu0 0.0
    %1418 = vmatpush1.msra.mxu0 0.0
    %1419 = vmatprep.subr.mxu0 0.0
    %1420 = vmatpush1.msra.mxu0 0.0
    %1421 = vmatprep.subr.mxu0 0.0
    %1422 = vmatpush1.msra.mxu0 0.0
    %1423 = vmatprep.subr.mxu0 0.0
    %1424 = vmatpush1.msra.mxu0 0.0
    %1425 = vmatprep.subr.mxu0 0.0
    %1426 = vmatpush1.msra.mxu0 0.0
    %1427 = vmatprep.subr.mxu0 0.0
    %1428 = vmatpush1.msra.mxu0 0.0
    %1429 = vmatprep.subr.mxu0 0.0
    %1430 = vmatpush1.msra.mxu0 0.0
    %1431 = vmatprep.subr.mxu0 0.0
    %1432 = vmatpush1.msra.mxu0 0.0
    %1433 = vmatprep.subr.mxu0 0.0
    %1434 = vmatpush1.msra.mxu0 0.0
    %1435 = vmatprep.subr.mxu0 0.0
    %1436 = vmatpush1.msra.mxu0 0.0
    %1437 = vmatprep.subr.mxu0 0.0
    %1438 = vmatpush1.msra.mxu0 0.0
    %1439 = vmatprep.subr.mxu0 0.0
    %1440 = vmatpush1.msra.mxu0 0.0
    %1441 = vmatprep.subr.mxu0 0.0
    %1442 = vmatpush1.msra.mxu0 0.0
    %1443 = vmatprep.subr.mxu0 0.0
    %1444 = vmatpush1.msra.mxu0 0.0
    %1445 = vmatprep.subr.mxu0 0.0
    %1446 = vmatpush1.msra.mxu0 0.0
    %1447 = vmatprep.subr.mxu0 0.0
    %1448 = vmatpush1.msra.mxu0 0.0
    %1449 = vmatprep.subr.mxu0 0.0
    %1450 = vmatpush1.msra.mxu0 0.0
    %1451 = vmatprep.subr.mxu0 0.0
    %1452 = vmatpush1.msra.mxu0 0.0
    %1453 = vmatprep.subr.mxu0 0.0
    %1454 = vmatpush1.msra.mxu0 0.0
    %1455 = vmatprep.subr.mxu0 0.0
    %1456 = vmatpush1.msra.mxu0 0.0
    %1457 = vmatprep.subr.mxu0 0.0
    %1458 = vmatpush1.msra.mxu0 0.0
    %1459 = vmatprep.subr.mxu0 0.0
    %1460 = vmatpush1.msra.mxu0 0.0
    %1461 = vmatprep.subr.mxu0 0.0
    %1462 = vmatpush1.msra.mxu0 0.0
    %1463 = vmatprep.subr.mxu0 0.0
    %1464 = vmatpush1.msra.mxu0 0.0
    %1465 = vmatprep.subr.mxu0 0.0
    %1466 = vmatpush1.msra.mxu0 0.0
    %1467 = vmatprep.mubr.f32.mxu0 0.0
    %1468 = vmatmul.mubr.f32.gmra.mrb[0].mxu0 %v1188
    %v1469 = vpop.f32.mrb[0].mxu0
    %v1470 = vadd.f32 0.0, %v1469
    %v1471 = vpop.f32.mrb[0].mxu0
    %v1472 = vadd.f32 0.0, %v1471
    %1473 = vdwg.mxu0
    %1474 = vmatprep.subr.mxu0 %v1148
    %1475 = vmatpush1.msra.mxu0 %v1147
    %1476 = vmatprep.subr.mxu0 %v1160
    %1477 = vmatpush1.msra.mxu0 %v1159
    %1478 = vmatprep.subr.mxu0 %v1172
    %1479 = vmatpush1.msra.mxu0 %v1171
    %1480 = vmatprep.subr.mxu0 %v1184
    %1481 = vmatpush1.msra.mxu0 %v1183
    %1482 = vmatprep.subr.mxu0 0.0
    %1483 = vmatpush1.msra.mxu0 0.0
    %1484 = vmatprep.subr.mxu0 0.0
    %1485 = vmatpush1.msra.mxu0 0.0
    %1486 = vmatprep.subr.mxu0 0.0
    %1487 = vmatpush1.msra.mxu0 0.0
    %1488 = vmatprep.subr.mxu0 0.0
    %1489 = vmatpush1.msra.mxu0 0.0
    %1490 = vmatprep.subr.mxu0 0.0
    %1491 = vmatpush1.msra.mxu0 0.0
    %1492 = vmatprep.subr.mxu0 0.0
    %1493 = vmatpush1.msra.mxu0 0.0
    %1494 = vmatprep.subr.mxu0 0.0
    %1495 = vmatpush1.msra.mxu0 0.0
    %1496 = vmatprep.subr.mxu0 0.0
    %1497 = vmatpush1.msra.mxu0 0.0
    %1498 = vmatprep.subr.mxu0 0.0
    %1499 = vmatpush1.msra.mxu0 0.0
    %1500 = vmatprep.subr.mxu0 0.0
    %1501 = vmatpush1.msra.mxu0 0.0
    %1502 = vmatprep.subr.mxu0 0.0
    %1503 = vmatpush1.msra.mxu0 0.0
    %1504 = vmatprep.subr.mxu0 0.0
    %1505 = vmatpush1.msra.mxu0 0.0
    %1506 = vmatprep.subr.mxu0 0.0
    %1507 = vmatpush1.msra.mxu0 0.0
    %1508 = vmatprep.subr.mxu0 0.0
    %1509 = vmatpush1.msra.mxu0 0.0
    %1510 = vmatprep.subr.mxu0 0.0
    %1511 = vmatpush1.msra.mxu0 0.0
    %1512 = vmatprep.subr.mxu0 0.0
    %1513 = vmatpush1.msra.mxu0 0.0
    %1514 = vmatprep.subr.mxu0 0.0
    %1515 = vmatpush1.msra.mxu0 0.0
    %1516 = vmatprep.subr.mxu0 0.0
    %1517 = vmatpush1.msra.mxu0 0.0
    %1518 = vmatprep.subr.mxu0 0.0
    %1519 = vmatpush1.msra.mxu0 0.0
    %1520 = vmatprep.subr.mxu0 0.0
    %1521 = vmatpush1.msra.mxu0 0.0
    %1522 = vmatprep.subr.mxu0 0.0
    %1523 = vmatpush1.msra.mxu0 0.0
    %1524 = vmatprep.subr.mxu0 0.0
    %1525 = vmatpush1.msra.mxu0 0.0
    %1526 = vmatprep.subr.mxu0 0.0
    %1527 = vmatpush1.msra.mxu0 0.0
    %1528 = vmatprep.subr.mxu0 0.0
    %1529 = vmatpush1.msra.mxu0 0.0
    %1530 = vmatprep.subr.mxu0 0.0
    %1531 = vmatpush1.msra.mxu0 0.0
    %1532 = vmatprep.subr.mxu0 0.0
    %1533 = vmatpush1.msra.mxu0 0.0
    %1534 = vmatprep.subr.mxu0 0.0
    %1535 = vmatpush1.msra.mxu0 0.0
    %1536 = vmatprep.subr.mxu0 0.0
    %1537 = vmatpush1.msra.mxu0 0.0
    %1538 = vmatprep.mubr.f32.mxu0 0.0
    %1539 = vmatmul.mubr.f32.gmra.mrb[0].mxu0 %v1188
    %v1540 = vpop.f32.mrb[0].mxu0
    %v1541 = vadd.f32 0.0, %v1540
    %v1542 = vpop.f32.mrb[0].mxu0
    %v1543 = vadd.f32 0.0, %v1542
    %1544 = vdwg.mxu0
    %1545 = vmatprep.subr.mxu0 %v1150
    %1546 = vmatpush1.msra.mxu0 %v1149
    %1547 = vmatprep.subr.mxu0 %v1162
    %1548 = vmatpush1.msra.mxu0 %v1161
    %1549 = vmatprep.subr.mxu0 %v1174
    %1550 = vmatpush1.msra.mxu0 %v1173
    %1551 = vmatprep.subr.mxu0 %v1186
    %1552 = vmatpush1.msra.mxu0 %v1185
    %1553 = vmatprep.subr.mxu0 0.0
    %1554 = vmatpush1.msra.mxu0 0.0
    %1555 = vmatprep.subr.mxu0 0.0
    %1556 = vmatpush1.msra.mxu0 0.0
    %1557 = vmatprep.subr.mxu0 0.0
    %1558 = vmatpush1.msra.mxu0 0.0
    %1559 = vmatprep.subr.mxu0 0.0
    %1560 = vmatpush1.msra.mxu0 0.0
    %1561 = vmatprep.subr.mxu0 0.0
    %1562 = vmatpush1.msra.mxu0 0.0
    %1563 = vmatprep.subr.mxu0 0.0
    %1564 = vmatpush1.msra.mxu0 0.0
    %1565 = vmatprep.subr.mxu0 0.0
    %1566 = vmatpush1.msra.mxu0 0.0
    %1567 = vmatprep.subr.mxu0 0.0
    %1568 = vmatpush1.msra.mxu0 0.0
    %1569 = vmatprep.subr.mxu0 0.0
    %1570 = vmatpush1.msra.mxu0 0.0
    %1571 = vmatprep.subr.mxu0 0.0
    %1572 = vmatpush1.msra.mxu0 0.0
    %1573 = vmatprep.subr.mxu0 0.0
    %1574 = vmatpush1.msra.mxu0 0.0
    %1575 = vmatprep.subr.mxu0 0.0
    %1576 = vmatpush1.msra.mxu0 0.0
    %1577 = vmatprep.subr.mxu0 0.0
    %1578 = vmatpush1.msra.mxu0 0.0
    %1579 = vmatprep.subr.mxu0 0.0
    %1580 = vmatpush1.msra.mxu0 0.0
    %1581 = vmatprep.subr.mxu0 0.0
    %1582 = vmatpush1.msra.mxu0 0.0
    %1583 = vmatprep.subr.mxu0 0.0
    %1584 = vmatpush1.msra.mxu0 0.0
    %1585 = vmatprep.subr.mxu0 0.0
    %1586 = vmatpush1.msra.mxu0 0.0
    %1587 = vmatprep.subr.mxu0 0.0
    %1588 = vmatpush1.msra.mxu0 0.0
    %1589 = vmatprep.subr.mxu0 0.0
    %1590 = vmatpush1.msra.mxu0 0.0
    %1591 = vmatprep.subr.mxu0 0.0
    %1592 = vmatpush1.msra.mxu0 0.0
    %1593 = vmatprep.subr.mxu0 0.0
    %1594 = vmatpush1.msra.mxu0 0.0
    %1595 = vmatprep.subr.mxu0 0.0
    %1596 = vmatpush1.msra.mxu0 0.0
    %1597 = vmatprep.subr.mxu0 0.0
    %1598 = vmatpush1.msra.mxu0 0.0
    %1599 = vmatprep.subr.mxu0 0.0
    %1600 = vmatpush1.msra.mxu0 0.0
    %1601 = vmatprep.subr.mxu0 0.0
    %1602 = vmatpush1.msra.mxu0 0.0
    %1603 = vmatprep.subr.mxu0 0.0
    %1604 = vmatpush1.msra.mxu0 0.0
    %1605 = vmatprep.subr.mxu0 0.0
    %1606 = vmatpush1.msra.mxu0 0.0
    %1607 = vmatprep.subr.mxu0 0.0
    %1608 = vmatpush1.msra.mxu0 0.0
    %1609 = vmatprep.mubr.f32.mxu0 0.0
    %1610 = vmatmul.mubr.f32.gmra.mrb[0].mxu0 %v1188
    %v1611 = vpop.f32.mrb[0].mxu0
    %v1612 = vadd.f32 0.0, %v1611
    %v1613 = vpop.f32.mrb[0].mxu0
    %v1614 = vadd.f32 0.0, %v1613
    %1615 = vdwg.mxu0
    %v1616 = vmul.u32 %v935, 32
    %v1617 = vmul.u32 %v936, 32
    %v1618 = vmul.u32 %v937, 32
    %v1619 = vmul.u32 %v938, 32
    %vm1620 = vcmp.ge.s32.totalorder %v248, %v1616
    %vm1621 = vcmp.ge.s32.totalorder %v923, %v1616
    %vm1622 = vcmp.ge.s32.totalorder %v924, %v1616
    %vm1623 = vcmp.ge.s32.totalorder %v925, %v1616
    %vm1624 = vcmp.ge.s32.totalorder %v926, %v1616
    %vm1625 = vcmp.ge.s32.totalorder %v927, %v1616
    %vm1626 = vcmp.ge.s32.totalorder %v928, %v1616
    %vm1627 = vcmp.ge.s32.totalorder %v929, %v1616
    %vm1628 = vcmp.ge.s32.totalorder %v248, %v1617
    %vm1629 = vcmp.ge.s32.totalorder %v923, %v1617
    %vm1630 = vcmp.ge.s32.totalorder %v924, %v1617
    %vm1631 = vcmp.ge.s32.totalorder %v925, %v1617
    %vm1632 = vcmp.ge.s32.totalorder %v926, %v1617
    %vm1633 = vcmp.ge.s32.totalorder %v927, %v1617
    %vm1634 = vcmp.ge.s32.totalorder %v928, %v1617
    %vm1635 = vcmp.ge.s32.totalorder %v929, %v1617
    %vm1636 = vcmp.ge.s32.totalorder %v248, %v1618
    %vm1637 = vcmp.ge.s32.totalorder %v923, %v1618
    %vm1638 = vcmp.ge.s32.totalorder %v924, %v1618
    %vm1639 = vcmp.ge.s32.totalorder %v925, %v1618
    %vm1640 = vcmp.ge.s32.totalorder %v926, %v1618
    %vm1641 = vcmp.ge.s32.totalorder %v927, %v1618
    %vm1642 = vcmp.ge.s32.totalorder %v928, %v1618
    %vm1643 = vcmp.ge.s32.totalorder %v929, %v1618
    %vm1644 = vcmp.ge.s32.totalorder %v248, %v1619
    %vm1645 = vcmp.ge.s32.totalorder %v923, %v1619
    %vm1646 = vcmp.ge.s32.totalorder %v924, %v1619
    %vm1647 = vcmp.ge.s32.totalorder %v925, %v1619
    %vm1648 = vcmp.ge.s32.totalorder %v926, %v1619
    %vm1649 = vcmp.ge.s32.totalorder %v927, %v1619
    %vm1650 = vcmp.ge.s32.totalorder %v928, %v1619
    %vm1651 = vcmp.ge.s32.totalorder %v929, %v1619
    %v1652 = vadd.s32 %v1616, 32
    %v1653 = vadd.s32 %v1617, 32
    %v1654 = vadd.s32 %v1618, 32
    %v1655 = vadd.s32 %v1619, 32
    %vm1656 = vcmp.lt.s32.totalorder %v248, %v1652
    %vm1657 = vcmp.lt.s32.totalorder %v923, %v1652
    %vm1658 = vcmp.lt.s32.totalorder %v924, %v1652
    %vm1659 = vcmp.lt.s32.totalorder %v925, %v1652
    %vm1660 = vcmp.lt.s32.totalorder %v926, %v1652
    %vm1661 = vcmp.lt.s32.totalorder %v927, %v1652
    %vm1662 = vcmp.lt.s32.totalorder %v928, %v1652
    %vm1663 = vcmp.lt.s32.totalorder %v929, %v1652
    %vm1664 = vcmp.lt.s32.totalorder %v248, %v1653
    %vm1665 = vcmp.lt.s32.totalorder %v923, %v1653
    %vm1666 = vcmp.lt.s32.totalorder %v924, %v1653
    %vm1667 = vcmp.lt.s32.totalorder %v925, %v1653
    %vm1668 = vcmp.lt.s32.totalorder %v926, %v1653
    %vm1669 = vcmp.lt.s32.totalorder %v927, %v1653
    %vm1670 = vcmp.lt.s32.totalorder %v928, %v1653
    %vm1671 = vcmp.lt.s32.totalorder %v929, %v1653
    %vm1672 = vcmp.lt.s32.totalorder %v248, %v1654
    %vm1673 = vcmp.lt.s32.totalorder %v923, %v1654
    %vm1674 = vcmp.lt.s32.totalorder %v924, %v1654
    %vm1675 = vcmp.lt.s32.totalorder %v925, %v1654
    %vm1676 = vcmp.lt.s32.totalorder %v926, %v1654
    %vm1677 = vcmp.lt.s32.totalorder %v927, %v1654
    %vm1678 = vcmp.lt.s32.totalorder %v928, %v1654
    %vm1679 = vcmp.lt.s32.totalorder %v929, %v1654
    %vm1680 = vcmp.lt.s32.totalorder %v248, %v1655
    %vm1681 = vcmp.lt.s32.totalorder %v923, %v1655
    %vm1682 = vcmp.lt.s32.totalorder %v924, %v1655
    %vm1683 = vcmp.lt.s32.totalorder %v925, %v1655
    %vm1684 = vcmp.lt.s32.totalorder %v926, %v1655
    %vm1685 = vcmp.lt.s32.totalorder %v927, %v1655
    %vm1686 = vcmp.lt.s32.totalorder %v928, %v1655
    %vm1687 = vcmp.lt.s32.totalorder %v929, %v1655
    %vm1688 = vmand %vm1620, %vm1656
    %vm1689 = vmand %vm1621, %vm1657
    %vm1690 = vmand %vm1622, %vm1658
    %vm1691 = vmand %vm1623, %vm1659
    %vm1692 = vmand %vm1624, %vm1660
    %vm1693 = vmand %vm1625, %vm1661
    %vm1694 = vmand %vm1626, %vm1662
    %vm1695 = vmand %vm1627, %vm1663
    %vm1696 = vmand %vm1628, %vm1664
    %vm1697 = vmand %vm1629, %vm1665
    %vm1698 = vmand %vm1630, %vm1666
    %vm1699 = vmand %vm1631, %vm1667
    %vm1700 = vmand %vm1632, %vm1668
    %vm1701 = vmand %vm1633, %vm1669
    %vm1702 = vmand %vm1634, %vm1670
    %vm1703 = vmand %vm1635, %vm1671
    %vm1704 = vmand %vm1636, %vm1672
    %vm1705 = vmand %vm1637, %vm1673
    %vm1706 = vmand %vm1638, %vm1674
    %vm1707 = vmand %vm1639, %vm1675
    %vm1708 = vmand %vm1640, %vm1676
    %vm1709 = vmand %vm1641, %vm1677
    %vm1710 = vmand %vm1642, %vm1678
    %vm1711 = vmand %vm1643, %vm1679
    %vm1712 = vmand %vm1644, %vm1680
    %vm1713 = vmand %vm1645, %vm1681
    %vm1714 = vmand %vm1646, %vm1682
    %vm1715 = vmand %vm1647, %vm1683
    %vm1716 = vmand %vm1648, %vm1684
    %vm1717 = vmand %vm1649, %vm1685
    %vm1718 = vmand %vm1650, %vm1686
    %vm1719 = vmand %vm1651, %vm1687
    %v1720 = vsel %vm1688, 1, 0
    %v1721 = vsel %vm1689, 1, 0
    %v1722 = vsel %vm1690, 1, 0
    %v1723 = vsel %vm1691, 1, 0
    %v1724 = vsel %vm1692, 1, 0
    %v1725 = vsel %vm1693, 1, 0
    %v1726 = vsel %vm1694, 1, 0
    %v1727 = vsel %vm1695, 1, 0
    %v1728 = vsel %vm1696, 1, 0
    %v1729 = vsel %vm1697, 1, 0
    %v1730 = vsel %vm1698, 1, 0
    %v1731 = vsel %vm1699, 1, 0
    %v1732 = vsel %vm1700, 1, 0
    %v1733 = vsel %vm1701, 1, 0
    %v1734 = vsel %vm1702, 1, 0
    %v1735 = vsel %vm1703, 1, 0
    %v1736 = vsel %vm1704, 1, 0
    %v1737 = vsel %vm1705, 1, 0
    %v1738 = vsel %vm1706, 1, 0
    %v1739 = vsel %vm1707, 1, 0
    %v1740 = vsel %vm1708, 1, 0
    %v1741 = vsel %vm1709, 1, 0
    %v1742 = vsel %vm1710, 1, 0
    %v1743 = vsel %vm1711, 1, 0
    %v1744 = vsel %vm1712, 1, 0
    %v1745 = vsel %vm1713, 1, 0
    %v1746 = vsel %vm1714, 1, 0
    %v1747 = vsel %vm1715, 1, 0
    %v1748 = vsel %vm1716, 1, 0
    %v1749 = vsel %vm1717, 1, 0
    %v1750 = vsel %vm1718, 1, 0
    %v1751 = vsel %vm1719, 1, 0
    %v1752 = vcvt.s32.f32 %v1720
    %v1753 = vcvt.s32.f32 %v1721
    %v1754 = vcvt.s32.f32 %v1722
    %v1755 = vcvt.s32.f32 %v1723
    %v1756 = vcvt.s32.f32 %v1724
    %v1757 = vcvt.s32.f32 %v1725
    %v1758 = vcvt.s32.f32 %v1726
    %v1759 = vcvt.s32.f32 %v1727
    %v1760 = vcvt.s32.f32 %v1728
    %v1761 = vcvt.s32.f32 %v1729
    %v1762 = vcvt.s32.f32 %v1730
    %v1763 = vcvt.s32.f32 %v1731
    %v1764 = vcvt.s32.f32 %v1732
    %v1765 = vcvt.s32.f32 %v1733
    %v1766 = vcvt.s32.f32 %v1734
    %v1767 = vcvt.s32.f32 %v1735
    %v1768 = vcvt.s32.f32 %v1736
    %v1769 = vcvt.s32.f32 %v1737
    %v1770 = vcvt.s32.f32 %v1738
    %v1771 = vcvt.s32.f32 %v1739
    %v1772 = vcvt.s32.f32 %v1740
    %v1773 = vcvt.s32.f32 %v1741
    %v1774 = vcvt.s32.f32 %v1742
    %v1775 = vcvt.s32.f32 %v1743
    %v1776 = vcvt.s32.f32 %v1744
    %v1777 = vcvt.s32.f32 %v1745
    %v1778 = vcvt.s32.f32 %v1746
    %v1779 = vcvt.s32.f32 %v1747
    %v1780 = vcvt.s32.f32 %v1748
    %v1781 = vcvt.s32.f32 %v1749
    %v1782 = vcvt.s32.f32 %v1750
    %v1783 = vcvt.s32.f32 %v1751
    %1784 = vmatprep.subr.mxu0 %v1753
    %1785 = vmatpush1.msra.mxu0 %v1752
    %1786 = vmatprep.subr.mxu0 %v1761
    %1787 = vmatpush1.msra.mxu0 %v1760
    %1788 = vmatprep.subr.mxu0 %v1769
    %1789 = vmatpush1.msra.mxu0 %v1768
    %1790 = vmatprep.subr.mxu0 %v1777
    %1791 = vmatpush1.msra.mxu0 %v1776
    %1792 = vmatprep.subr.mxu0 0.0
    %1793 = vmatpush1.msra.mxu0 0.0
    %1794 = vmatprep.subr.mxu0 0.0
    %1795 = vmatpush1.msra.mxu0 0.0
    %1796 = vmatprep.subr.mxu0 0.0
    %1797 = vmatpush1.msra.mxu0 0.0
    %1798 = vmatprep.subr.mxu0 0.0
    %1799 = vmatpush1.msra.mxu0 0.0
    %1800 = vmatprep.subr.mxu0 0.0
    %1801 = vmatpush1.msra.mxu0 0.0
    %1802 = vmatprep.subr.mxu0 0.0
    %1803 = vmatpush1.msra.mxu0 0.0
    %1804 = vmatprep.subr.mxu0 0.0
    %1805 = vmatpush1.msra.mxu0 0.0
    %1806 = vmatprep.subr.mxu0 0.0
    %1807 = vmatpush1.msra.mxu0 0.0
    %1808 = vmatprep.subr.mxu0 0.0
    %1809 = vmatpush1.msra.mxu0 0.0
    %1810 = vmatprep.subr.mxu0 0.0
    %1811 = vmatpush1.msra.mxu0 0.0
    %1812 = vmatprep.subr.mxu0 0.0
    %1813 = vmatpush1.msra.mxu0 0.0
    %1814 = vmatprep.subr.mxu0 0.0
    %1815 = vmatpush1.msra.mxu0 0.0
    %1816 = vmatprep.subr.mxu0 0.0
    %1817 = vmatpush1.msra.mxu0 0.0
    %1818 = vmatprep.subr.mxu0 0.0
    %1819 = vmatpush1.msra.mxu0 0.0
    %1820 = vmatprep.subr.mxu0 0.0
    %1821 = vmatpush1.msra.mxu0 0.0
    %1822 = vmatprep.subr.mxu0 0.0
    %1823 = vmatpush1.msra.mxu0 0.0
    %1824 = vmatprep.subr.mxu0 0.0
    %1825 = vmatpush1.msra.mxu0 0.0
    %1826 = vmatprep.subr.mxu0 0.0
    %1827 = vmatpush1.msra.mxu0 0.0
    %1828 = vmatprep.subr.mxu0 0.0
    %1829 = vmatpush1.msra.mxu0 0.0
    %1830 = vmatprep.subr.mxu0 0.0
    %1831 = vmatpush1.msra.mxu0 0.0
    %1832 = vmatprep.subr.mxu0 0.0
    %1833 = vmatpush1.msra.mxu0 0.0
    %1834 = vmatprep.subr.mxu0 0.0
    %1835 = vmatpush1.msra.mxu0 0.0
    %1836 = vmatprep.subr.mxu0 0.0
    %1837 = vmatpush1.msra.mxu0 0.0
    %1838 = vmatprep.subr.mxu0 0.0
    %1839 = vmatpush1.msra.mxu0 0.0
    %1840 = vmatprep.subr.mxu0 0.0
    %1841 = vmatpush1.msra.mxu0 0.0
    %1842 = vmatprep.subr.mxu0 0.0
    %1843 = vmatpush1.msra.mxu0 0.0
    %1844 = vmatprep.subr.mxu0 0.0
    %1845 = vmatpush1.msra.mxu0 0.0
    %1846 = vmatprep.subr.mxu0 0.0
    %1847 = vmatpush1.msra.mxu0 0.0
    %1848 = vmatprep.mubr.f32.mxu0 0.0
    %1849 = vmatmul.mubr.f32.gmra.mrb[0].mxu0 %v1188
    %v1850 = vpop.f32.mrb[0].mxu0
    %v1851 = vadd.f32 0.0, %v1850
    %v1852 = vpop.f32.mrb[0].mxu0
    %v1853 = vadd.f32 0.0, %v1852
    %1854 = vdwg.mxu0
    %1855 = vmatprep.subr.mxu0 %v1755
    %1856 = vmatpush1.msra.mxu0 %v1754
    %1857 = vmatprep.subr.mxu0 %v1763
    %1858 = vmatpush1.msra.mxu0 %v1762
    %1859 = vmatprep.subr.mxu0 %v1771
    %1860 = vmatpush1.msra.mxu0 %v1770
    %1861 = vmatprep.subr.mxu0 %v1779
    %1862 = vmatpush1.msra.mxu0 %v1778
    %1863 = vmatprep.subr.mxu0 0.0
    %1864 = vmatpush1.msra.mxu0 0.0
    %1865 = vmatprep.subr.mxu0 0.0
    %1866 = vmatpush1.msra.mxu0 0.0
    %1867 = vmatprep.subr.mxu0 0.0
    %1868 = vmatpush1.msra.mxu0 0.0
    %1869 = vmatprep.subr.mxu0 0.0
    %1870 = vmatpush1.msra.mxu0 0.0
    %1871 = vmatprep.subr.mxu0 0.0
    %1872 = vmatpush1.msra.mxu0 0.0
    %1873 = vmatprep.subr.mxu0 0.0
    %1874 = vmatpush1.msra.mxu0 0.0
    %1875 = vmatprep.subr.mxu0 0.0
    %1876 = vmatpush1.msra.mxu0 0.0
    %1877 = vmatprep.subr.mxu0 0.0
    %1878 = vmatpush1.msra.mxu0 0.0
    %1879 = vmatprep.subr.mxu0 0.0
    %1880 = vmatpush1.msra.mxu0 0.0
    %1881 = vmatprep.subr.mxu0 0.0
    %1882 = vmatpush1.msra.mxu0 0.0
    %1883 = vmatprep.subr.mxu0 0.0
    %1884 = vmatpush1.msra.mxu0 0.0
    %1885 = vmatprep.subr.mxu0 0.0
    %1886 = vmatpush1.msra.mxu0 0.0
    %1887 = vmatprep.subr.mxu0 0.0
    %1888 = vmatpush1.msra.mxu0 0.0
    %1889 = vmatprep.subr.mxu0 0.0
    %1890 = vmatpush1.msra.mxu0 0.0
    %1891 = vmatprep.subr.mxu0 0.0
    %1892 = vmatpush1.msra.mxu0 0.0
    %1893 = vmatprep.subr.mxu0 0.0
    %1894 = vmatpush1.msra.mxu0 0.0
    %1895 = vmatprep.subr.mxu0 0.0
    %1896 = vmatpush1.msra.mxu0 0.0
    %1897 = vmatprep.subr.mxu0 0.0
    %1898 = vmatpush1.msra.mxu0 0.0
    %1899 = vmatprep.subr.mxu0 0.0
    %1900 = vmatpush1.msra.mxu0 0.0
    %1901 = vmatprep.subr.mxu0 0.0
    %1902 = vmatpush1.msra.mxu0 0.0
    %1903 = vmatprep.subr.mxu0 0.0
    %1904 = vmatpush1.msra.mxu0 0.0
    %1905 = vmatprep.subr.mxu0 0.0
    %1906 = vmatpush1.msra.mxu0 0.0
    %1907 = vmatprep.subr.mxu0 0.0
    %1908 = vmatpush1.msra.mxu0 0.0
    %1909 = vmatprep.subr.mxu0 0.0
    %1910 = vmatpush1.msra.mxu0 0.0
    %1911 = vmatprep.subr.mxu0 0.0
    %1912 = vmatpush1.msra.mxu0 0.0
    %1913 = vmatprep.subr.mxu0 0.0
    %1914 = vmatpush1.msra.mxu0 0.0
    %1915 = vmatprep.subr.mxu0 0.0
    %1916 = vmatpush1.msra.mxu0 0.0
    %1917 = vmatprep.subr.mxu0 0.0
    %1918 = vmatpush1.msra.mxu0 0.0
    %1919 = vmatprep.mubr.f32.mxu0 0.0
    %1920 = vmatmul.mubr.f32.gmra.mrb[0].mxu0 %v1188
    %v1921 = vpop.f32.mrb[0].mxu0
    %v1922 = vadd.f32 0.0, %v1921
    %v1923 = vpop.f32.mrb[0].mxu0
    %v1924 = vadd.f32 0.0, %v1923
    %1925 = vdwg.mxu0
    %1926 = vmatprep.subr.mxu0 %v1757
    %1927 = vmatpush1.msra.mxu0 %v1756
    %1928 = vmatprep.subr.mxu0 %v1765
    %1929 = vmatpush1.msra.mxu0 %v1764
    %1930 = vmatprep.subr.mxu0 %v1773
    %1931 = vmatpush1.msra.mxu0 %v1772
    %1932 = vmatprep.subr.mxu0 %v1781
    %1933 = vmatpush1.msra.mxu0 %v1780
    %1934 = vmatprep.subr.mxu0 0.0
    %1935 = vmatpush1.msra.mxu0 0.0
    %1936 = vmatprep.subr.mxu0 0.0
    %1937 = vmatpush1.msra.mxu0 0.0
    %1938 = vmatprep.subr.mxu0 0.0
    %1939 = vmatpush1.msra.mxu0 0.0
    %1940 = vmatprep.subr.mxu0 0.0
    %1941 = vmatpush1.msra.mxu0 0.0
    %1942 = vmatprep.subr.mxu0 0.0
    %1943 = vmatpush1.msra.mxu0 0.0
    %1944 = vmatprep.subr.mxu0 0.0
    %1945 = vmatpush1.msra.mxu0 0.0
    %1946 = vmatprep.subr.mxu0 0.0
    %1947 = vmatpush1.msra.mxu0 0.0
    %1948 = vmatprep.subr.mxu0 0.0
    %1949 = vmatpush1.msra.mxu0 0.0
    %1950 = vmatprep.subr.mxu0 0.0
    %1951 = vmatpush1.msra.mxu0 0.0
    %1952 = vmatprep.subr.mxu0 0.0
    %1953 = vmatpush1.msra.mxu0 0.0
    %1954 = vmatprep.subr.mxu0 0.0
    %1955 = vmatpush1.msra.mxu0 0.0
    %1956 = vmatprep.subr.mxu0 0.0
    %1957 = vmatpush1.msra.mxu0 0.0
    %1958 = vmatprep.subr.mxu0 0.0
    %1959 = vmatpush1.msra.mxu0 0.0
    %1960 = vmatprep.subr.mxu0 0.0
    %1961 = vmatpush1.msra.mxu0 0.0
    %1962 = vmatprep.subr.mxu0 0.0
    %1963 = vmatpush1.msra.mxu0 0.0
    %1964 = vmatprep.subr.mxu0 0.0
    %1965 = vmatpush1.msra.mxu0 0.0
    %1966 = vmatprep.subr.mxu0 0.0
    %1967 = vmatpush1.msra.mxu0 0.0
    %1968 = vmatprep.subr.mxu0 0.0
    %1969 = vmatpush1.msra.mxu0 0.0
    %1970 = vmatprep.subr.mxu0 0.0
    %1971 = vmatpush1.msra.mxu0 0.0
    %1972 = vmatprep.subr.mxu0 0.0
    %1973 = vmatpush1.msra.mxu0 0.0
    %1974 = vmatprep.subr.mxu0 0.0
    %1975 = vmatpush1.msra.mxu0 0.0
    %1976 = vmatprep.subr.mxu0 0.0
    %1977 = vmatpush1.msra.mxu0 0.0
    %1978 = vmatprep.subr.mxu0 0.0
    %1979 = vmatpush1.msra.mxu0 0.0
    %1980 = vmatprep.subr.mxu0 0.0
    %1981 = vmatpush1.msra.mxu0 0.0
    %1982 = vmatprep.subr.mxu0 0.0
    %1983 = vmatpush1.msra.mxu0 0.0
    %1984 = vmatprep.subr.mxu0 0.0
    %1985 = vmatpush1.msra.mxu0 0.0
    %1986 = vmatprep.subr.mxu0 0.0
    %1987 = vmatpush1.msra.mxu0 0.0
    %1988 = vmatprep.subr.mxu0 0.0
    %1989 = vmatpush1.msra.mxu0 0.0
    %1990 = vmatprep.mubr.f32.mxu0 0.0
    %1991 = vmatmul.mubr.f32.gmra.mrb[0].mxu0 %v1188
    %v1992 = vpop.f32.mrb[0].mxu0
    %v1993 = vadd.f32 0.0, %v1992
    %v1994 = vpop.f32.mrb[0].mxu0
    %v1995 = vadd.f32 0.0, %v1994
    %1996 = vdwg.mxu0
    %1997 = vmatprep.subr.mxu0 %v1759
    %1998 = vmatpush1.msra.mxu0 %v1758
    %1999 = vmatprep.subr.mxu0 %v1767
    %2000 = vmatpush1.msra.mxu0 %v1766
    %2001 = vmatprep.subr.mxu0 %v1775
    %2002 = vmatpush1.msra.mxu0 %v1774
    %2003 = vmatprep.subr.mxu0 %v1783
    %2004 = vmatpush1.msra.mxu0 %v1782
    %2005 = vmatprep.subr.mxu0 0.0
    %2006 = vmatpush1.msra.mxu0 0.0
    %2007 = vmatprep.subr.mxu0 0.0
    %2008 = vmatpush1.msra.mxu0 0.0
    %2009 = vmatprep.subr.mxu0 0.0
    %2010 = vmatpush1.msra.mxu0 0.0
    %2011 = vmatprep.subr.mxu0 0.0
    %2012 = vmatpush1.msra.mxu0 0.0
    %2013 = vmatprep.subr.mxu0 0.0
    %2014 = vmatpush1.msra.mxu0 0.0
    %2015 = vmatprep.subr.mxu0 0.0
    %2016 = vmatpush1.msra.mxu0 0.0
    %2017 = vmatprep.subr.mxu0 0.0
    %2018 = vmatpush1.msra.mxu0 0.0
    %2019 = vmatprep.subr.mxu0 0.0
    %2020 = vmatpush1.msra.mxu0 0.0
    %2021 = vmatprep.subr.mxu0 0.0
    %2022 = vmatpush1.msra.mxu0 0.0
    %2023 = vmatprep.subr.mxu0 0.0
    %2024 = vmatpush1.msra.mxu0 0.0
    %2025 = vmatprep.subr.mxu0 0.0
    %2026 = vmatpush1.msra.mxu0 0.0
    %2027 = vmatprep.subr.mxu0 0.0
    %2028 = vmatpush1.msra.mxu0 0.0
    %2029 = vmatprep.subr.mxu0 0.0
    %2030 = vmatpush1.msra.mxu0 0.0
    %2031 = vmatprep.subr.mxu0 0.0
    %2032 = vmatpush1.msra.mxu0 0.0
    %2033 = vmatprep.subr.mxu0 0.0
    %2034 = vmatpush1.msra.mxu0 0.0
    %2035 = vmatprep.subr.mxu0 0.0
    %2036 = vmatpush1.msra.mxu0 0.0
    %2037 = vmatprep.subr.mxu0 0.0
    %2038 = vmatpush1.msra.mxu0 0.0
    %2039 = vmatprep.subr.mxu0 0.0
    %2040 = vmatpush1.msra.mxu0 0.0
    %2041 = vmatprep.subr.mxu0 0.0
    %2042 = vmatpush1.msra.mxu0 0.0
    %2043 = vmatprep.subr.mxu0 0.0
    %2044 = vmatpush1.msra.mxu0 0.0
    %2045 = vmatprep.subr.mxu0 0.0
    %2046 = vmatpush1.msra.mxu0 0.0
    %2047 = vmatprep.subr.mxu0 0.0
    %2048 = vmatpush1.msra.mxu0 0.0
    %2049 = vmatprep.subr.mxu0 0.0
    %2050 = vmatpush1.msra.mxu0 0.0
    %2051 = vmatprep.subr.mxu0 0.0
    %2052 = vmatpush1.msra.mxu0 0.0
    %2053 = vmatprep.subr.mxu0 0.0
    %2054 = vmatpush1.msra.mxu0 0.0
    %2055 = vmatprep.subr.mxu0 0.0
    %2056 = vmatpush1.msra.mxu0 0.0
    %2057 = vmatprep.subr.mxu0 0.0
    %2058 = vmatpush1.msra.mxu0 0.0
    %2059 = vmatprep.subr.mxu0 0.0
    %2060 = vmatpush1.msra.mxu0 0.0
    %2061 = vmatprep.mubr.f32.mxu0 0.0
    %2062 = vmatmul.mubr.f32.gmra.mrb[0].mxu0 %v1188
    %v2063 = vpop.f32.mrb[0].mxu0
    %v2064 = vadd.f32 0.0, %v2063
    %v2065 = vpop.f32.mrb[0].mxu0
    %v2066 = vadd.f32 0.0, %v2065
    %2067 = vdwg.mxu0
    %2069 = vrot.lane.b32.xlu0 %v922, 48
    %v2070 = vpop.permute.xlu0 %2069
    %2072 = vrot.lane.b32.xlu0 %v922, 96
    %v2073 = vpop.permute.xlu0 %2072
    %2075 = vrot.lane.b32.xlu0 %v922, 16
    %v2076 = vpop.permute.xlu0 %2075
    %2078 = vrot.lane.b32.xlu0 %v922, 64
    %v2079 = vpop.permute.xlu0 %2078
    %2081 = vrot.lane.b32.xlu0 %v922, 112
    %v2082 = vpop.permute.xlu0 %2081
    %2084 = vrot.lane.b32.xlu0 %v922, 32
    %v2085 = vpop.permute.xlu0 %2084
    %2087 = vrot.lane.b32.xlu0 %v922, 80
    %v2088 = vpop.permute.xlu0 %2087
    %vm2090 = vcmask 392192
    %v2091 = vsel %vm2090, %v922, %v2070
    %vm2092 = vcmask 785408
    %v2093 = vsel %vm2092, %v2091, %v2073
    %v2094 = vsel %vm71, %v2073, %v2076
    %vm2095 = vcmask 523264
    %v2096 = vsel %vm2095, %v2094, %v2079
    %vm2097 = vcmask 916480
    %v2098 = vsel %vm2097, %v2096, %v2082
    %v2099 = vsel %vm169, %v2082, %v2085
    %vm2100 = vcmask 654336
    %v2101 = vsel %vm2100, %v2099, %v2088
    %v2102 = vmul.f32 %v1257, %v2093
    %v2103 = vmul.f32 %v1259, %v2098
    %v2104 = vmul.f32 %v1328, %v2101
    %v2105 = vmul.f32 %v1330, %v2093
    %v2106 = vmul.f32 %v1399, %v2098
    %v2107 = vmul.f32 %v1401, %v2101
    %v2108 = vmul.f32 %v1470, %v2093
    %v2109 = vmul.f32 %v1472, %v2098
    %v2110 = vmul.f32 %v1541, %v2101
    %v2111 = vmul.f32 %v1543, %v2093
    %v2112 = vmul.f32 %v1612, %v2098
    %v2113 = vmul.f32 %v1614, %v2101
    %2114 = vrot.lane.b32.xlu0 %v240, 48
    %v2115 = vpop.permute.xlu0 %2114
    %v2117 = vsel %vm2090, %v922, %v2115
    %v2118 = vld [vmem:[%s9] sm:$0xff]
    %v2119 = vld [vmem:[%s9 + $0x8] sm:$0xff]
    %v2120 = vld [vmem:[%s9 + $0x10] sm:$0xff]
    %v2121 = vld [vmem:[%s9 + $0x18] sm:$0xff]
    %v2122 = vld [vmem:[%s9 + $0x20] sm:$0xff]
    %v2123 = vld [vmem:[%s9 + $0x28] sm:$0xff]
    %v2124 = vld [vmem:[%s9 + $0x30] sm:$0xff]
    %v2125 = vld [vmem:[%s9 + $0x38] sm:$0xff]
    %v2126 = vld [vmem:[%s9 + $0x40] sm:$0xff]
    %v2127 = vld [vmem:[%s9 + $0x48] sm:$0xff]
    %v2128 = vld [vmem:[%s9 + $0x50] sm:$0xff]
    %v2129 = vld [vmem:[%s9 + $0x58] sm:$0xff]
    %v2130 = vld [vmem:[%s9 + $0x60] sm:$0xff]
    %v2131 = vld [vmem:[%s9 + $0x68] sm:$0xff]
    %v2132 = vld [vmem:[%s9 + $0x70] sm:$0xff]
    %v2133 = vld [vmem:[%s9 + $0x78] sm:$0xff]
    %v2134 = vld [vmem:[%s9 + $0x80] sm:$0xff]
    %v2135 = vld [vmem:[%s9 + $0x88] sm:$0xff]
    %v2136 = vld [vmem:[%s9 + $0x90] sm:$0xff]
    %v2137 = vld [vmem:[%s9 + $0x98] sm:$0xff]
    %v2138 = vld [vmem:[%s9 + $0xa0] sm:$0xff]
    %v2139 = vld [vmem:[%s9 + $0xa8] sm:$0xff]
    %v2140 = vld [vmem:[%s9 + $0xb0] sm:$0xff]
    %v2141 = vld [vmem:[%s9 + $0xb8] sm:$0xff]
    %v2142 = vld [vmem:[%s9 + $0xc0] sm:$0xff]
    %v2143 = vld [vmem:[%s9 + $0xc8] sm:$0xff]
    %v2144 = vld [vmem:[%s9 + $0xd0] sm:$0xff]
    %v2145 = vld [vmem:[%s9 + $0xd8] sm:$0xff]
    %v2146 = vld [vmem:[%s9 + $0xe0] sm:$0xff]
    %v2147 = vld [vmem:[%s9 + $0xe8] sm:$0xff]
    %v2148 = vld [vmem:[%s9 + $0xf0] sm:$0xff]
    %v2149 = vld [vmem:[%s9 + $0xf8] sm:$0xff]
    %v2150 = vld [vmem:[%s9 + $0x100] sm:$0xff]
    %v2151 = vld [vmem:[%s9 + $0x108] sm:$0xff]
    %v2152 = vld [vmem:[%s9 + $0x110] sm:$0xff]
    %v2153 = vld [vmem:[%s9 + $0x118] sm:$0xff]
    %v2154 = vld [vmem:[%s9 + $0x120] sm:$0xff]
    %v2155 = vld [vmem:[%s9 + $0x128] sm:$0xff]
    %v2156 = vld [vmem:[%s9 + $0x130] sm:$0xff]
    %v2157 = vld [vmem:[%s9 + $0x138] sm:$0xff]
    %v2158 = vld [vmem:[%s9 + $0x140] sm:$0xff]
    %v2159 = vld [vmem:[%s9 + $0x148] sm:$0xff]
    %v2160 = vld [vmem:[%s9 + $0x150] sm:$0xff]
    %v2161 = vld [vmem:[%s9 + $0x158] sm:$0xff]
    %v2162 = vld [vmem:[%s9 + $0x160] sm:$0xff]
    %v2163 = vld [vmem:[%s9 + $0x168] sm:$0xff]
    %v2164 = vld [vmem:[%s9 + $0x170] sm:$0xff]
    %v2165 = vld [vmem:[%s9 + $0x178] sm:$0xff]
    %v2166 = vld [vmem:[%s9 + $0x180] sm:$0xff]
    %v2167 = vld [vmem:[%s9 + $0x188] sm:$0xff]
    %v2168 = vld [vmem:[%s9 + $0x190] sm:$0xff]
    %v2169 = vld [vmem:[%s9 + $0x198] sm:$0xff]
    %v2170 = vld [vmem:[%s9 + $0x1a0] sm:$0xff]
    %v2171 = vld [vmem:[%s9 + $0x1a8] sm:$0xff]
    %v2172 = vld [vmem:[%s9 + $0x1b0] sm:$0xff]
    %v2173 = vld [vmem:[%s9 + $0x1b8] sm:$0xff]
    %v2174 = vld [vmem:[%s9 + $0x1c0] sm:$0xff]
    %v2175 = vld [vmem:[%s9 + $0x1c8] sm:$0xff]
    %v2176 = vld [vmem:[%s9 + $0x1d0] sm:$0xff]
    %v2177 = vld [vmem:[%s9 + $0x1d8] sm:$0xff]
    %v2178 = vld [vmem:[%s9 + $0x1e0] sm:$0xff]
    %v2179 = vld [vmem:[%s9 + $0x1e8] sm:$0xff]
    %v2180 = vld [vmem:[%s9 + $0x1f0] sm:$0xff]
    %v2181 = vld [vmem:[%s9 + $0x1f8] sm:$0xff]
    %v2182 = vld [vmem:[%s9 + $0x200] sm:$0xff]
    %v2183 = vld [vmem:[%s9 + $0x208] sm:$0xff]
    %v2184 = vld [vmem:[%s9 + $0x210] sm:$0xff]
    %v2185 = vld [vmem:[%s9 + $0x218] sm:$0xff]
    %v2186 = vld [vmem:[%s9 + $0x220] sm:$0xff]
    %v2187 = vld [vmem:[%s9 + $0x228] sm:$0xff]
    %v2188 = vld [vmem:[%s9 + $0x230] sm:$0xff]
    %v2189 = vld [vmem:[%s9 + $0x238] sm:$0xff]
    %v2190 = vld [vmem:[%s9 + $0x240] sm:$0xff]
    %v2191 = vld [vmem:[%s9 + $0x248] sm:$0xff]
    %v2192 = vld [vmem:[%s9 + $0x250] sm:$0xff]
    %v2193 = vld [vmem:[%s9 + $0x258] sm:$0xff]
    %v2194 = vld [vmem:[%s9 + $0x260] sm:$0xff]
    %v2195 = vld [vmem:[%s9 + $0x268] sm:$0xff]
    %v2196 = vld [vmem:[%s9 + $0x270] sm:$0xff]
    %v2197 = vld [vmem:[%s9 + $0x278] sm:$0xff]
    %v2198 = vld [vmem:[%s9 + $0x280] sm:$0xff]
    %v2199 = vld [vmem:[%s9 + $0x288] sm:$0xff]
    %v2200 = vld [vmem:[%s9 + $0x290] sm:$0xff]
    %v2201 = vld [vmem:[%s9 + $0x298] sm:$0xff]
    %v2202 = vld [vmem:[%s9 + $0x2a0] sm:$0xff]
    %v2203 = vld [vmem:[%s9 + $0x2a8] sm:$0xff]
    %v2204 = vld [vmem:[%s9 + $0x2b0] sm:$0xff]
    %v2205 = vld [vmem:[%s9 + $0x2b8] sm:$0xff]
    %v2206 = vld [vmem:[%s9 + $0x2c0] sm:$0xff]
    %v2207 = vld [vmem:[%s9 + $0x2c8] sm:$0xff]
    %v2208 = vld [vmem:[%s9 + $0x2d0] sm:$0xff]
    %v2209 = vld [vmem:[%s9 + $0x2d8] sm:$0xff]
    %v2210 = vld [vmem:[%s9 + $0x2e0] sm:$0xff]
    %v2211 = vld [vmem:[%s9 + $0x2e8] sm:$0xff]
    %v2212 = vld [vmem:[%s9 + $0x2f0] sm:$0xff]
    %v2213 = vld [vmem:[%s9 + $0x2f8] sm:$0xff]
    %v2214 = vld [vmem:[%s9 + $0x300] sm:$0xff]
    %v2215 = vld [vmem:[%s9 + $0x308] sm:$0xff]
    %v2216 = vld [vmem:[%s9 + $0x310] sm:$0xff]
    %v2217 = vld [vmem:[%s9 + $0x318] sm:$0xff]
    %v2218 = vld [vmem:[%s9 + $0x320] sm:$0xff]
    %v2219 = vld [vmem:[%s9 + $0x328] sm:$0xff]
    %v2220 = vld [vmem:[%s9 + $0x330] sm:$0xff]
    %v2221 = vld [vmem:[%s9 + $0x338] sm:$0xff]
    %v2222 = vld [vmem:[%s9 + $0x340] sm:$0xff]
    %v2223 = vld [vmem:[%s9 + $0x348] sm:$0xff]
    %v2224 = vld [vmem:[%s9 + $0x350] sm:$0xff]
    %v2225 = vld [vmem:[%s9 + $0x358] sm:$0xff]
    %v2226 = vld [vmem:[%s9 + $0x360] sm:$0xff]
    %v2227 = vld [vmem:[%s9 + $0x368] sm:$0xff]
    %v2228 = vld [vmem:[%s9 + $0x370] sm:$0xff]
    %v2229 = vld [vmem:[%s9 + $0x378] sm:$0xff]
    %v2230 = vld [vmem:[%s9 + $0x380] sm:$0xff]
    %v2231 = vld [vmem:[%s9 + $0x388] sm:$0xff]
    %v2232 = vld [vmem:[%s9 + $0x390] sm:$0xff]
    %v2233 = vld [vmem:[%s9 + $0x398] sm:$0xff]
    %v2234 = vld [vmem:[%s9 + $0x3a0] sm:$0xff]
    %v2235 = vld [vmem:[%s9 + $0x3a8] sm:$0xff]
    %v2236 = vld [vmem:[%s9 + $0x3b0] sm:$0xff]
    %v2237 = vld [vmem:[%s9 + $0x3b8] sm:$0xff]
    %v2238 = vld [vmem:[%s9 + $0x3c0] sm:$0xff]
    %v2239 = vld [vmem:[%s9 + $0x3c8] sm:$0xff]
    %v2240 = vld [vmem:[%s9 + $0x3d0] sm:$0xff]
    %v2241 = vld [vmem:[%s9 + $0x3d8] sm:$0xff]
    %v2242 = vld [vmem:[%s9 + $0x3e0] sm:$0xff]
    %v2243 = vld [vmem:[%s9 + $0x3e8] sm:$0xff]
    %v2244 = vld [vmem:[%s9 + $0x3f0] sm:$0xff]
    %v2245 = vld [vmem:[%s9 + $0x3f8] sm:$0xff]
    %v2246 = vld [vmem:[%s9 + $0x400] sm:$0xff]
    %v2247 = vld [vmem:[%s9 + $0x408] sm:$0xff]
    %v2248 = vld [vmem:[%s9 + $0x410] sm:$0xff]
    %v2249 = vld [vmem:[%s9 + $0x418] sm:$0xff]
    %v2250 = vld [vmem:[%s9 + $0x420] sm:$0xff]
    %v2251 = vld [vmem:[%s9 + $0x428] sm:$0xff]
    %v2252 = vld [vmem:[%s9 + $0x430] sm:$0xff]
    %v2253 = vld [vmem:[%s9 + $0x438] sm:$0xff]
    %v2254 = vld [vmem:[%s9 + $0x440] sm:$0xff]
    %v2255 = vld [vmem:[%s9 + $0x448] sm:$0xff]
    %v2256 = vld [vmem:[%s9 + $0x450] sm:$0xff]
    %v2257 = vld [vmem:[%s9 + $0x458] sm:$0xff]
    %v2258 = vld [vmem:[%s9 + $0x460] sm:$0xff]
    %v2259 = vld [vmem:[%s9 + $0x468] sm:$0xff]
    %v2260 = vld [vmem:[%s9 + $0x470] sm:$0xff]
    %v2261 = vld [vmem:[%s9 + $0x478] sm:$0xff]
    %v2262 = vld [vmem:[%s9 + $0x480] sm:$0xff]
    %v2263 = vld [vmem:[%s9 + $0x488] sm:$0xff]
    %v2264 = vld [vmem:[%s9 + $0x490] sm:$0xff]
    %v2265 = vld [vmem:[%s9 + $0x498] sm:$0xff]
    %v2266 = vld [vmem:[%s9 + $0x4a0] sm:$0xff]
    %v2267 = vld [vmem:[%s9 + $0x4a8] sm:$0xff]
    %v2268 = vld [vmem:[%s9 + $0x4b0] sm:$0xff]
    %v2269 = vld [vmem:[%s9 + $0x4b8] sm:$0xff]
    %v2270 = vld [vmem:[%s9 + $0x4c0] sm:$0xff]
    %v2271 = vld [vmem:[%s9 + $0x4c8] sm:$0xff]
    %v2272 = vld [vmem:[%s9 + $0x4d0] sm:$0xff]
    %v2273 = vld [vmem:[%s9 + $0x4d8] sm:$0xff]
    %v2274 = vld [vmem:[%s9 + $0x4e0] sm:$0xff]
    %v2275 = vld [vmem:[%s9 + $0x4e8] sm:$0xff]
    %v2276 = vld [vmem:[%s9 + $0x4f0] sm:$0xff]
    %v2277 = vld [vmem:[%s9 + $0x4f8] sm:$0xff]
    %v2278 = vld [vmem:[%s9 + $0x500] sm:$0xff]
    %v2279 = vld [vmem:[%s9 + $0x508] sm:$0xff]
    %v2280 = vld [vmem:[%s9 + $0x510] sm:$0xff]
    %v2281 = vld [vmem:[%s9 + $0x518] sm:$0xff]
    %v2282 = vld [vmem:[%s9 + $0x520] sm:$0xff]
    %v2283 = vld [vmem:[%s9 + $0x528] sm:$0xff]
    %v2284 = vld [vmem:[%s9 + $0x530] sm:$0xff]
    %v2285 = vld [vmem:[%s9 + $0x538] sm:$0xff]
    %v2286 = vld [vmem:[%s9 + $0x540] sm:$0xff]
    %v2287 = vld [vmem:[%s9 + $0x548] sm:$0xff]
    %v2288 = vld [vmem:[%s9 + $0x550] sm:$0xff]
    %v2289 = vld [vmem:[%s9 + $0x558] sm:$0xff]
    %v2290 = vld [vmem:[%s9 + $0x560] sm:$0xff]
    %v2291 = vld [vmem:[%s9 + $0x568] sm:$0xff]
    %v2292 = vld [vmem:[%s9 + $0x570] sm:$0xff]
    %v2293 = vld [vmem:[%s9 + $0x578] sm:$0xff]
    %v2294 = vld [vmem:[%s9 + $0x580] sm:$0xff]
    %v2295 = vld [vmem:[%s9 + $0x588] sm:$0xff]
    %v2296 = vld [vmem:[%s9 + $0x590] sm:$0xff]
    %v2297 = vld [vmem:[%s9 + $0x598] sm:$0xff]
    %v2298 = vld [vmem:[%s9 + $0x5a0] sm:$0xff]
    %v2299 = vld [vmem:[%s9 + $0x5a8] sm:$0xff]
    %v2300 = vld [vmem:[%s9 + $0x5b0] sm:$0xff]
    %v2301 = vld [vmem:[%s9 + $0x5b8] sm:$0xff]
    %v2302 = vld [vmem:[%s9 + $0x5c0] sm:$0xff]
    %v2303 = vld [vmem:[%s9 + $0x5c8] sm:$0xff]
    %v2304 = vld [vmem:[%s9 + $0x5d0] sm:$0xff]
    %v2305 = vld [vmem:[%s9 + $0x5d8] sm:$0xff]
    %v2306 = vld [vmem:[%s9 + $0x5e0] sm:$0xff]
    %v2307 = vld [vmem:[%s9 + $0x5e8] sm:$0xff]
    %v2308 = vld [vmem:[%s9 + $0x5f0] sm:$0xff]
    %v2309 = vld [vmem:[%s9 + $0x5f8] sm:$0xff]
    %v2310 = vld [vmem:[%s9 + $0x600] sm:$0xff]
    %v2311 = vld [vmem:[%s9 + $0x608] sm:$0xff]
    %v2312 = vld [vmem:[%s9 + $0x610] sm:$0xff]
    %v2313 = vld [vmem:[%s9 + $0x618] sm:$0xff]
    %v2314 = vld [vmem:[%s9 + $0x620] sm:$0xff]
    %v2315 = vld [vmem:[%s9 + $0x628] sm:$0xff]
    %v2316 = vld [vmem:[%s9 + $0x630] sm:$0xff]
    %v2317 = vld [vmem:[%s9 + $0x638] sm:$0xff]
    %v2318 = vld [vmem:[%s9 + $0x640] sm:$0xff]
    %v2319 = vld [vmem:[%s9 + $0x648] sm:$0xff]
    %v2320 = vld [vmem:[%s10] sm:$0x1]
    %v2322 = vlaneseq
    %v2323 = vshrl.u32 %v2322, 7
    %v2324 = vsub.s32 0, %v2323
    %v2325 = vrot.slane %v2320, %v2324
    %v2328 = vsel %vm2100, %v2117, 0
    %2330 = vmatprep.subr.mxu0 0.0
    %2331 = vmatpush1.msra.mxu0 %v2118
    %2332 = vmatprep.subr.mxu0 0.0
    %2333 = vmatpush1.msra.mxu0 %v2119
    %2334 = vmatprep.subr.mxu0 0.0
    %2335 = vmatpush1.msra.mxu0 %v2120
    %2336 = vmatprep.subr.mxu0 0.0
    %2337 = vmatpush1.msra.mxu0 %v2121
    %2338 = vmatprep.subr.mxu0 0.0
    %2339 = vmatpush1.msra.mxu0 %v2122
    %2340 = vmatprep.subr.mxu0 0.0
    %2341 = vmatpush1.msra.mxu0 %v2123
    %2342 = vmatprep.subr.mxu0 0.0
    %2343 = vmatpush1.msra.mxu0 %v2124
    %2344 = vmatprep.subr.mxu0 0.0
    %2345 = vmatpush1.msra.mxu0 %v2125
    %2346 = vmatprep.subr.mxu0 0.0
    %2347 = vmatpush1.msra.mxu0 %v2126
    %2348 = vmatprep.subr.mxu0 0.0
    %2349 = vmatpush1.msra.mxu0 %v2127
    %2350 = vmatprep.subr.mxu0 0.0
    %2351 = vmatpush1.msra.mxu0 %v2128
    %2352 = vmatprep.subr.mxu0 0.0
    %2353 = vmatpush1.msra.mxu0 %v2129
    %2354 = vmatprep.subr.mxu0 0.0
    %2355 = vmatpush1.msra.mxu0 %v2130
    %2356 = vmatprep.subr.mxu0 0.0
    %2357 = vmatpush1.msra.mxu0 %v2131
    %2358 = vmatprep.subr.mxu0 0.0
    %2359 = vmatpush1.msra.mxu0 %v2132
    %2360 = vmatprep.subr.mxu0 0.0
    %2361 = vmatpush1.msra.mxu0 %v2133
    %2362 = vmatprep.subr.mxu0 0.0
    %2363 = vmatpush1.msra.mxu0 %v2134
    %2364 = vmatprep.subr.mxu0 0.0
    %2365 = vmatpush1.msra.mxu0 %v2135
    %2366 = vmatprep.subr.mxu0 0.0
    %2367 = vmatpush1.msra.mxu0 %v2136
    %2368 = vmatprep.subr.mxu0 0.0
    %2369 = vmatpush1.msra.mxu0 %v2137
    %2370 = vmatprep.subr.mxu0 0.0
    %2371 = vmatpush1.msra.mxu0 %v2138
    %2372 = vmatprep.subr.mxu0 0.0
    %2373 = vmatpush1.msra.mxu0 %v2139
    %2374 = vmatprep.subr.mxu0 0.0
    %2375 = vmatpush1.msra.mxu0 %v2140
    %2376 = vmatprep.subr.mxu0 0.0
    %2377 = vmatpush1.msra.mxu0 %v2141
    %2378 = vmatprep.subr.mxu0 0.0
    %2379 = vmatpush1.msra.mxu0 %v2142
    %2380 = vmatprep.subr.mxu0 0.0
    %2381 = vmatpush1.msra.mxu0 %v2143
    %2382 = vmatprep.subr.mxu0 0.0
    %2383 = vmatpush1.msra.mxu0 %v2144
    %2384 = vmatprep.subr.mxu0 0.0
    %2385 = vmatpush1.msra.mxu0 %v2145
    %2386 = vmatprep.subr.mxu0 0.0
    %2387 = vmatpush1.msra.mxu0 %v2146
    %2388 = vmatprep.subr.mxu0 0.0
    %2389 = vmatpush1.msra.mxu0 %v2147
    %2390 = vmatprep.subr.mxu0 0.0
    %2391 = vmatpush1.msra.mxu0 %v2148
    %2392 = vmatprep.subr.mxu0 0.0
    %2393 = vmatpush1.msra.mxu0 %v2149
    %2394 = vmatprep.mubr.f32.mxu0 %v2103
    %2395 = vmatmul.mubr.f32.gmra.mrb[0].mxu0 %v2102
    %v2396 = vpop.f32.mrb[0].mxu0
    %v2397 = vadd.f32 %v2325, %v2396
    %v2398 = vpop.f32.mrb[0].mxu0
    %2399 = vdwg.mxu0
    %2400 = vmatprep.subr.mxu0 0.0
    %2401 = vmatpush1.msra.mxu0 %v2150
    %2402 = vmatprep.subr.mxu0 0.0
    %2403 = vmatpush1.msra.mxu0 %v2151
    %2404 = vmatprep.subr.mxu0 0.0
    %2405 = vmatpush1.msra.mxu0 %v2152
    %2406 = vmatprep.subr.mxu0 0.0
    %2407 = vmatpush1.msra.mxu0 %v2153
    %2408 = vmatprep.subr.mxu0 0.0
    %2409 = vmatpush1.msra.mxu0 %v2154
    %2410 = vmatprep.subr.mxu0 0.0
    %2411 = vmatpush1.msra.mxu0 %v2155
    %2412 = vmatprep.subr.mxu0 0.0
    %2413 = vmatpush1.msra.mxu0 %v2156
    %2414 = vmatprep.subr.mxu0 0.0
    %2415 = vmatpush1.msra.mxu0 %v2157
    %2416 = vmatprep.subr.mxu0 0.0
    %2417 = vmatpush1.msra.mxu0 %v2158
    %2418 = vmatprep.subr.mxu0 0.0
    %2419 = vmatpush1.msra.mxu0 %v2159
    %2420 = vmatprep.subr.mxu0 0.0
    %2421 = vmatpush1.msra.mxu0 %v2160
    %2422 = vmatprep.subr.mxu0 0.0
    %2423 = vmatpush1.msra.mxu0 %v2161
    %2424 = vmatprep.subr.mxu0 0.0
    %2425 = vmatpush1.msra.mxu0 %v2162
    %2426 = vmatprep.subr.mxu0 0.0
    %2427 = vmatpush1.msra.mxu0 %v2163
    %2428 = vmatprep.subr.mxu0 0.0
    %2429 = vmatpush1.msra.mxu0 %v2164
    %2430 = vmatprep.subr.mxu0 0.0
    %2431 = vmatpush1.msra.mxu0 %v2165
    %2432 = vmatprep.subr.mxu0 0.0
    %2433 = vmatpush1.msra.mxu0 %v2166
    %2434 = vmatprep.subr.mxu0 0.0
    %2435 = vmatpush1.msra.mxu0 %v2167
    %2436 = vmatprep.subr.mxu0 0.0
    %2437 = vmatpush1.msra.mxu0 %v2168
    %2438 = vmatprep.subr.mxu0 0.0
    %2439 = vmatpush1.msra.mxu0 %v2169
    %2440 = vmatprep.subr.mxu0 0.0
    %2441 = vmatpush1.msra.mxu0 %v2170
    %2442 = vmatprep.subr.mxu0 0.0
    %2443 = vmatpush1.msra.mxu0 %v2171
    %2444 = vmatprep.subr.mxu0 0.0
    %2445 = vmatpush1.msra.mxu0 %v2172
    %2446 = vmatprep.subr.mxu0 0.0
    %2447 = vmatpush1.msra.mxu0 %v2173
    %2448 = vmatprep.subr.mxu0 0.0
    %2449 = vmatpush1.msra.mxu0 %v2174
    %2450 = vmatprep.subr.mxu0 0.0
    %2451 = vmatpush1.msra.mxu0 %v2175
    %2452 = vmatprep.subr.mxu0 0.0
    %2453 = vmatpush1.msra.mxu0 %v2176
    %2454 = vmatprep.subr.mxu0 0.0
    %2455 = vmatpush1.msra.mxu0 %v2177
    %2456 = vmatprep.subr.mxu0 0.0
    %2457 = vmatpush1.msra.mxu0 %v2178
    %2458 = vmatprep.subr.mxu0 0.0
    %2459 = vmatpush1.msra.mxu0 %v2179
    %2460 = vmatprep.subr.mxu0 0.0
    %2461 = vmatpush1.msra.mxu0 %v2180
    %2462 = vmatprep.subr.mxu0 0.0
    %2463 = vmatpush1.msra.mxu0 %v2181
    %2464 = vmatprep.mubr.f32.mxu0 %v2105
    %2465 = vmatmul.mubr.f32.gmra.mrb[0].mxu0 %v2104
    %v2466 = vpop.f32.mrb[0].mxu0
    %v2467 = vadd.f32 %v2397, %v2466
    %v2468 = vpop.f32.mrb[0].mxu0
    %2469 = vdwg.mxu0
    %2470 = vmatprep.subr.mxu0 0.0
    %2471 = vmatpush1.msra.mxu0 %v2182
    %2472 = vmatprep.subr.mxu0 0.0
    %2473 = vmatpush1.msra.mxu0 %v2183
    %2474 = vmatprep.subr.mxu0 0.0
    %2475 = vmatpush1.msra.mxu0 %v2184
    %2476 = vmatprep.subr.mxu0 0.0
    %2477 = vmatpush1.msra.mxu0 %v2185
    %2478 = vmatprep.subr.mxu0 0.0
    %2479 = vmatpush1.msra.mxu0 %v2186
    %2480 = vmatprep.subr.mxu0 0.0
    %2481 = vmatpush1.msra.mxu0 %v2187
    %2482 = vmatprep.subr.mxu0 0.0
    %2483 = vmatpush1.msra.mxu0 %v2188
    %2484 = vmatprep.subr.mxu0 0.0
    %2485 = vmatpush1.msra.mxu0 %v2189
    %2486 = vmatprep.subr.mxu0 0.0
    %2487 = vmatpush1.msra.mxu0 %v2190
    %2488 = vmatprep.subr.mxu0 0.0
    %2489 = vmatpush1.msra.mxu0 %v2191
    %2490 = vmatprep.subr.mxu0 0.0
    %2491 = vmatpush1.msra.mxu0 %v2192
    %2492 = vmatprep.subr.mxu0 0.0
    %2493 = vmatpush1.msra.mxu0 %v2193
    %2494 = vmatprep.subr.mxu0 0.0
    %2495 = vmatpush1.msra.mxu0 %v2194
    %2496 = vmatprep.subr.mxu0 0.0
    %2497 = vmatpush1.msra.mxu0 %v2195
    %2498 = vmatprep.subr.mxu0 0.0
    %2499 = vmatpush1.msra.mxu0 %v2196
    %2500 = vmatprep.subr.mxu0 0.0
    %2501 = vmatpush1.msra.mxu0 %v2197
    %2502 = vmatprep.subr.mxu0 0.0
    %2503 = vmatpush1.msra.mxu0 %v2198
    %2504 = vmatprep.subr.mxu0 0.0
    %2505 = vmatpush1.msra.mxu0 %v2199
    %2506 = vmatprep.subr.mxu0 0.0
    %2507 = vmatpush1.msra.mxu0 %v2200
    %2508 = vmatprep.subr.mxu0 0.0
    %2509 = vmatpush1.msra.mxu0 %v2201
    %2510 = vmatprep.subr.mxu0 0.0
    %2511 = vmatpush1.msra.mxu0 %v2202
    %2512 = vmatprep.subr.mxu0 0.0
    %2513 = vmatpush1.msra.mxu0 %v2203
    %2514 = vmatprep.subr.mxu0 0.0
    %2515 = vmatpush1.msra.mxu0 %v2204
    %2516 = vmatprep.subr.mxu0 0.0
    %2517 = vmatpush1.msra.mxu0 %v2205
    %2518 = vmatprep.subr.mxu0 0.0
    %2519 = vmatpush1.msra.mxu0 %v2206
    %2520 = vmatprep.subr.mxu0 0.0
    %2521 = vmatpush1.msra.mxu0 %v2207
    %2522 = vmatprep.subr.mxu0 0.0
    %2523 = vmatpush1.msra.mxu0 %v2208
    %2524 = vmatprep.subr.mxu0 0.0
    %2525 = vmatpush1.msra.mxu0 %v2209
    %2526 = vmatprep.subr.mxu0 0.0
    %2527 = vmatpush1.msra.mxu0 %v2210
    %2528 = vmatprep.subr.mxu0 0.0
    %2529 = vmatpush1.msra.mxu0 %v2211
    %2530 = vmatprep.subr.mxu0 0.0
    %2531 = vmatpush1.msra.mxu0 %v2212
    %2532 = vmatprep.subr.mxu0 0.0
    %2533 = vmatpush1.msra.mxu0 %v2213
    %2534 = vmatprep.mubr.f32.mxu0 %v2107
    %2535 = vmatmul.mubr.f32.gmra.mrb[0].mxu0 %v2106
    %v2536 = vpop.f32.mrb[0].mxu0
    %v2537 = vadd.f32 %v2467, %v2536
    %v2538 = vpop.f32.mrb[0].mxu0
    %2539 = vdwg.mxu0
    %2540 = vmatprep.subr.mxu0 0.0
    %2541 = vmatpush1.msra.mxu0 %v2214
    %2542 = vmatprep.subr.mxu0 0.0
    %2543 = vmatpush1.msra.mxu0 %v2215
    %2544 = vmatprep.subr.mxu0 0.0
    %2545 = vmatpush1.msra.mxu0 %v2216
    %2546 = vmatprep.subr.mxu0 0.0
    %2547 = vmatpush1.msra.mxu0 %v2217
    %2548 = vmatprep.subr.mxu0 0.0
    %2549 = vmatpush1.msra.mxu0 %v2218
    %2550 = vmatprep.subr.mxu0 0.0
    %2551 = vmatpush1.msra.mxu0 %v2219
    %2552 = vmatprep.subr.mxu0 0.0
    %2553 = vmatpush1.msra.mxu0 %v2220
    %2554 = vmatprep.subr.mxu0 0.0
    %2555 = vmatpush1.msra.mxu0 %v2221
    %2556 = vmatprep.subr.mxu0 0.0
    %2557 = vmatpush1.msra.mxu0 %v2222
    %2558 = vmatprep.subr.mxu0 0.0
    %2559 = vmatpush1.msra.mxu0 %v2223
    %2560 = vmatprep.subr.mxu0 0.0
    %2561 = vmatpush1.msra.mxu0 %v2224
    %2562 = vmatprep.subr.mxu0 0.0
    %2563 = vmatpush1.msra.mxu0 %v2225
    %2564 = vmatprep.subr.mxu0 0.0
    %2565 = vmatpush1.msra.mxu0 %v2226
    %2566 = vmatprep.subr.mxu0 0.0
    %2567 = vmatpush1.msra.mxu0 %v2227
    %2568 = vmatprep.subr.mxu0 0.0
    %2569 = vmatpush1.msra.mxu0 %v2228
    %2570 = vmatprep.subr.mxu0 0.0
    %2571 = vmatpush1.msra.mxu0 %v2229
    %2572 = vmatprep.subr.mxu0 0.0
    %2573 = vmatpush1.msra.mxu0 %v2230
    %2574 = vmatprep.subr.mxu0 0.0
    %2575 = vmatpush1.msra.mxu0 %v2231
    %2576 = vmatprep.subr.mxu0 0.0
    %2577 = vmatpush1.msra.mxu0 %v2232
    %2578 = vmatprep.subr.mxu0 0.0
    %2579 = vmatpush1.msra.mxu0 %v2233
    %2580 = vmatprep.subr.mxu0 0.0
    %2581 = vmatpush1.msra.mxu0 %v2234
    %2582 = vmatprep.subr.mxu0 0.0
    %2583 = vmatpush1.msra.mxu0 %v2235
    %2584 = vmatprep.subr.mxu0 0.0
    %2585 = vmatpush1.msra.mxu0 %v2236
    %2586 = vmatprep.subr.mxu0 0.0
    %2587 = vmatpush1.msra.mxu0 %v2237
    %2588 = vmatprep.subr.mxu0 0.0
    %2589 = vmatpush1.msra.mxu0 %v2238
    %2590 = vmatprep.subr.mxu0 0.0
    %2591 = vmatpush1.msra.mxu0 %v2239
    %2592 = vmatprep.subr.mxu0 0.0
    %2593 = vmatpush1.msra.mxu0 %v2240
    %2594 = vmatprep.subr.mxu0 0.0
    %2595 = vmatpush1.msra.mxu0 %v2241
    %2596 = vmatprep.subr.mxu0 0.0
    %2597 = vmatpush1.msra.mxu0 %v2242
    %2598 = vmatprep.subr.mxu0 0.0
    %2599 = vmatpush1.msra.mxu0 %v2243
    %2600 = vmatprep.subr.mxu0 0.0
    %2601 = vmatpush1.msra.mxu0 %v2244
    %2602 = vmatprep.subr.mxu0 0.0
    %2603 = vmatpush1.msra.mxu0 %v2245
    %2604 = vmatprep.mubr.f32.mxu0 %v2109
    %2605 = vmatmul.mubr.f32.gmra.mrb[0].mxu0 %v2108
    %v2606 = vpop.f32.mrb[0].mxu0
    %v2607 = vadd.f32 %v2537, %v2606
    %v2608 = vpop.f32.mrb[0].mxu0
    %2609 = vdwg.mxu0
    %2610 = vmatprep.subr.mxu0 0.0
    %2611 = vmatpush1.msra.mxu0 %v2246
    %2612 = vmatprep.subr.mxu0 0.0
    %2613 = vmatpush1.msra.mxu0 %v2247
    %2614 = vmatprep.subr.mxu0 0.0
    %2615 = vmatpush1.msra.mxu0 %v2248
    %2616 = vmatprep.subr.mxu0 0.0
    %2617 = vmatpush1.msra.mxu0 %v2249
    %2618 = vmatprep.subr.mxu0 0.0
    %2619 = vmatpush1.msra.mxu0 %v2250
    %2620 = vmatprep.subr.mxu0 0.0
    %2621 = vmatpush1.msra.mxu0 %v2251
    %2622 = vmatprep.subr.mxu0 0.0
    %2623 = vmatpush1.msra.mxu0 %v2252
    %2624 = vmatprep.subr.mxu0 0.0
    %2625 = vmatpush1.msra.mxu0 %v2253
    %2626 = vmatprep.subr.mxu0 0.0
    %2627 = vmatpush1.msra.mxu0 %v2254
    %2628 = vmatprep.subr.mxu0 0.0
    %2629 = vmatpush1.msra.mxu0 %v2255
    %2630 = vmatprep.subr.mxu0 0.0
    %2631 = vmatpush1.msra.mxu0 %v2256
    %2632 = vmatprep.subr.mxu0 0.0
    %2633 = vmatpush1.msra.mxu0 %v2257
    %2634 = vmatprep.subr.mxu0 0.0
    %2635 = vmatpush1.msra.mxu0 %v2258
    %2636 = vmatprep.subr.mxu0 0.0
    %2637 = vmatpush1.msra.mxu0 %v2259
    %2638 = vmatprep.subr.mxu0 0.0
    %2639 = vmatpush1.msra.mxu0 %v2260
    %2640 = vmatprep.subr.mxu0 0.0
    %2641 = vmatpush1.msra.mxu0 %v2261
    %2642 = vmatprep.subr.mxu0 0.0
    %2643 = vmatpush1.msra.mxu0 %v2262
    %2644 = vmatprep.subr.mxu0 0.0
    %2645 = vmatpush1.msra.mxu0 %v2263
    %2646 = vmatprep.subr.mxu0 0.0
    %2647 = vmatpush1.msra.mxu0 %v2264
    %2648 = vmatprep.subr.mxu0 0.0
    %2649 = vmatpush1.msra.mxu0 %v2265
    %2650 = vmatprep.subr.mxu0 0.0
    %2651 = vmatpush1.msra.mxu0 %v2266
    %2652 = vmatprep.subr.mxu0 0.0
    %2653 = vmatpush1.msra.mxu0 %v2267
    %2654 = vmatprep.subr.mxu0 0.0
    %2655 = vmatpush1.msra.mxu0 %v2268
    %2656 = vmatprep.subr.mxu0 0.0
    %2657 = vmatpush1.msra.mxu0 %v2269
    %2658 = vmatprep.subr.mxu0 0.0
    %2659 = vmatpush1.msra.mxu0 %v2270
    %2660 = vmatprep.subr.mxu0 0.0
    %2661 = vmatpush1.msra.mxu0 %v2271
    %2662 = vmatprep.subr.mxu0 0.0
    %2663 = vmatpush1.msra.mxu0 %v2272
    %2664 = vmatprep.subr.mxu0 0.0
    %2665 = vmatpush1.msra.mxu0 %v2273
    %2666 = vmatprep.subr.mxu0 0.0
    %2667 = vmatpush1.msra.mxu0 %v2274
    %2668 = vmatprep.subr.mxu0 0.0
    %2669 = vmatpush1.msra.mxu0 %v2275
    %2670 = vmatprep.subr.mxu0 0.0
    %2671 = vmatpush1.msra.mxu0 %v2276
    %2672 = vmatprep.subr.mxu0 0.0
    %2673 = vmatpush1.msra.mxu0 %v2277
    %2674 = vmatprep.mubr.f32.mxu0 %v2111
    %2675 = vmatmul.mubr.f32.gmra.mrb[0].mxu0 %v2110
    %v2676 = vpop.f32.mrb[0].mxu0
    %v2677 = vadd.f32 %v2607, %v2676
    %v2678 = vpop.f32.mrb[0].mxu0
    %2679 = vdwg.mxu0
    %2680 = vmatprep.subr.mxu0 0.0
    %2681 = vmatpush1.msra.mxu0 %v2278
    %2682 = vmatprep.subr.mxu0 0.0
    %2683 = vmatpush1.msra.mxu0 %v2279
    %2684 = vmatprep.subr.mxu0 0.0
    %2685 = vmatpush1.msra.mxu0 %v2280
    %2686 = vmatprep.subr.mxu0 0.0
    %2687 = vmatpush1.msra.mxu0 %v2281
    %2688 = vmatprep.subr.mxu0 0.0
    %2689 = vmatpush1.msra.mxu0 %v2282
    %2690 = vmatprep.subr.mxu0 0.0
    %2691 = vmatpush1.msra.mxu0 %v2283
    %2692 = vmatprep.subr.mxu0 0.0
    %2693 = vmatpush1.msra.mxu0 %v2284
    %2694 = vmatprep.subr.mxu0 0.0
    %2695 = vmatpush1.msra.mxu0 %v2285
    %2696 = vmatprep.subr.mxu0 0.0
    %2697 = vmatpush1.msra.mxu0 %v2286
    %2698 = vmatprep.subr.mxu0 0.0
    %2699 = vmatpush1.msra.mxu0 %v2287
    %2700 = vmatprep.subr.mxu0 0.0
    %2701 = vmatpush1.msra.mxu0 %v2288
    %2702 = vmatprep.subr.mxu0 0.0
    %2703 = vmatpush1.msra.mxu0 %v2289
    %2704 = vmatprep.subr.mxu0 0.0
    %2705 = vmatpush1.msra.mxu0 %v2290
    %2706 = vmatprep.subr.mxu0 0.0
    %2707 = vmatpush1.msra.mxu0 %v2291
    %2708 = vmatprep.subr.mxu0 0.0
    %2709 = vmatpush1.msra.mxu0 %v2292
    %2710 = vmatprep.subr.mxu0 0.0
    %2711 = vmatpush1.msra.mxu0 %v2293
    %2712 = vmatprep.subr.mxu0 0.0
    %2713 = vmatpush1.msra.mxu0 %v2294
    %2714 = vmatprep.subr.mxu0 0.0
    %2715 = vmatpush1.msra.mxu0 %v2295
    %2716 = vmatprep.subr.mxu0 0.0
    %2717 = vmatpush1.msra.mxu0 %v2296
    %2718 = vmatprep.subr.mxu0 0.0
    %2719 = vmatpush1.msra.mxu0 %v2297
    %2720 = vmatprep.subr.mxu0 0.0
    %2721 = vmatpush1.msra.mxu0 %v2298
    %2722 = vmatprep.subr.mxu0 0.0
    %2723 = vmatpush1.msra.mxu0 %v2299
    %2724 = vmatprep.subr.mxu0 0.0
    %2725 = vmatpush1.msra.mxu0 %v2300
    %2726 = vmatprep.subr.mxu0 0.0
    %2727 = vmatpush1.msra.mxu0 %v2301
    %2728 = vmatprep.subr.mxu0 0.0
    %2729 = vmatpush1.msra.mxu0 %v2302
    %2730 = vmatprep.subr.mxu0 0.0
    %2731 = vmatpush1.msra.mxu0 %v2303
    %2732 = vmatprep.subr.mxu0 0.0
    %2733 = vmatpush1.msra.mxu0 %v2304
    %2734 = vmatprep.subr.mxu0 0.0
    %2735 = vmatpush1.msra.mxu0 %v2305
    %2736 = vmatprep.subr.mxu0 0.0
    %2737 = vmatpush1.msra.mxu0 %v2306
    %2738 = vmatprep.subr.mxu0 0.0
    %2739 = vmatpush1.msra.mxu0 %v2307
    %2740 = vmatprep.subr.mxu0 0.0
    %2741 = vmatpush1.msra.mxu0 %v2308
    %2742 = vmatprep.subr.mxu0 0.0
    %2743 = vmatpush1.msra.mxu0 %v2309
    %2744 = vmatprep.mubr.f32.mxu0 %v2113
    %2745 = vmatmul.mubr.f32.gmra.mrb[0].mxu0 %v2112
    %v2746 = vpop.f32.mrb[0].mxu0
    %v2747 = vadd.f32 %v2677, %v2746
    %v2748 = vpop.f32.mrb[0].mxu0
    %2749 = vdwg.mxu0
    %2750 = vmatprep.subr.mxu0 0.0
    %2751 = vmatpush1.msra.mxu0 %v2310
    %2752 = vmatprep.subr.mxu0 0.0
    %2753 = vmatpush1.msra.mxu0 %v2311
    %2754 = vmatprep.subr.mxu0 0.0
    %2755 = vmatpush1.msra.mxu0 %v2312
    %2756 = vmatprep.subr.mxu0 0.0
    %2757 = vmatpush1.msra.mxu0 %v2313
    %2758 = vmatprep.subr.mxu0 0.0
    %2759 = vmatpush1.msra.mxu0 %v2314
    %2760 = vmatprep.subr.mxu0 0.0
    %2761 = vmatpush1.msra.mxu0 %v2315
    %2762 = vmatprep.subr.mxu0 0.0
    %2763 = vmatpush1.msra.mxu0 %v2316
    %2764 = vmatprep.subr.mxu0 0.0
    %2765 = vmatpush1.msra.mxu0 %v2317
    %2766 = vmatprep.subr.mxu0 0.0
    %2767 = vmatpush1.msra.mxu0 %v2318
    %2768 = vmatprep.subr.mxu0 0.0
    %2769 = vmatpush1.msra.mxu0 %v2319
    %2770 = vmatprep.subr.mxu0 0.0
    %2771 = vmatpush1.msra.mxu0 0.0
    %2772 = vmatprep.subr.mxu0 0.0
    %2773 = vmatpush1.msra.mxu0 0.0
    %2774 = vmatprep.subr.mxu0 0.0
    %2775 = vmatpush1.msra.mxu0 0.0
    %2776 = vmatprep.subr.mxu0 0.0
    %2777 = vmatpush1.msra.mxu0 0.0
    %2778 = vmatprep.subr.mxu0 0.0
    %2779 = vmatpush1.msra.mxu0 0.0
    %2780 = vmatprep.subr.mxu0 0.0
    %2781 = vmatpush1.msra.mxu0 0.0
    %2782 = vmatprep.subr.mxu0 0.0
    %2783 = vmatpush1.msra.mxu0 0.0
    %2784 = vmatprep.subr.mxu0 0.0
    %2785 = vmatpush1.msra.mxu0 0.0
    %2786 = vmatprep.subr.mxu0 0.0
    %2787 = vmatpush1.msra.mxu0 0.0
    %2788 = vmatprep.subr.mxu0 0.0
    %2789 = vmatpush1.msra.mxu0 0.0
    %2790 = vmatprep.subr.mxu0 0.0
    %2791 = vmatpush1.msra.mxu0 0.0
    %2792 = vmatprep.subr.mxu0 0.0
    %2793 = vmatpush1.msra.mxu0 0.0
    %2794 = vmatprep.subr.mxu0 0.0
    %2795 = vmatpush1.msra.mxu0 0.0
    %2796 = vmatprep.subr.mxu0 0.0
    %2797 = vmatpush1.msra.mxu0 0.0
    %2798 = vmatprep.subr.mxu0 0.0
    %2799 = vmatpush1.msra.mxu0 0.0
    %2800 = vmatprep.subr.mxu0 0.0
    %2801 = vmatpush1.msra.mxu0 0.0
    %2802 = vmatprep.subr.mxu0 0.0
    %2803 = vmatpush1.msra.mxu0 0.0
    %2804 = vmatprep.subr.mxu0 0.0
    %2805 = vmatpush1.msra.mxu0 0.0
    %2806 = vmatprep.subr.mxu0 0.0
    %2807 = vmatpush1.msra.mxu0 0.0
    %2808 = vmatprep.subr.mxu0 0.0
    %2809 = vmatpush1.msra.mxu0 0.0
    %2810 = vmatprep.subr.mxu0 0.0
    %2811 = vmatpush1.msra.mxu0 0.0
    %2812 = vmatprep.subr.mxu0 0.0
    %2813 = vmatpush1.msra.mxu0 0.0
    %2814 = vmatprep.mubr.f32.mxu0 0.0
    %2815 = vmatmul.mubr.f32.gmra.mrb[0].mxu0 %v2328
    %v2816 = vpop.f32.mrb[0].mxu0
    %v2817 = vadd.f32 %v2747, %v2816
    %v2818 = vpop.f32.mrb[0].mxu0
    %2819 = vdwg.mxu0
    %v2820 = vmax.f32 %v2817, 0.0
    %2822 = vrot.lane.b32.xlu0 %v2820, 32
    %v2823 = vpop.permute.xlu0 %2822
    %2825 = vrot.lane.b32.xlu0 %v2820, 64
    %v2826 = vpop.permute.xlu0 %2825
    %2828 = vrot.lane.b32.xlu0 %v2820, 96
    %v2829 = vpop.permute.xlu0 %2828
    %v2831 = vsel %vm169, %v2820, %v2823
    %v2832 = vsel %vm2095, %v2831, %v2826
    %v2833 = vsel %vm2092, %v2832, %v2829
    %v2834 = vmul.f32 %v1851, %v2833
    %v2835 = vmul.f32 %v1853, %v2833
    %v2836 = vmul.f32 %v1922, %v2833
    %v2837 = vmul.f32 %v1924, %v2833
    %v2838 = vmul.f32 %v1993, %v2833
    %v2839 = vmul.f32 %v1995, %v2833
    %v2840 = vmul.f32 %v2064, %v2833
    %v2841 = vmul.f32 %v2066, %v2833
    %2842 = vrot.lane.b32.xlu0 %v240, 32
    %v2843 = vpop.permute.xlu0 %2842
    %v2845 = vsel %vm169, %v2820, %v2843
    %v2846 = vld [vmem:[%s11] sm:$0xff]
    %v2847 = vld [vmem:[%s11 + $0x8] sm:$0xff]
    %v2848 = vld [vmem:[%s11 + $0x10] sm:$0xff]
    %v2849 = vld [vmem:[%s11 + $0x18] sm:$0xff]
    %v2850 = vld [vmem:[%s11 + $0x20] sm:$0xff]
    %v2851 = vld [vmem:[%s11 + $0x28] sm:$0xff]
    %v2852 = vld [vmem:[%s11 + $0x30] sm:$0xff]
    %v2853 = vld [vmem:[%s11 + $0x38] sm:$0xff]
    %v2854 = vld [vmem:[%s11 + $0x40] sm:$0xff]
    %v2855 = vld [vmem:[%s11 + $0x48] sm:$0xff]
    %v2856 = vld [vmem:[%s11 + $0x50] sm:$0xff]
    %v2857 = vld [vmem:[%s11 + $0x58] sm:$0xff]
    %v2858 = vld [vmem:[%s11 + $0x60] sm:$0xff]
    %v2859 = vld [vmem:[%s11 + $0x68] sm:$0xff]
    %v2860 = vld [vmem:[%s11 + $0x70] sm:$0xff]
    %v2861 = vld [vmem:[%s11 + $0x78] sm:$0xff]
    %v2862 = vld [vmem:[%s11 + $0x80] sm:$0xff]
    %v2863 = vld [vmem:[%s11 + $0x88] sm:$0xff]
    %v2864 = vld [vmem:[%s11 + $0x90] sm:$0xff]
    %v2865 = vld [vmem:[%s11 + $0x98] sm:$0xff]
    %v2866 = vld [vmem:[%s11 + $0xa0] sm:$0xff]
    %v2867 = vld [vmem:[%s11 + $0xa8] sm:$0xff]
    %v2868 = vld [vmem:[%s11 + $0xb0] sm:$0xff]
    %v2869 = vld [vmem:[%s11 + $0xb8] sm:$0xff]
    %v2870 = vld [vmem:[%s11 + $0xc0] sm:$0xff]
    %v2871 = vld [vmem:[%s11 + $0xc8] sm:$0xff]
    %v2872 = vld [vmem:[%s11 + $0xd0] sm:$0xff]
    %v2873 = vld [vmem:[%s11 + $0xd8] sm:$0xff]
    %v2874 = vld [vmem:[%s11 + $0xe0] sm:$0xff]
    %v2875 = vld [vmem:[%s11 + $0xe8] sm:$0xff]
    %v2876 = vld [vmem:[%s11 + $0xf0] sm:$0xff]
    %v2877 = vld [vmem:[%s11 + $0xf8] sm:$0xff]
    %v2878 = vld [vmem:[%s11 + $0x100] sm:$0xff]
    %v2879 = vld [vmem:[%s11 + $0x108] sm:$0xff]
    %v2880 = vld [vmem:[%s11 + $0x110] sm:$0xff]
    %v2881 = vld [vmem:[%s11 + $0x118] sm:$0xff]
    %v2882 = vld [vmem:[%s11 + $0x120] sm:$0xff]
    %v2883 = vld [vmem:[%s11 + $0x128] sm:$0xff]
    %v2884 = vld [vmem:[%s11 + $0x130] sm:$0xff]
    %v2885 = vld [vmem:[%s11 + $0x138] sm:$0xff]
    %v2886 = vld [vmem:[%s11 + $0x140] sm:$0xff]
    %v2887 = vld [vmem:[%s11 + $0x148] sm:$0xff]
    %v2888 = vld [vmem:[%s11 + $0x150] sm:$0xff]
    %v2889 = vld [vmem:[%s11 + $0x158] sm:$0xff]
    %v2890 = vld [vmem:[%s11 + $0x160] sm:$0xff]
    %v2891 = vld [vmem:[%s11 + $0x168] sm:$0xff]
    %v2892 = vld [vmem:[%s11 + $0x170] sm:$0xff]
    %v2893 = vld [vmem:[%s11 + $0x178] sm:$0xff]
    %v2894 = vld [vmem:[%s11 + $0x180] sm:$0xff]
    %v2895 = vld [vmem:[%s11 + $0x188] sm:$0xff]
    %v2896 = vld [vmem:[%s11 + $0x190] sm:$0xff]
    %v2897 = vld [vmem:[%s11 + $0x198] sm:$0xff]
    %v2898 = vld [vmem:[%s11 + $0x1a0] sm:$0xff]
    %v2899 = vld [vmem:[%s11 + $0x1a8] sm:$0xff]
    %v2900 = vld [vmem:[%s11 + $0x1b0] sm:$0xff]
    %v2901 = vld [vmem:[%s11 + $0x1b8] sm:$0xff]
    %v2902 = vld [vmem:[%s11 + $0x1c0] sm:$0xff]
    %v2903 = vld [vmem:[%s11 + $0x1c8] sm:$0xff]
    %v2904 = vld [vmem:[%s11 + $0x1d0] sm:$0xff]
    %v2905 = vld [vmem:[%s11 + $0x1d8] sm:$0xff]
    %v2906 = vld [vmem:[%s11 + $0x1e0] sm:$0xff]
    %v2907 = vld [vmem:[%s11 + $0x1e8] sm:$0xff]
    %v2908 = vld [vmem:[%s11 + $0x1f0] sm:$0xff]
    %v2909 = vld [vmem:[%s11 + $0x1f8] sm:$0xff]
    %v2910 = vld [vmem:[%s11 + $0x200] sm:$0xff]
    %v2911 = vld [vmem:[%s11 + $0x208] sm:$0xff]
    %v2912 = vld [vmem:[%s11 + $0x210] sm:$0xff]
    %v2913 = vld [vmem:[%s11 + $0x218] sm:$0xff]
    %v2914 = vld [vmem:[%s11 + $0x220] sm:$0xff]
    %v2915 = vld [vmem:[%s11 + $0x228] sm:$0xff]
    %v2916 = vld [vmem:[%s11 + $0x230] sm:$0xff]
    %v2917 = vld [vmem:[%s11 + $0x238] sm:$0xff]
    %v2918 = vld [vmem:[%s11 + $0x240] sm:$0xff]
    %v2919 = vld [vmem:[%s11 + $0x248] sm:$0xff]
    %v2920 = vld [vmem:[%s11 + $0x250] sm:$0xff]
    %v2921 = vld [vmem:[%s11 + $0x258] sm:$0xff]
    %v2922 = vld [vmem:[%s11 + $0x260] sm:$0xff]
    %v2923 = vld [vmem:[%s11 + $0x268] sm:$0xff]
    %v2924 = vld [vmem:[%s11 + $0x270] sm:$0xff]
    %v2925 = vld [vmem:[%s11 + $0x278] sm:$0xff]
    %v2926 = vld [vmem:[%s11 + $0x280] sm:$0xff]
    %v2927 = vld [vmem:[%s11 + $0x288] sm:$0xff]
    %v2928 = vld [vmem:[%s11 + $0x290] sm:$0xff]
    %v2929 = vld [vmem:[%s11 + $0x298] sm:$0xff]
    %v2930 = vld [vmem:[%s11 + $0x2a0] sm:$0xff]
    %v2931 = vld [vmem:[%s11 + $0x2a8] sm:$0xff]
    %v2932 = vld [vmem:[%s11 + $0x2b0] sm:$0xff]
    %v2933 = vld [vmem:[%s11 + $0x2b8] sm:$0xff]
    %v2934 = vld [vmem:[%s11 + $0x2c0] sm:$0xff]
    %v2935 = vld [vmem:[%s11 + $0x2c8] sm:$0xff]
    %v2936 = vld [vmem:[%s11 + $0x2d0] sm:$0xff]
    %v2937 = vld [vmem:[%s11 + $0x2d8] sm:$0xff]
    %v2938 = vld [vmem:[%s11 + $0x2e0] sm:$0xff]
    %v2939 = vld [vmem:[%s11 + $0x2e8] sm:$0xff]
    %v2940 = vld [vmem:[%s11 + $0x2f0] sm:$0xff]
    %v2941 = vld [vmem:[%s11 + $0x2f8] sm:$0xff]
    %v2942 = vld [vmem:[%s11 + $0x300] sm:$0xff]
    %v2943 = vld [vmem:[%s11 + $0x308] sm:$0xff]
    %v2944 = vld [vmem:[%s11 + $0x310] sm:$0xff]
    %v2945 = vld [vmem:[%s11 + $0x318] sm:$0xff]
    %v2946 = vld [vmem:[%s11 + $0x320] sm:$0xff]
    %v2947 = vld [vmem:[%s11 + $0x328] sm:$0xff]
    %v2948 = vld [vmem:[%s11 + $0x330] sm:$0xff]
    %v2949 = vld [vmem:[%s11 + $0x338] sm:$0xff]
    %v2950 = vld [vmem:[%s11 + $0x340] sm:$0xff]
    %v2951 = vld [vmem:[%s11 + $0x348] sm:$0xff]
    %v2952 = vld [vmem:[%s11 + $0x350] sm:$0xff]
    %v2953 = vld [vmem:[%s11 + $0x358] sm:$0xff]
    %v2954 = vld [vmem:[%s11 + $0x360] sm:$0xff]
    %v2955 = vld [vmem:[%s11 + $0x368] sm:$0xff]
    %v2956 = vld [vmem:[%s11 + $0x370] sm:$0xff]
    %v2957 = vld [vmem:[%s11 + $0x378] sm:$0xff]
    %v2958 = vld [vmem:[%s11 + $0x380] sm:$0xff]
    %v2959 = vld [vmem:[%s11 + $0x388] sm:$0xff]
    %v2960 = vld [vmem:[%s11 + $0x390] sm:$0xff]
    %v2961 = vld [vmem:[%s11 + $0x398] sm:$0xff]
    %v2962 = vld [vmem:[%s11 + $0x3a0] sm:$0xff]
    %v2963 = vld [vmem:[%s11 + $0x3a8] sm:$0xff]
    %v2964 = vld [vmem:[%s11 + $0x3b0] sm:$0xff]
    %v2965 = vld [vmem:[%s11 + $0x3b8] sm:$0xff]
    %v2966 = vld [vmem:[%s11 + $0x3c0] sm:$0xff]
    %v2967 = vld [vmem:[%s11 + $0x3c8] sm:$0xff]
    %v2968 = vld [vmem:[%s11 + $0x3d0] sm:$0xff]
    %v2969 = vld [vmem:[%s11 + $0x3d8] sm:$0xff]
    %v2970 = vld [vmem:[%s11 + $0x3e0] sm:$0xff]
    %v2971 = vld [vmem:[%s11 + $0x3e8] sm:$0xff]
    %v2972 = vld [vmem:[%s11 + $0x3f0] sm:$0xff]
    %v2973 = vld [vmem:[%s11 + $0x3f8] sm:$0xff]
    %v2974 = vld [vmem:[%s11 + $0x400] sm:$0xff]
    %v2975 = vld [vmem:[%s11 + $0x408] sm:$0xff]
    %v2976 = vld [vmem:[%s11 + $0x410] sm:$0xff]
    %v2977 = vld [vmem:[%s11 + $0x418] sm:$0xff]
    %v2978 = vld [vmem:[%s11 + $0x420] sm:$0xff]
    %v2979 = vld [vmem:[%s11 + $0x428] sm:$0xff]
    %v2980 = vld [vmem:[%s11 + $0x430] sm:$0xff]
    %v2981 = vld [vmem:[%s11 + $0x438] sm:$0xff]
    %v2982 = vld [vmem:[%s12] sm:$0x1]
    %v2984 = vlaneseq
    %v2985 = vshrl.u32 %v2984, 7
    %v2986 = vsub.s32 0, %v2985
    %v2987 = vrot.slane %v2982, %v2986
    %v2990 = vsel %vm2095, %v2845, 0
    %2992 = vmatprep.subr.mxu0 0.0
    %2993 = vmatpush1.msra.mxu0 %v2846
    %2994 = vmatprep.subr.mxu0 0.0
    %2995 = vmatpush1.msra.mxu0 %v2847
    %2996 = vmatprep.subr.mxu0 0.0
    %2997 = vmatpush1.msra.mxu0 %v2848
    %2998 = vmatprep.subr.mxu0 0.0
    %2999 = vmatpush1.msra.mxu0 %v2849
    %3000 = vmatprep.subr.mxu0 0.0
    %3001 = vmatpush1.msra.mxu0 %v2850
    %3002 = vmatprep.subr.mxu0 0.0
    %3003 = vmatpush1.msra.mxu0 %v2851
    %3004 = vmatprep.subr.mxu0 0.0
    %3005 = vmatpush1.msra.mxu0 %v2852
    %3006 = vmatprep.subr.mxu0 0.0
    %3007 = vmatpush1.msra.mxu0 %v2853
    %3008 = vmatprep.subr.mxu0 0.0
    %3009 = vmatpush1.msra.mxu0 %v2854
    %3010 = vmatprep.subr.mxu0 0.0
    %3011 = vmatpush1.msra.mxu0 %v2855
    %3012 = vmatprep.subr.mxu0 0.0
    %3013 = vmatpush1.msra.mxu0 %v2856
    %3014 = vmatprep.subr.mxu0 0.0
    %3015 = vmatpush1.msra.mxu0 %v2857
    %3016 = vmatprep.subr.mxu0 0.0
    %3017 = vmatpush1.msra.mxu0 %v2858
    %3018 = vmatprep.subr.mxu0 0.0
    %3019 = vmatpush1.msra.mxu0 %v2859
    %3020 = vmatprep.subr.mxu0 0.0
    %3021 = vmatpush1.msra.mxu0 %v2860
    %3022 = vmatprep.subr.mxu0 0.0
    %3023 = vmatpush1.msra.mxu0 %v2861
    %3024 = vmatprep.subr.mxu0 0.0
    %3025 = vmatpush1.msra.mxu0 %v2862
    %3026 = vmatprep.subr.mxu0 0.0
    %3027 = vmatpush1.msra.mxu0 %v2863
    %3028 = vmatprep.subr.mxu0 0.0
    %3029 = vmatpush1.msra.mxu0 %v2864
    %3030 = vmatprep.subr.mxu0 0.0
    %3031 = vmatpush1.msra.mxu0 %v2865
    %3032 = vmatprep.subr.mxu0 0.0
    %3033 = vmatpush1.msra.mxu0 %v2866
    %3034 = vmatprep.subr.mxu0 0.0
    %3035 = vmatpush1.msra.mxu0 %v2867
    %3036 = vmatprep.subr.mxu0 0.0
    %3037 = vmatpush1.msra.mxu0 %v2868
    %3038 = vmatprep.subr.mxu0 0.0
    %3039 = vmatpush1.msra.mxu0 %v2869
    %3040 = vmatprep.subr.mxu0 0.0
    %3041 = vmatpush1.msra.mxu0 %v2870
    %3042 = vmatprep.subr.mxu0 0.0
    %3043 = vmatpush1.msra.mxu0 %v2871
    %3044 = vmatprep.subr.mxu0 0.0
    %3045 = vmatpush1.msra.mxu0 %v2872
    %3046 = vmatprep.subr.mxu0 0.0
    %3047 = vmatpush1.msra.mxu0 %v2873
    %3048 = vmatprep.subr.mxu0 0.0
    %3049 = vmatpush1.msra.mxu0 %v2874
    %3050 = vmatprep.subr.mxu0 0.0
    %3051 = vmatpush1.msra.mxu0 %v2875
    %3052 = vmatprep.subr.mxu0 0.0
    %3053 = vmatpush1.msra.mxu0 %v2876
    %3054 = vmatprep.subr.mxu0 0.0
    %3055 = vmatpush1.msra.mxu0 %v2877
    %3056 = vmatprep.mubr.f32.mxu0 %v2835
    %3057 = vmatmul.mubr.f32.gmra.mrb[0].mxu0 %v2834
    %v3058 = vpop.f32.mrb[0].mxu0
    %v3059 = vadd.f32 %v2987, %v3058
    %v3060 = vpop.f32.mrb[0].mxu0
    %3061 = vdwg.mxu0
    %3062 = vmatprep.subr.mxu0 0.0
    %3063 = vmatpush1.msra.mxu0 %v2878
    %3064 = vmatprep.subr.mxu0 0.0
    %3065 = vmatpush1.msra.mxu0 %v2879
    %3066 = vmatprep.subr.mxu0 0.0
    %3067 = vmatpush1.msra.mxu0 %v2880
    %3068 = vmatprep.subr.mxu0 0.0
    %3069 = vmatpush1.msra.mxu0 %v2881
    %3070 = vmatprep.subr.mxu0 0.0
    %3071 = vmatpush1.msra.mxu0 %v2882
    %3072 = vmatprep.subr.mxu0 0.0
    %3073 = vmatpush1.msra.mxu0 %v2883
    %3074 = vmatprep.subr.mxu0 0.0
    %3075 = vmatpush1.msra.mxu0 %v2884
    %3076 = vmatprep.subr.mxu0 0.0
    %3077 = vmatpush1.msra.mxu0 %v2885
    %3078 = vmatprep.subr.mxu0 0.0
    %3079 = vmatpush1.msra.mxu0 %v2886
    %3080 = vmatprep.subr.mxu0 0.0
    %3081 = vmatpush1.msra.mxu0 %v2887
    %3082 = vmatprep.subr.mxu0 0.0
    %3083 = vmatpush1.msra.mxu0 %v2888
    %3084 = vmatprep.subr.mxu0 0.0
    %3085 = vmatpush1.msra.mxu0 %v2889
    %3086 = vmatprep.subr.mxu0 0.0
    %3087 = vmatpush1.msra.mxu0 %v2890
    %3088 = vmatprep.subr.mxu0 0.0
    %3089 = vmatpush1.msra.mxu0 %v2891
    %3090 = vmatprep.subr.mxu0 0.0
    %3091 = vmatpush1.msra.mxu0 %v2892
    %3092 = vmatprep.subr.mxu0 0.0
    %3093 = vmatpush1.msra.mxu0 %v2893
    %3094 = vmatprep.subr.mxu0 0.0
    %3095 = vmatpush1.msra.mxu0 %v2894
    %3096 = vmatprep.subr.mxu0 0.0
    %3097 = vmatpush1.msra.mxu0 %v2895
    %3098 = vmatprep.subr.mxu0 0.0
    %3099 = vmatpush1.msra.mxu0 %v2896
    %3100 = vmatprep.subr.mxu0 0.0
    %3101 = vmatpush1.msra.mxu0 %v2897
    %3102 = vmatprep.subr.mxu0 0.0
    %3103 = vmatpush1.msra.mxu0 %v2898
    %3104 = vmatprep.subr.mxu0 0.0
    %3105 = vmatpush1.msra.mxu0 %v2899
    %3106 = vmatprep.subr.mxu0 0.0
    %3107 = vmatpush1.msra.mxu0 %v2900
    %3108 = vmatprep.subr.mxu0 0.0
    %3109 = vmatpush1.msra.mxu0 %v2901
    %3110 = vmatprep.subr.mxu0 0.0
    %3111 = vmatpush1.msra.mxu0 %v2902
    %3112 = vmatprep.subr.mxu0 0.0
    %3113 = vmatpush1.msra.mxu0 %v2903
    %3114 = vmatprep.subr.mxu0 0.0
    %3115 = vmatpush1.msra.mxu0 %v2904
    %3116 = vmatprep.subr.mxu0 0.0
    %3117 = vmatpush1.msra.mxu0 %v2905
    %3118 = vmatprep.subr.mxu0 0.0
    %3119 = vmatpush1.msra.mxu0 %v2906
    %3120 = vmatprep.subr.mxu0 0.0
    %3121 = vmatpush1.msra.mxu0 %v2907
    %3122 = vmatprep.subr.mxu0 0.0
    %3123 = vmatpush1.msra.mxu0 %v2908
    %3124 = vmatprep.subr.mxu0 0.0
    %3125 = vmatpush1.msra.mxu0 %v2909
    %3126 = vmatprep.mubr.f32.mxu0 %v2837
    %3127 = vmatmul.mubr.f32.gmra.mrb[0].mxu0 %v2836
    %v3128 = vpop.f32.mrb[0].mxu0
    %v3129 = vadd.f32 %v3059, %v3128
    %v3130 = vpop.f32.mrb[0].mxu0
    %3131 = vdwg.mxu0
    %3132 = vmatprep.subr.mxu0 0.0
    %3133 = vmatpush1.msra.mxu0 %v2910
    %3134 = vmatprep.subr.mxu0 0.0
    %3135 = vmatpush1.msra.mxu0 %v2911
    %3136 = vmatprep.subr.mxu0 0.0
    %3137 = vmatpush1.msra.mxu0 %v2912
    %3138 = vmatprep.subr.mxu0 0.0
    %3139 = vmatpush1.msra.mxu0 %v2913
    %3140 = vmatprep.subr.mxu0 0.0
    %3141 = vmatpush1.msra.mxu0 %v2914
    %3142 = vmatprep.subr.mxu0 0.0
    %3143 = vmatpush1.msra.mxu0 %v2915
    %3144 = vmatprep.subr.mxu0 0.0
    %3145 = vmatpush1.msra.mxu0 %v2916
    %3146 = vmatprep.subr.mxu0 0.0
    %3147 = vmatpush1.msra.mxu0 %v2917
    %3148 = vmatprep.subr.mxu0 0.0
    %3149 = vmatpush1.msra.mxu0 %v2918
    %3150 = vmatprep.subr.mxu0 0.0
    %3151 = vmatpush1.msra.mxu0 %v2919
    %3152 = vmatprep.subr.mxu0 0.0
    %3153 = vmatpush1.msra.mxu0 %v2920
    %3154 = vmatprep.subr.mxu0 0.0
    %3155 = vmatpush1.msra.mxu0 %v2921
    %3156 = vmatprep.subr.mxu0 0.0
    %3157 = vmatpush1.msra.mxu0 %v2922
    %3158 = vmatprep.subr.mxu0 0.0
    %3159 = vmatpush1.msra.mxu0 %v2923
    %3160 = vmatprep.subr.mxu0 0.0
    %3161 = vmatpush1.msra.mxu0 %v2924
    %3162 = vmatprep.subr.mxu0 0.0
    %3163 = vmatpush1.msra.mxu0 %v2925
    %3164 = vmatprep.subr.mxu0 0.0
    %3165 = vmatpush1.msra.mxu0 %v2926
    %3166 = vmatprep.subr.mxu0 0.0
    %3167 = vmatpush1.msra.mxu0 %v2927
    %3168 = vmatprep.subr.mxu0 0.0
    %3169 = vmatpush1.msra.mxu0 %v2928
    %3170 = vmatprep.subr.mxu0 0.0
    %3171 = vmatpush1.msra.mxu0 %v2929
    %3172 = vmatprep.subr.mxu0 0.0
    %3173 = vmatpush1.msra.mxu0 %v2930
    %3174 = vmatprep.subr.mxu0 0.0
    %3175 = vmatpush1.msra.mxu0 %v2931
    %3176 = vmatprep.subr.mxu0 0.0
    %3177 = vmatpush1.msra.mxu0 %v2932
    %3178 = vmatprep.subr.mxu0 0.0
    %3179 = vmatpush1.msra.mxu0 %v2933
    %3180 = vmatprep.subr.mxu0 0.0
    %3181 = vmatpush1.msra.mxu0 %v2934
    %3182 = vmatprep.subr.mxu0 0.0
    %3183 = vmatpush1.msra.mxu0 %v2935
    %3184 = vmatprep.subr.mxu0 0.0
    %3185 = vmatpush1.msra.mxu0 %v2936
    %3186 = vmatprep.subr.mxu0 0.0
    %3187 = vmatpush1.msra.mxu0 %v2937
    %3188 = vmatprep.subr.mxu0 0.0
    %3189 = vmatpush1.msra.mxu0 %v2938
    %3190 = vmatprep.subr.mxu0 0.0
    %3191 = vmatpush1.msra.mxu0 %v2939
    %3192 = vmatprep.subr.mxu0 0.0
    %3193 = vmatpush1.msra.mxu0 %v2940
    %3194 = vmatprep.subr.mxu0 0.0
    %3195 = vmatpush1.msra.mxu0 %v2941
    %3196 = vmatprep.mubr.f32.mxu0 %v2839
    %3197 = vmatmul.mubr.f32.gmra.mrb[0].mxu0 %v2838
    %v3198 = vpop.f32.mrb[0].mxu0
    %v3199 = vadd.f32 %v3129, %v3198
    %v3200 = vpop.f32.mrb[0].mxu0
    %3201 = vdwg.mxu0
    %3202 = vmatprep.subr.mxu0 0.0
    %3203 = vmatpush1.msra.mxu0 %v2942
    %3204 = vmatprep.subr.mxu0 0.0
    %3205 = vmatpush1.msra.mxu0 %v2943
    %3206 = vmatprep.subr.mxu0 0.0
    %3207 = vmatpush1.msra.mxu0 %v2944
    %3208 = vmatprep.subr.mxu0 0.0
    %3209 = vmatpush1.msra.mxu0 %v2945
    %3210 = vmatprep.subr.mxu0 0.0
    %3211 = vmatpush1.msra.mxu0 %v2946
    %3212 = vmatprep.subr.mxu0 0.0
    %3213 = vmatpush1.msra.mxu0 %v2947
    %3214 = vmatprep.subr.mxu0 0.0
    %3215 = vmatpush1.msra.mxu0 %v2948
    %3216 = vmatprep.subr.mxu0 0.0
    %3217 = vmatpush1.msra.mxu0 %v2949
    %3218 = vmatprep.subr.mxu0 0.0
    %3219 = vmatpush1.msra.mxu0 %v2950
    %3220 = vmatprep.subr.mxu0 0.0
    %3221 = vmatpush1.msra.mxu0 %v2951
    %3222 = vmatprep.subr.mxu0 0.0
    %3223 = vmatpush1.msra.mxu0 %v2952
    %3224 = vmatprep.subr.mxu0 0.0
    %3225 = vmatpush1.msra.mxu0 %v2953
    %3226 = vmatprep.subr.mxu0 0.0
    %3227 = vmatpush1.msra.mxu0 %v2954
    %3228 = vmatprep.subr.mxu0 0.0
    %3229 = vmatpush1.msra.mxu0 %v2955
    %3230 = vmatprep.subr.mxu0 0.0
    %3231 = vmatpush1.msra.mxu0 %v2956
    %3232 = vmatprep.subr.mxu0 0.0
    %3233 = vmatpush1.msra.mxu0 %v2957
    %3234 = vmatprep.subr.mxu0 0.0
    %3235 = vmatpush1.msra.mxu0 %v2958
    %3236 = vmatprep.subr.mxu0 0.0
    %3237 = vmatpush1.msra.mxu0 %v2959
    %3238 = vmatprep.subr.mxu0 0.0
    %3239 = vmatpush1.msra.mxu0 %v2960
    %3240 = vmatprep.subr.mxu0 0.0
    %3241 = vmatpush1.msra.mxu0 %v2961
    %3242 = vmatprep.subr.mxu0 0.0
    %3243 = vmatpush1.msra.mxu0 %v2962
    %3244 = vmatprep.subr.mxu0 0.0
    %3245 = vmatpush1.msra.mxu0 %v2963
    %3246 = vmatprep.subr.mxu0 0.0
    %3247 = vmatpush1.msra.mxu0 %v2964
    %3248 = vmatprep.subr.mxu0 0.0
    %3249 = vmatpush1.msra.mxu0 %v2965
    %3250 = vmatprep.subr.mxu0 0.0
    %3251 = vmatpush1.msra.mxu0 %v2966
    %3252 = vmatprep.subr.mxu0 0.0
    %3253 = vmatpush1.msra.mxu0 %v2967
    %3254 = vmatprep.subr.mxu0 0.0
    %3255 = vmatpush1.msra.mxu0 %v2968
    %3256 = vmatprep.subr.mxu0 0.0
    %3257 = vmatpush1.msra.mxu0 %v2969
    %3258 = vmatprep.subr.mxu0 0.0
    %3259 = vmatpush1.msra.mxu0 %v2970
    %3260 = vmatprep.subr.mxu0 0.0
    %3261 = vmatpush1.msra.mxu0 %v2971
    %3262 = vmatprep.subr.mxu0 0.0
    %3263 = vmatpush1.msra.mxu0 %v2972
    %3264 = vmatprep.subr.mxu0 0.0
    %3265 = vmatpush1.msra.mxu0 %v2973
    %3266 = vmatprep.mubr.f32.mxu0 %v2841
    %3267 = vmatmul.mubr.f32.gmra.mrb[0].mxu0 %v2840
    %v3268 = vpop.f32.mrb[0].mxu0
    %v3269 = vadd.f32 %v3199, %v3268
    %v3270 = vpop.f32.mrb[0].mxu0
    %3271 = vdwg.mxu0
    %3272 = vmatprep.subr.mxu0 0.0
    %3273 = vmatpush1.msra.mxu0 %v2974
    %3274 = vmatprep.subr.mxu0 0.0
    %3275 = vmatpush1.msra.mxu0 %v2975
    %3276 = vmatprep.subr.mxu0 0.0
    %3277 = vmatpush1.msra.mxu0 %v2976
    %3278 = vmatprep.subr.mxu0 0.0
    %3279 = vmatpush1.msra.mxu0 %v2977
    %3280 = vmatprep.subr.mxu0 0.0
    %3281 = vmatpush1.msra.mxu0 %v2978
    %3282 = vmatprep.subr.mxu0 0.0
    %3283 = vmatpush1.msra.mxu0 %v2979
    %3284 = vmatprep.subr.mxu0 0.0
    %3285 = vmatpush1.msra.mxu0 %v2980
    %3286 = vmatprep.subr.mxu0 0.0
    %3287 = vmatpush1.msra.mxu0 %v2981
    %3288 = vmatprep.subr.mxu0 0.0
    %3289 = vmatpush1.msra.mxu0 0.0
    %3290 = vmatprep.subr.mxu0 0.0
    %3291 = vmatpush1.msra.mxu0 0.0
    %3292 = vmatprep.subr.mxu0 0.0
    %3293 = vmatpush1.msra.mxu0 0.0
    %3294 = vmatprep.subr.mxu0 0.0
    %3295 = vmatpush1.msra.mxu0 0.0
    %3296 = vmatprep.subr.mxu0 0.0
    %3297 = vmatpush1.msra.mxu0 0.0
    %3298 = vmatprep.subr.mxu0 0.0
    %3299 = vmatpush1.msra.mxu0 0.0
    %3300 = vmatprep.subr.mxu0 0.0
    %3301 = vmatpush1.msra.mxu0 0.0
    %3302 = vmatprep.subr.mxu0 0.0
    %3303 = vmatpush1.msra.mxu0 0.0
    %3304 = vmatprep.subr.mxu0 0.0
    %3305 = vmatpush1.msra.mxu0 0.0
    %3306 = vmatprep.subr.mxu0 0.0
    %3307 = vmatpush1.msra.mxu0 0.0
    %3308 = vmatprep.subr.mxu0 0.0
    %3309 = vmatpush1.msra.mxu0 0.0
    %3310 = vmatprep.subr.mxu0 0.0
    %3311 = vmatpush1.msra.mxu0 0.0
    %3312 = vmatprep.subr.mxu0 0.0
    %3313 = vmatpush1.msra.mxu0 0.0
    %3314 = vmatprep.subr.mxu0 0.0
    %3315 = vmatpush1.msra.mxu0 0.0
    %3316 = vmatprep.subr.mxu0 0.0
    %3317 = vmatpush1.msra.mxu0 0.0
    %3318 = vmatprep.subr.mxu0 0.0
    %3319 = vmatpush1.msra.mxu0 0.0
    %3320 = vmatprep.subr.mxu0 0.0
    %3321 = vmatpush1.msra.mxu0 0.0
    %3322 = vmatprep.subr.mxu0 0.0
    %3323 = vmatpush1.msra.mxu0 0.0
    %3324 = vmatprep.subr.mxu0 0.0
    %3325 = vmatpush1.msra.mxu0 0.0
    %3326 = vmatprep.subr.mxu0 0.0
    %3327 = vmatpush1.msra.mxu0 0.0
    %3328 = vmatprep.subr.mxu0 0.0
    %3329 = vmatpush1.msra.mxu0 0.0
    %3330 = vmatprep.subr.mxu0 0.0
    %3331 = vmatpush1.msra.mxu0 0.0
    %3332 = vmatprep.subr.mxu0 0.0
    %3333 = vmatpush1.msra.mxu0 0.0
    %3334 = vmatprep.subr.mxu0 0.0
    %3335 = vmatpush1.msra.mxu0 0.0
    %3336 = vmatprep.mubr.f32.mxu0 0.0
    %3337 = vmatmul.mubr.f32.gmra.mrb[0].mxu0 %v2990
    %v3338 = vpop.f32.mrb[0].mxu0
    %v3339 = vadd.f32 %v3269, %v3338
    %v3340 = vpop.f32.mrb[0].mxu0
    %3341 = vdwg.mxu0
    %v3342 = vmax.f32 %v3339, 0.0
    %3344 = vrot.lane.b32.xlu0 %v3342, 32
    %v3345 = vpop.permute.xlu0 %3344
    %3347 = vrot.lane.b32.xlu0 %v3342, 64
    %v3348 = vpop.permute.xlu0 %3347
    %3350 = vrot.lane.b32.xlu0 %v3342, 96
    %v3351 = vpop.permute.xlu0 %3350
    %v3353 = vsel %vm169, %v3342, %v3345
    %v3354 = vsel %vm2095, %v3353, %v3348
    %v3355 = vsel %vm2092, %v3354, %v3351
    %v3356 = vmul.f32 %v1851, %v3355
    %v3357 = vmul.f32 %v1853, %v3355
    %v3358 = vmul.f32 %v1922, %v3355
    %v3359 = vmul.f32 %v1924, %v3355
    %v3360 = vmul.f32 %v1993, %v3355
    %v3361 = vmul.f32 %v1995, %v3355
    %v3362 = vmul.f32 %v2064, %v3355
    %v3363 = vmul.f32 %v2066, %v3355
    %v3364 = vsel %vm169, %v3342, %v2843
    %v3365 = vld [vmem:[%s13] sm:$0xff]
    %v3366 = vld [vmem:[%s13 + $0x8] sm:$0x1]
    %v3369 = vlaneseq
    %v3370 = vshrl.u32 %v3369, 7
    %v3371 = vsub.s32 0, %v3370
    %v3372 = vrot.slane %v3365, %v3371
    %v3373 = vlaneseq
    %v3374 = vshrl.u32 %v3373, 7
    %v3375 = vsub.s32 1, %v3374
    %v3376 = vrot.slane %v3365, %v3375
    %v3377 = vlaneseq
    %v3378 = vshrl.u32 %v3377, 7
    %v3379 = vsub.s32 2, %v3378
    %v3380 = vrot.slane %v3365, %v3379
    %v3381 = vlaneseq
    %v3382 = vshrl.u32 %v3381, 7
    %v3383 = vsub.s32 3, %v3382
    %v3384 = vrot.slane %v3365, %v3383
    %v3385 = vlaneseq
    %v3386 = vshrl.u32 %v3385, 7
    %v3387 = vsub.s32 4, %v3386
    %v3388 = vrot.slane %v3365, %v3387
    %v3389 = vlaneseq
    %v3390 = vshrl.u32 %v3389, 7
    %v3391 = vsub.s32 5, %v3390
    %v3392 = vrot.slane %v3365, %v3391
    %v3393 = vlaneseq
    %v3394 = vshrl.u32 %v3393, 7
    %v3395 = vsub.s32 6, %v3394
    %v3396 = vrot.slane %v3365, %v3395
    %v3397 = vlaneseq
    %v3398 = vshrl.u32 %v3397, 7
    %v3399 = vsub.s32 7, %v3398
    %v3400 = vrot.slane %v3365, %v3399
    %v3401 = vlaneseq
    %v3402 = vshrl.u32 %v3401, 7
    %v3403 = vsub.s32 0, %v3402
    %v3404 = vrot.slane %v3366, %v3403
    %v3414 = vmul.f32 %v3356, %v3372
    %v3415 = vmul.f32 %v3357, %v3376
    %v3416 = vmul.f32 %v3358, %v3380
    %v3417 = vmul.f32 %v3359, %v3384
    %v3418 = vmul.f32 %v3360, %v3388
    %v3419 = vmul.f32 %v3361, %v3392
    %v3420 = vmul.f32 %v3362, %v3396
    %v3421 = vmul.f32 %v3363, %v3400
    %v3422 = vmul.f32 %v3364, %v3404
    %vm3423 = vcmask 1041408
    %v3424 = vsel %vm3423, %v3414, 0.0
    %v3425 = vsel %vm3423, %v3415, 0.0
    %v3426 = vadd.f32 %v3424, %v3425
    %v3427 = vsel %vm3423, %v3416, 0.0
    %v3428 = vadd.f32 %v3426, %v3427
    %v3429 = vsel %vm3423, %v3417, 0.0
    %v3430 = vadd.f32 %v3428, %v3429
    %v3431 = vsel %vm3423, %v3418, 0.0
    %v3432 = vadd.f32 %v3430, %v3431
    %v3433 = vsel %vm3423, %v3419, 0.0
    %v3434 = vadd.f32 %v3432, %v3433
    %v3435 = vsel %vm3423, %v3420, 0.0
    %v3436 = vadd.f32 %v3434, %v3435
    %v3437 = vsel %vm3423, %v3421, 0.0
    %v3438 = vadd.f32 %v3436, %v3437
    %vm3439 = vcmask 517120
    %v3440 = vsel %vm3439, %v3422, 0.0
    %v3441 = vadd.f32 %v3438, %v3440
    %3442 = vadd.xlane.f32.xlu0 %v3441
    %v3443 = vpop.xlane.xlu0 %3442
    %v3444 = vld [vmem:[#allocation2] sm:$0x1]
    %v3446 = vlaneseq
    %v3447 = vshrl.u32 %v3446, 7
    %v3448 = vsub.s32 0, %v3447
    %v3449 = vrot.slane %v3444, %v3448
    %v3451 = vadd.f32 %v3443, %v3449
    %vm3452 = vcmask 1024
    %3453 = vst.msk [vmem:[%s15] sm:$0x3] %vm3452, %v3451
    // Predicated region
    $region66: #{tpu_custom_call.1} parent=1 // pred_check
      _
    $region67: #{tpu_custom_call.1} parent=1 // pred_check_branch
      %3455 = sbr.rel (0) target = $region69
    $region68: #{tpu_custom_call.1} parent=1 // pred_region
      _
    $region69: #{tpu_custom_call.1} parent=1 // pred_fallthru
      _
    // Predicated region
    $region70: #{tpu_custom_call.1} parent=1 // pred_check
      _
    $region71: #{tpu_custom_call.1} parent=1 // pred_check_branch
      %3457 = sbr.rel (0) target = $region73
    $region72: #{tpu_custom_call.1} parent=1 // pred_region
      _
    $region73: #{tpu_custom_call.1} parent=1 // pred_fallthru
      _
    %3458 = vsyncpa [#allocation4], 1

</llo_original>
